<compile_context>
chip_gen: v7x
topology: tpu7x:2x2x1
jax: 0.10.0
libtpu: 0.0.40
codegen_flags: <defaults>
</compile_context>

<pallas_src>
import math
import jax
import jax.numpy as jnp
from jax import lax
from jax.experimental import pallas as pl

# ----------------------------- config (small) -----------------------------
VOCAB      = 100
HIDDEN     = 32          # stands in for 768
N_LAYERS   = 2           # stands in for 12
N_HEADS    = 4           # stands in for 12
HEAD_DIM   = HIDDEN // N_HEADS
INTERMED   = 4 * HIDDEN  # stands in for 3072
MAX_POS    = 16
TYPE_VOCAB = 2
OUT_DIM1   = 2
LN_EPS     = 1e-12


# ----------------------------- parameters ---------------------------------
def init_params(key):
    ks = jax.random.split(key, 9)
    g = lambda k, shape: jax.random.normal(k, shape, jnp.float32) * 0.02
    p = {
        # embeddings (gather happens in plain-JAX glue)
        "word_emb": g(ks[0], (VOCAB, HIDDEN)),
        "pos_emb":  g(ks[1], (MAX_POS, HIDDEN)),
        "type_emb": g(ks[2], (TYPE_VOCAB, HIDDEN)),
        "emb_ln_g": jnp.ones((1, HIDDEN), jnp.float32),
        "emb_ln_b": jnp.zeros((1, HIDDEN), jnp.float32),
        # stacked per-layer encoder weights; matmul weights in bf16 (MXU-native)
        "wqkv": g(ks[3], (N_LAYERS, HIDDEN, 3 * HIDDEN)).astype(jnp.bfloat16),
        "bqkv": jnp.zeros((N_LAYERS, 1, 3 * HIDDEN), jnp.float32),
        "wo":   g(ks[4], (N_LAYERS, HIDDEN, HIDDEN)).astype(jnp.bfloat16),
        "bo":   jnp.zeros((N_LAYERS, 1, HIDDEN), jnp.float32),
        "ln1_g": jnp.ones((N_LAYERS, 1, HIDDEN), jnp.float32),
        "ln1_b": jnp.zeros((N_LAYERS, 1, HIDDEN), jnp.float32),
        "w1":   g(ks[5], (N_LAYERS, HIDDEN, INTERMED)).astype(jnp.bfloat16),
        "b1":   jnp.zeros((N_LAYERS, 1, INTERMED), jnp.float32),
        "w2":   g(ks[6], (N_LAYERS, INTERMED, HIDDEN)).astype(jnp.bfloat16),
        "b2":   jnp.zeros((N_LAYERS, 1, HIDDEN), jnp.float32),
        "ln2_g": jnp.ones((N_LAYERS, 1, HIDDEN), jnp.float32),
        "ln2_b": jnp.zeros((N_LAYERS, 1, HIDDEN), jnp.float32),
        # classification head (pre_classifier1 + classifier1)
        "pre_w": g(ks[7], (HIDDEN, HIDDEN)).astype(jnp.bfloat16),
        "pre_b": jnp.zeros((1, HIDDEN), jnp.float32),
        "cls_w": g(ks[8], (HIDDEN, OUT_DIM1)).astype(jnp.bfloat16),
        "cls_b": jnp.zeros((1, OUT_DIM1), jnp.float32),
    }
    return p


# ----------------------------- fused forward ------------------------------
def model_forward(params, input_ids, attention_mask):
    """Equivalent of ModelClass.forward (eval mode: dropout = identity)."""
    B, S = input_ids.shape
    H, I, L, nH, Dh = HIDDEN, INTERMED, N_LAYERS, N_HEADS, HEAD_DIM
    scale = 1.0 / math.sqrt(Dh)

    # --- glue: embedding gather + additive mask (as in HF BERT) ---
    emb = (jnp.take(params["word_emb"], input_ids, axis=0)
           + params["pos_emb"][None, :S, :]
           + params["type_emb"][0][None, None, :]).reshape(B * S, H)
    mask_add = (1.0 - attention_mask.astype(jnp.float32)) * -10000.0   # (B, S)

    def kernel(emb_ref, mask_ref, eg_ref, ebt_ref,
               wqkv_ref, bqkv_ref, wo_ref, bo_ref,
               ln1g_ref, ln1b_ref, w1_ref, b1_ref,
               w2_ref, b2_ref, ln2g_ref, ln2b_ref,
               prew_ref, preb_ref, clsw_ref, clsb_ref,
               out_ref):

        def layer_norm(x, g, b):                       # f32 statistics
            mu = jnp.mean(x, axis=-1, keepdims=True)
            var = jnp.mean((x - mu) ** 2, axis=-1, keepdims=True)
            return (x - mu) * lax.rsqrt(var + LN_EPS) * g + b

        # embedding LayerNorm fused at kernel entry
        h = layer_norm(emb_ref[...], eg_ref[...], ebt_ref[...])   # (B*S, H) f32

        # additive attention mask, broadcast once (layer- and head-invariant)
        masks = [jnp.broadcast_to(mask_ref[b:b + 1, :], (S, S))   # (S, S) f32
                 for b in range(B)]

        # NOTE: at real 12-layer scale this unrolled Python loop must become a
        # grid axis / lax.fori_loop with dynamic wqkv_ref[li] indexing to
        # bound vreg live ranges and pipeline per-layer weight DMA.
        for li in range(L):
            # ---- packed QKV projection: single MXU matmul (bf16 in, f32 acc) ----
            qkv = (jnp.dot(h.astype(jnp.bfloat16), wqkv_ref[li],
                           preferred_element_type=jnp.float32)
                   + bqkv_ref[li])                     # (B*S, 3H) f32

            # ---- attention: all batches/heads VMEM-resident, unrolled ----
            # per-head contexts are concatenated (lane-dense) instead of being
            # scattered into a scratch with 8-lane masked stores.
            ctx_rows = []
            for b in range(B):
                m = masks[b]                           # (S, S) additive mask
                rows = qkv[b * S:(b + 1) * S, :]       # (S, 3H)
                head_ctx = []
                for hd in range(nH):
                    # fold 1/sqrt(Dh) into q; bf16-feed both MXU ops
                    q = (rows[:, hd * Dh:(hd + 1) * Dh] * scale
                         ).astype(jnp.bfloat16)
                    k = rows[:, H + hd * Dh:H + (hd + 1) * Dh
                             ].astype(jnp.bfloat16)
                    v = rows[:, 2 * H + hd * Dh:2 * H + (hd + 1) * Dh
                             ].astype(jnp.bfloat16)
                    # q @ k^T without an explicit transpose
                    s = lax.dot_general(
                        q, k, (((1,), (1,)), ((), ())),
                        preferred_element_type=jnp.float32) + m
                    s = s - jnp.max(s, axis=-1, keepdims=True)
                    p = jnp.exp(s)
                    p = p * pl.reciprocal(jnp.sum(p, axis=-1, keepdims=True),
                                          approx=True)
                    head_ctx.append(
                        jnp.dot(p.astype(jnp.bfloat16), v,
                                preferred_element_type=jnp.float32))
                ctx_rows.append(jnp.concatenate(head_ctx, axis=-1))  # (S, H)
            ctx = jnp.concatenate(ctx_rows, axis=0).astype(jnp.bfloat16)  # (B*S, H)

            # ---- output projection + residual + LN1 (fused epilogue) ----
            attn_out = (jnp.dot(ctx, wo_ref[li],
                                preferred_element_type=jnp.float32)
                        + bo_ref[li])
            h1 = layer_norm(h + attn_out, ln1g_ref[li], ln1b_ref[li])

            # ---- FFN (exact erf GELU, f32 math) + residual + LN2 (fused) ----
            ff = (jnp.dot(h1.astype(jnp.bfloat16), w1_ref[li],
                          preferred_element_type=jnp.float32) + b1_ref[li])
            ff = 0.5 * ff * (1.0 + lax.erf(ff * (1.0 / math.sqrt(2.0))))
            ff2 = (jnp.dot(ff.astype(jnp.bfloat16), w2_ref[li],
                           preferred_element_type=jnp.float32) + b2_ref[li])
            h = layer_norm(h1 + ff2, ln2g_ref[li], ln2b_ref[li])

        # ---- classification head on the [CLS] token of each sequence ----
        # gather all CLS rows into one (B, H) block -> 1 MXU push per
        # projection and a single lane-contiguous output store.
        cls = jnp.concatenate([h[b * S:b * S + 1, :] for b in range(B)],
                              axis=0)                                  # (B, H)
        pre = (jnp.dot(cls.astype(jnp.bfloat16), prew_ref[...],
                       preferred_element_type=jnp.float32) + preb_ref[...])
        pre = jnp.maximum(pre, 0.0)                                    # ReLU
        # TODO(synk): Dropout(0.3) is a no-op in eval mode; training-mode dropout not implemented.
        out_ref[...] = (jnp.dot(pre.astype(jnp.bfloat16), clsw_ref[...],
                                preferred_element_type=jnp.float32)
                        + clsb_ref[...])

    inputs = [emb, mask_add, params["emb_ln_g"], params["emb_ln_b"],
              params["wqkv"], params["bqkv"], params["wo"], params["bo"],
              params["ln1_g"], params["ln1_b"], params["w1"], params["b1"],
              params["w2"], params["b2"], params["ln2_g"], params["ln2_b"],
              params["pre_w"], params["pre_b"], params["cls_w"], params["cls_b"]]

    return pl.pallas_call(
        kernel,
        out_shape=jax.ShapeDtypeStruct((B, OUT_DIM1), jnp.float32),
        in_specs=[pl.BlockSpec(a.shape, lambda nd=a.ndim: (0,) * nd)
                  for a in inputs],
        out_specs=pl.BlockSpec((B, OUT_DIM1), lambda: (0, 0)),
    )(*inputs)


# ----------------------------- main ----------------------------------------
if __name__ == "__main__":
    key = jax.random.PRNGKey(0)
    k_params, k_ids = jax.random.split(key)

    params = init_params(k_params)

    B, S = 2, 8
    input_ids = jax.random.randint(k_ids, (B, S), 0, VOCAB, dtype=jnp.int32)
    attention_mask = jnp.array([[1, 1, 1, 1, 1, 1, 1, 1],
                                [1, 1, 1, 1, 1, 0, 0, 0]], dtype=jnp.int32)

    logits = model_forward(params, input_ids, attention_mask)
    jax.block_until_ready(logits)
    assert logits.shape == (B, OUT_DIM1) and logits.dtype == jnp.float32
    print("KERNEL_OK")
</pallas_src>

<mosaic_0001>
module attributes {stable_mosaic.version = 11 : i64} {
  func.func @kernel(%arg0: memref<16x32xf32, #tpu.memory_space<vmem>>, %arg1: memref<2x8xf32, #tpu.memory_space<vmem>>, %arg2: memref<1x32xf32, #tpu.memory_space<vmem>>, %arg3: memref<1x32xf32, #tpu.memory_space<vmem>>, %arg4: memref<2x32x96xbf16, #tpu.memory_space<vmem>>, %arg5: memref<2x1x96xf32, #tpu.memory_space<vmem>>, %arg6: memref<2x32x32xbf16, #tpu.memory_space<vmem>>, %arg7: memref<2x1x32xf32, #tpu.memory_space<vmem>>, %arg8: memref<2x1x32xf32, #tpu.memory_space<vmem>>, %arg9: memref<2x1x32xf32, #tpu.memory_space<vmem>>, %arg10: memref<2x32x128xbf16, #tpu.memory_space<vmem>>, %arg11: memref<2x1x128xf32, #tpu.memory_space<vmem>>, %arg12: memref<2x128x32xbf16, #tpu.memory_space<vmem>>, %arg13: memref<2x1x32xf32, #tpu.memory_space<vmem>>, %arg14: memref<2x1x32xf32, #tpu.memory_space<vmem>>, %arg15: memref<2x1x32xf32, #tpu.memory_space<vmem>>, %arg16: memref<32x32xbf16, #tpu.memory_space<vmem>>, %arg17: memref<1x32xf32, #tpu.memory_space<vmem>>, %arg18: memref<32x2xbf16, #tpu.memory_space<vmem>>, %arg19: memref<1x2xf32, #tpu.memory_space<vmem>>, %arg20: memref<2x2xf32, #tpu.memory_space<vmem>>) attributes {dimension_semantics = [], scalar_prefetch = 0 : i64, scratch_operands = 0 : i64, tpu.core_type = #tpu.core_type<tc>} {
    %c0 = arith.constant 0 : index
    %c0_0 = arith.constant 0 : index
    %0 = vector.load %arg0[%c0, %c0_0] : memref<16x32xf32, #tpu.memory_space<vmem>>, vector<16x32xf32>
    %c0_1 = arith.constant 0 : index
    %c0_2 = arith.constant 0 : index
    %1 = vector.load %arg2[%c0_1, %c0_2] : memref<1x32xf32, #tpu.memory_space<vmem>>, vector<1x32xf32>
    %c0_3 = arith.constant 0 : index
    %c0_4 = arith.constant 0 : index
    %2 = vector.load %arg3[%c0_3, %c0_4] : memref<1x32xf32, #tpu.memory_space<vmem>>, vector<1x32xf32>
    %cst = arith.constant dense<0.000000e+00> : vector<16xf32>
    %3 = vector.multi_reduction <add>, %0, %cst [1] : vector<16x32xf32> to vector<16xf32>
    %4 = vector.shape_cast %3 : vector<16xf32> to vector<16x1xf32>
    %cst_5 = arith.constant 3.200000e+01 : f32
    %5 = vector.broadcast %cst_5 : f32 to vector<16x1xf32>
    %6 = arith.divf %4, %5 : vector<16x1xf32>
    %7 = vector.broadcast %6 : vector<16x1xf32> to vector<16x32xf32>
    %8 = arith.subf %0, %7 : vector<16x32xf32>
    %9 = arith.mulf %8, %8 : vector<16x32xf32>
    %cst_6 = arith.constant dense<0.000000e+00> : vector<16xf32>
    %10 = vector.multi_reduction <add>, %9, %cst_6 [1] : vector<16x32xf32> to vector<16xf32>
    %11 = vector.shape_cast %10 : vector<16xf32> to vector<16x1xf32>
    %cst_7 = arith.constant 3.200000e+01 : f32
    %12 = vector.broadcast %cst_7 : f32 to vector<16x1xf32>
    %13 = arith.divf %11, %12 : vector<16x1xf32>
    %14 = vector.broadcast %6 : vector<16x1xf32> to vector<16x32xf32>
    %15 = arith.subf %0, %14 : vector<16x32xf32>
    %cst_8 = arith.constant 9.99999996E-13 : f32
    %16 = vector.broadcast %cst_8 : f32 to vector<16x1xf32>
    %17 = arith.addf %13, %16 : vector<16x1xf32>
    %18 = math.rsqrt %17 : vector<16x1xf32>
    %19 = vector.broadcast %18 : vector<16x1xf32> to vector<16x32xf32>
    %20 = arith.mulf %15, %19 : vector<16x32xf32>
    %21 = vector.broadcast %1 : vector<1x32xf32> to vector<16x32xf32>
    %22 = arith.mulf %20, %21 : vector<16x32xf32>
    %23 = vector.broadcast %2 : vector<1x32xf32> to vector<16x32xf32>
    %24 = arith.addf %22, %23 : vector<16x32xf32>
    %c0_9 = arith.constant 0 : index
    %c0_10 = arith.constant 0 : index
    %25 = vector.load %arg1[%c0_9, %c0_10] : memref<2x8xf32, #tpu.memory_space<vmem>>, vector<1x8xf32>
    %26 = vector.shape_cast %25 : vector<1x8xf32> to vector<1x8xf32>
    %27 = vector.broadcast %26 : vector<1x8xf32> to vector<8x8xf32>
    %c1 = arith.constant 1 : index
    %c0_11 = arith.constant 0 : index
    %28 = vector.load %arg1[%c1, %c0_11] : memref<2x8xf32, #tpu.memory_space<vmem>>, vector<1x8xf32>
    %29 = vector.shape_cast %28 : vector<1x8xf32> to vector<1x8xf32>
    %30 = vector.broadcast %29 : vector<1x8xf32> to vector<8x8xf32>
    %31 = arith.truncf %24 : vector<16x32xf32> to vector<16x32xbf16>
    %c0_12 = arith.constant 0 : index
    %c0_13 = arith.constant 0 : index
    %c0_14 = arith.constant 0 : index
    %32 = vector.load %arg4[%c0_12, %c0_13, %c0_14] : memref<2x32x96xbf16, #tpu.memory_space<vmem>>, vector<1x32x96xbf16>
    %33 = vector.shape_cast %32 : vector<1x32x96xbf16> to vector<32x96xbf16>
    %cst_15 = arith.constant dense<0.000000e+00> : vector<16x96xf32>
    %34 = tpu.matmul %31, %33, %cst_15 {dimension_numbers = #tpu.dot_dimension_numbers<[1], [0], [0], [1], [0, 0, 1, 1], [], []>} : vector<16x32xbf16>, vector<32x96xbf16>, vector<16x96xf32> -> vector<16x96xf32>
    %c0_16 = arith.constant 0 : index
    %c0_17 = arith.constant 0 : index
    %c0_18 = arith.constant 0 : index
    %35 = vector.load %arg5[%c0_16, %c0_17, %c0_18] : memref<2x1x96xf32, #tpu.memory_space<vmem>>, vector<1x1x96xf32>
    %36 = vector.shape_cast %35 : vector<1x1x96xf32> to vector<1x96xf32>
    %37 = vector.broadcast %36 : vector<1x96xf32> to vector<16x96xf32>
    %38 = arith.addf %34, %37 : vector<16x96xf32>
    %39 = vector.extract_strided_slice %38 {offsets = [0, 0], sizes = [8, 96], strides = [1, 1]} : vector<16x96xf32> to vector<8x96xf32>
    %40 = vector.extract_strided_slice %39 {offsets = [0, 0], sizes = [8, 8], strides = [1, 1]} : vector<8x96xf32> to vector<8x8xf32>
    %cst_19 = arith.constant 0.353553385 : f32
    %41 = vector.broadcast %cst_19 : f32 to vector<8x8xf32>
    %42 = arith.mulf %40, %41 : vector<8x8xf32>
    %43 = arith.truncf %42 : vector<8x8xf32> to vector<8x8xbf16>
    %44 = vector.extract_strided_slice %39 {offsets = [0, 32], sizes = [8, 8], strides = [1, 1]} : vector<8x96xf32> to vector<8x8xf32>
    %45 = arith.truncf %44 : vector<8x8xf32> to vector<8x8xbf16>
    %46 = vector.extract_strided_slice %39 {offsets = [0, 64], sizes = [8, 8], strides = [1, 1]} : vector<8x96xf32> to vector<8x8xf32>
    %47 = arith.truncf %46 : vector<8x8xf32> to vector<8x8xbf16>
    %cst_20 = arith.constant dense<0.000000e+00> : vector<8x8xf32>
    %48 = tpu.matmul %43, %45, %cst_20 {dimension_numbers = #tpu.dot_dimension_numbers<[1], [1], [0], [0], [0, 0, 1, 0], [], []>} : vector<8x8xbf16>, vector<8x8xbf16>, vector<8x8xf32> -> vector<8x8xf32>
    %49 = arith.addf %48, %27 : vector<8x8xf32>
    %cst_21 = arith.constant dense<0xFF800000> : vector<8xf32>
    %50 = vector.multi_reduction <maximumf>, %49, %cst_21 [1] : vector<8x8xf32> to vector<8xf32>
    %51 = vector.shape_cast %50 : vector<8xf32> to vector<8x1xf32>
    %52 = vector.broadcast %51 : vector<8x1xf32> to vector<8x8xf32>
    %53 = arith.subf %49, %52 : vector<8x8xf32>
    %54 = math.exp %53 : vector<8x8xf32>
    %cst_22 = arith.constant dense<0.000000e+00> : vector<8xf32>
    %55 = vector.multi_reduction <add>, %54, %cst_22 [1] : vector<8x8xf32> to vector<8xf32>
    %56 = vector.shape_cast %55 : vector<8xf32> to vector<8x1xf32>
    %57 = tpu.reciprocal %56 {approx = true} : vector<8x1xf32> -> vector<8x1xf32>
    %58 = vector.broadcast %57 : vector<8x1xf32> to vector<8x8xf32>
    %59 = arith.mulf %54, %58 : vector<8x8xf32>
    %60 = arith.truncf %59 : vector<8x8xf32> to vector<8x8xbf16>
    %cst_23 = arith.constant dense<0.000000e+00> : vector<8x8xf32>
    %61 = tpu.matmul %60, %47, %cst_23 {dimension_numbers = #tpu.dot_dimension_numbers<[1], [0], [0], [1], [0, 0, 1, 1], [], []>} : vector<8x8xbf16>, vector<8x8xbf16>, vector<8x8xf32> -> vector<8x8xf32>
    %62 = vector.extract_strided_slice %39 {offsets = [0, 8], sizes = [8, 8], strides = [1, 1]} : vector<8x96xf32> to vector<8x8xf32>
    %cst_24 = arith.constant 0.353553385 : f32
    %63 = vector.broadcast %cst_24 : f32 to vector<8x8xf32>
    %64 = arith.mulf %62, %63 : vector<8x8xf32>
    %65 = arith.truncf %64 : vector<8x8xf32> to vector<8x8xbf16>
    %66 = vector.extract_strided_slice %39 {offsets = [0, 40], sizes = [8, 8], strides = [1, 1]} : vector<8x96xf32> to vector<8x8xf32>
    %67 = arith.truncf %66 : vector<8x8xf32> to vector<8x8xbf16>
    %68 = vector.extract_strided_slice %39 {offsets = [0, 72], sizes = [8, 8], strides = [1, 1]} : vector<8x96xf32> to vector<8x8xf32>
    %69 = arith.truncf %68 : vector<8x8xf32> to vector<8x8xbf16>
    %cst_25 = arith.constant dense<0.000000e+00> : vector<8x8xf32>
    %70 = tpu.matmul %65, %67, %cst_25 {dimension_numbers = #tpu.dot_dimension_numbers<[1], [1], [0], [0], [0, 0, 1, 0], [], []>} : vector<8x8xbf16>, vector<8x8xbf16>, vector<8x8xf32> -> vector<8x8xf32>
    %71 = arith.addf %70, %27 : vector<8x8xf32>
    %cst_26 = arith.constant dense<0xFF800000> : vector<8xf32>
    %72 = vector.multi_reduction <maximumf>, %71, %cst_26 [1] : vector<8x8xf32> to vector<8xf32>
    %73 = vector.shape_cast %72 : vector<8xf32> to vector<8x1xf32>
    %74 = vector.broadcast %73 : vector<8x1xf32> to vector<8x8xf32>
    %75 = arith.subf %71, %74 : vector<8x8xf32>
    %76 = math.exp %75 : vector<8x8xf32>
    %cst_27 = arith.constant dense<0.000000e+00> : vector<8xf32>
    %77 = vector.multi_reduction <add>, %76, %cst_27 [1] : vector<8x8xf32> to vector<8xf32>
    %78 = vector.shape_cast %77 : vector<8xf32> to vector<8x1xf32>
    %79 = tpu.reciprocal %78 {approx = true} : vector<8x1xf32> -> vector<8x1xf32>
    %80 = vector.broadcast %79 : vector<8x1xf32> to vector<8x8xf32>
    %81 = arith.mulf %76, %80 : vector<8x8xf32>
    %82 = arith.truncf %81 : vector<8x8xf32> to vector<8x8xbf16>
    %cst_28 = arith.constant dense<0.000000e+00> : vector<8x8xf32>
    %83 = tpu.matmul %82, %69, %cst_28 {dimension_numbers = #tpu.dot_dimension_numbers<[1], [0], [0], [1], [0, 0, 1, 1], [], []>} : vector<8x8xbf16>, vector<8x8xbf16>, vector<8x8xf32> -> vector<8x8xf32>
    %84 = vector.extract_strided_slice %39 {offsets = [0, 16], sizes = [8, 8], strides = [1, 1]} : vector<8x96xf32> to vector<8x8xf32>
    %cst_29 = arith.constant 0.353553385 : f32
    %85 = vector.broadcast %cst_29 : f32 to vector<8x8xf32>
    %86 = arith.mulf %84, %85 : vector<8x8xf32>
    %87 = arith.truncf %86 : vector<8x8xf32> to vector<8x8xbf16>
    %88 = vector.extract_strided_slice %39 {offsets = [0, 48], sizes = [8, 8], strides = [1, 1]} : vector<8x96xf32> to vector<8x8xf32>
    %89 = arith.truncf %88 : vector<8x8xf32> to vector<8x8xbf16>
    %90 = vector.extract_strided_slice %39 {offsets = [0, 80], sizes = [8, 8], strides = [1, 1]} : vector<8x96xf32> to vector<8x8xf32>
    %91 = arith.truncf %90 : vector<8x8xf32> to vector<8x8xbf16>
    %cst_30 = arith.constant dense<0.000000e+00> : vector<8x8xf32>
    %92 = tpu.matmul %87, %89, %cst_30 {dimension_numbers = #tpu.dot_dimension_numbers<[1], [1], [0], [0], [0, 0, 1, 0], [], []>} : vector<8x8xbf16>, vector<8x8xbf16>, vector<8x8xf32> -> vector<8x8xf32>
    %93 = arith.addf %92, %27 : vector<8x8xf32>
    %cst_31 = arith.constant dense<0xFF800000> : vector<8xf32>
    %94 = vector.multi_reduction <maximumf>, %93, %cst_31 [1] : vector<8x8xf32> to vector<8xf32>
    %95 = vector.shape_cast %94 : vector<8xf32> to vector<8x1xf32>
    %96 = vector.broadcast %95 : vector<8x1xf32> to vector<8x8xf32>
    %97 = arith.subf %93, %96 : vector<8x8xf32>
    %98 = math.exp %97 : vector<8x8xf32>
    %cst_32 = arith.constant dense<0.000000e+00> : vector<8xf32>
    %99 = vector.multi_reduction <add>, %98, %cst_32 [1] : vector<8x8xf32> to vector<8xf32>
    %100 = vector.shape_cast %99 : vector<8xf32> to vector<8x1xf32>
    %101 = tpu.reciprocal %100 {approx = true} : vector<8x1xf32> -> vector<8x1xf32>
    %102 = vector.broadcast %101 : vector<8x1xf32> to vector<8x8xf32>
    %103 = arith.mulf %98, %102 : vector<8x8xf32>
    %104 = arith.truncf %103 : vector<8x8xf32> to vector<8x8xbf16>
    %cst_33 = arith.constant dense<0.000000e+00> : vector<8x8xf32>
    %105 = tpu.matmul %104, %91, %cst_33 {dimension_numbers = #tpu.dot_dimension_numbers<[1], [0], [0], [1], [0, 0, 1, 1], [], []>} : vector<8x8xbf16>, vector<8x8xbf16>, vector<8x8xf32> -> vector<8x8xf32>
    %106 = vector.extract_strided_slice %39 {offsets = [0, 24], sizes = [8, 8], strides = [1, 1]} : vector<8x96xf32> to vector<8x8xf32>
    %cst_34 = arith.constant 0.353553385 : f32
    %107 = vector.broadcast %cst_34 : f32 to vector<8x8xf32>
    %108 = arith.mulf %106, %107 : vector<8x8xf32>
    %109 = arith.truncf %108 : vector<8x8xf32> to vector<8x8xbf16>
    %110 = vector.extract_strided_slice %39 {offsets = [0, 56], sizes = [8, 8], strides = [1, 1]} : vector<8x96xf32> to vector<8x8xf32>
    %111 = arith.truncf %110 : vector<8x8xf32> to vector<8x8xbf16>
    %112 = vector.extract_strided_slice %39 {offsets = [0, 88], sizes = [8, 8], strides = [1, 1]} : vector<8x96xf32> to vector<8x8xf32>
    %113 = arith.truncf %112 : vector<8x8xf32> to vector<8x8xbf16>
    %cst_35 = arith.constant dense<0.000000e+00> : vector<8x8xf32>
    %114 = tpu.matmul %109, %111, %cst_35 {dimension_numbers = #tpu.dot_dimension_numbers<[1], [1], [0], [0], [0, 0, 1, 0], [], []>} : vector<8x8xbf16>, vector<8x8xbf16>, vector<8x8xf32> -> vector<8x8xf32>
    %115 = arith.addf %114, %27 : vector<8x8xf32>
    %cst_36 = arith.constant dense<0xFF800000> : vector<8xf32>
    %116 = vector.multi_reduction <maximumf>, %115, %cst_36 [1] : vector<8x8xf32> to vector<8xf32>
    %117 = vector.shape_cast %116 : vector<8xf32> to vector<8x1xf32>
    %118 = vector.broadcast %117 : vector<8x1xf32> to vector<8x8xf32>
    %119 = arith.subf %115, %118 : vector<8x8xf32>
    %120 = math.exp %119 : vector<8x8xf32>
    %cst_37 = arith.constant dense<0.000000e+00> : vector<8xf32>
    %121 = vector.multi_reduction <add>, %120, %cst_37 [1] : vector<8x8xf32> to vector<8xf32>
    %122 = vector.shape_cast %121 : vector<8xf32> to vector<8x1xf32>
    %123 = tpu.reciprocal %122 {approx = true} : vector<8x1xf32> -> vector<8x1xf32>
    %124 = vector.broadcast %123 : vector<8x1xf32> to vector<8x8xf32>
    %125 = arith.mulf %120, %124 : vector<8x8xf32>
    %126 = arith.truncf %125 : vector<8x8xf32> to vector<8x8xbf16>
    %cst_38 = arith.constant dense<0.000000e+00> : vector<8x8xf32>
    %127 = tpu.matmul %126, %113, %cst_38 {dimension_numbers = #tpu.dot_dimension_numbers<[1], [0], [0], [1], [0, 0, 1, 1], [], []>} : vector<8x8xbf16>, vector<8x8xbf16>, vector<8x8xf32> -> vector<8x8xf32>
    %128 = tpu.concatenate %61, %83, %105, %127 in 1 : vector<8x8xf32>, vector<8x8xf32>, vector<8x8xf32>, vector<8x8xf32> -> vector<8x32xf32>
    %129 = vector.extract_strided_slice %38 {offsets = [8, 0], sizes = [8, 96], strides = [1, 1]} : vector<16x96xf32> to vector<8x96xf32>
    %130 = vector.extract_strided_slice %129 {offsets = [0, 0], sizes = [8, 8], strides = [1, 1]} : vector<8x96xf32> to vector<8x8xf32>
    %cst_39 = arith.constant 0.353553385 : f32
    %131 = vector.broadcast %cst_39 : f32 to vector<8x8xf32>
    %132 = arith.mulf %130, %131 : vector<8x8xf32>
    %133 = arith.truncf %132 : vector<8x8xf32> to vector<8x8xbf16>
    %134 = vector.extract_strided_slice %129 {offsets = [0, 32], sizes = [8, 8], strides = [1, 1]} : vector<8x96xf32> to vector<8x8xf32>
    %135 = arith.truncf %134 : vector<8x8xf32> to vector<8x8xbf16>
    %136 = vector.extract_strided_slice %129 {offsets = [0, 64], sizes = [8, 8], strides = [1, 1]} : vector<8x96xf32> to vector<8x8xf32>
    %137 = arith.truncf %136 : vector<8x8xf32> to vector<8x8xbf16>
    %cst_40 = arith.constant dense<0.000000e+00> : vector<8x8xf32>
    %138 = tpu.matmul %133, %135, %cst_40 {dimension_numbers = #tpu.dot_dimension_numbers<[1], [1], [0], [0], [0, 0, 1, 0], [], []>} : vector<8x8xbf16>, vector<8x8xbf16>, vector<8x8xf32> -> vector<8x8xf32>
    %139 = arith.addf %138, %30 : vector<8x8xf32>
    %cst_41 = arith.constant dense<0xFF800000> : vector<8xf32>
    %140 = vector.multi_reduction <maximumf>, %139, %cst_41 [1] : vector<8x8xf32> to vector<8xf32>
    %141 = vector.shape_cast %140 : vector<8xf32> to vector<8x1xf32>
    %142 = vector.broadcast %141 : vector<8x1xf32> to vector<8x8xf32>
    %143 = arith.subf %139, %142 : vector<8x8xf32>
    %144 = math.exp %143 : vector<8x8xf32>
    %cst_42 = arith.constant dense<0.000000e+00> : vector<8xf32>
    %145 = vector.multi_reduction <add>, %144, %cst_42 [1] : vector<8x8xf32> to vector<8xf32>
    %146 = vector.shape_cast %145 : vector<8xf32> to vector<8x1xf32>
    %147 = tpu.reciprocal %146 {approx = true} : vector<8x1xf32> -> vector<8x1xf32>
    %148 = vector.broadcast %147 : vector<8x1xf32> to vector<8x8xf32>
    %149 = arith.mulf %144, %148 : vector<8x8xf32>
    %150 = arith.truncf %149 : vector<8x8xf32> to vector<8x8xbf16>
    %cst_43 = arith.constant dense<0.000000e+00> : vector<8x8xf32>
    %151 = tpu.matmul %150, %137, %cst_43 {dimension_numbers = #tpu.dot_dimension_numbers<[1], [0], [0], [1], [0, 0, 1, 1], [], []>} : vector<8x8xbf16>, vector<8x8xbf16>, vector<8x8xf32> -> vector<8x8xf32>
    %152 = vector.extract_strided_slice %129 {offsets = [0, 8], sizes = [8, 8], strides = [1, 1]} : vector<8x96xf32> to vector<8x8xf32>
    %cst_44 = arith.constant 0.353553385 : f32
    %153 = vector.broadcast %cst_44 : f32 to vector<8x8xf32>
    %154 = arith.mulf %152, %153 : vector<8x8xf32>
    %155 = arith.truncf %154 : vector<8x8xf32> to vector<8x8xbf16>
    %156 = vector.extract_strided_slice %129 {offsets = [0, 40], sizes = [8, 8], strides = [1, 1]} : vector<8x96xf32> to vector<8x8xf32>
    %157 = arith.truncf %156 : vector<8x8xf32> to vector<8x8xbf16>
    %158 = vector.extract_strided_slice %129 {offsets = [0, 72], sizes = [8, 8], strides = [1, 1]} : vector<8x96xf32> to vector<8x8xf32>
    %159 = arith.truncf %158 : vector<8x8xf32> to vector<8x8xbf16>
    %cst_45 = arith.constant dense<0.000000e+00> : vector<8x8xf32>
    %160 = tpu.matmul %155, %157, %cst_45 {dimension_numbers = #tpu.dot_dimension_numbers<[1], [1], [0], [0], [0, 0, 1, 0], [], []>} : vector<8x8xbf16>, vector<8x8xbf16>, vector<8x8xf32> -> vector<8x8xf32>
    %161 = arith.addf %160, %30 : vector<8x8xf32>
    %cst_46 = arith.constant dense<0xFF800000> : vector<8xf32>
    %162 = vector.multi_reduction <maximumf>, %161, %cst_46 [1] : vector<8x8xf32> to vector<8xf32>
    %163 = vector.shape_cast %162 : vector<8xf32> to vector<8x1xf32>
    %164 = vector.broadcast %163 : vector<8x1xf32> to vector<8x8xf32>
    %165 = arith.subf %161, %164 : vector<8x8xf32>
    %166 = math.exp %165 : vector<8x8xf32>
    %cst_47 = arith.constant dense<0.000000e+00> : vector<8xf32>
    %167 = vector.multi_reduction <add>, %166, %cst_47 [1] : vector<8x8xf32> to vector<8xf32>
    %168 = vector.shape_cast %167 : vector<8xf32> to vector<8x1xf32>
    %169 = tpu.reciprocal %168 {approx = true} : vector<8x1xf32> -> vector<8x1xf32>
    %170 = vector.broadcast %169 : vector<8x1xf32> to vector<8x8xf32>
    %171 = arith.mulf %166, %170 : vector<8x8xf32>
    %172 = arith.truncf %171 : vector<8x8xf32> to vector<8x8xbf16>
    %cst_48 = arith.constant dense<0.000000e+00> : vector<8x8xf32>
    %173 = tpu.matmul %172, %159, %cst_48 {dimension_numbers = #tpu.dot_dimension_numbers<[1], [0], [0], [1], [0, 0, 1, 1], [], []>} : vector<8x8xbf16>, vector<8x8xbf16>, vector<8x8xf32> -> vector<8x8xf32>
    %174 = vector.extract_strided_slice %129 {offsets = [0, 16], sizes = [8, 8], strides = [1, 1]} : vector<8x96xf32> to vector<8x8xf32>
    %cst_49 = arith.constant 0.353553385 : f32
    %175 = vector.broadcast %cst_49 : f32 to vector<8x8xf32>
    %176 = arith.mulf %174, %175 : vector<8x8xf32>
    %177 = arith.truncf %176 : vector<8x8xf32> to vector<8x8xbf16>
    %178 = vector.extract_strided_slice %129 {offsets = [0, 48], sizes = [8, 8], strides = [1, 1]} : vector<8x96xf32> to vector<8x8xf32>
    %179 = arith.truncf %178 : vector<8x8xf32> to vector<8x8xbf16>
    %180 = vector.extract_strided_slice %129 {offsets = [0, 80], sizes = [8, 8], strides = [1, 1]} : vector<8x96xf32> to vector<8x8xf32>
    %181 = arith.truncf %180 : vector<8x8xf32> to vector<8x8xbf16>
    %cst_50 = arith.constant dense<0.000000e+00> : vector<8x8xf32>
    %182 = tpu.matmul %177, %179, %cst_50 {dimension_numbers = #tpu.dot_dimension_numbers<[1], [1], [0], [0], [0, 0, 1, 0], [], []>} : vector<8x8xbf16>, vector<8x8xbf16>, vector<8x8xf32> -> vector<8x8xf32>
    %183 = arith.addf %182, %30 : vector<8x8xf32>
    %cst_51 = arith.constant dense<0xFF800000> : vector<8xf32>
    %184 = vector.multi_reduction <maximumf>, %183, %cst_51 [1] : vector<8x8xf32> to vector<8xf32>
    %185 = vector.shape_cast %184 : vector<8xf32> to vector<8x1xf32>
    %186 = vector.broadcast %185 : vector<8x1xf32> to vector<8x8xf32>
    %187 = arith.subf %183, %186 : vector<8x8xf32>
    %188 = math.exp %187 : vector<8x8xf32>
    %cst_52 = arith.constant dense<0.000000e+00> : vector<8xf32>
    %189 = vector.multi_reduction <add>, %188, %cst_52 [1] : vector<8x8xf32> to vector<8xf32>
    %190 = vector.shape_cast %189 : vector<8xf32> to vector<8x1xf32>
    %191 = tpu.reciprocal %190 {approx = true} : vector<8x1xf32> -> vector<8x1xf32>
    %192 = vector.broadcast %191 : vector<8x1xf32> to vector<8x8xf32>
    %193 = arith.mulf %188, %192 : vector<8x8xf32>
    %194 = arith.truncf %193 : vector<8x8xf32> to vector<8x8xbf16>
    %cst_53 = arith.constant dense<0.000000e+00> : vector<8x8xf32>
    %195 = tpu.matmul %194, %181, %cst_53 {dimension_numbers = #tpu.dot_dimension_numbers<[1], [0], [0], [1], [0, 0, 1, 1], [], []>} : vector<8x8xbf16>, vector<8x8xbf16>, vector<8x8xf32> -> vector<8x8xf32>
    %196 = vector.extract_strided_slice %129 {offsets = [0, 24], sizes = [8, 8], strides = [1, 1]} : vector<8x96xf32> to vector<8x8xf32>
    %cst_54 = arith.constant 0.353553385 : f32
    %197 = vector.broadcast %cst_54 : f32 to vector<8x8xf32>
    %198 = arith.mulf %196, %197 : vector<8x8xf32>
    %199 = arith.truncf %198 : vector<8x8xf32> to vector<8x8xbf16>
    %200 = vector.extract_strided_slice %129 {offsets = [0, 56], sizes = [8, 8], strides = [1, 1]} : vector<8x96xf32> to vector<8x8xf32>
    %201 = arith.truncf %200 : vector<8x8xf32> to vector<8x8xbf16>
    %202 = vector.extract_strided_slice %129 {offsets = [0, 88], sizes = [8, 8], strides = [1, 1]} : vector<8x96xf32> to vector<8x8xf32>
    %203 = arith.truncf %202 : vector<8x8xf32> to vector<8x8xbf16>
    %cst_55 = arith.constant dense<0.000000e+00> : vector<8x8xf32>
    %204 = tpu.matmul %199, %201, %cst_55 {dimension_numbers = #tpu.dot_dimension_numbers<[1], [1], [0], [0], [0, 0, 1, 0], [], []>} : vector<8x8xbf16>, vector<8x8xbf16>, vector<8x8xf32> -> vector<8x8xf32>
    %205 = arith.addf %204, %30 : vector<8x8xf32>
    %cst_56 = arith.constant dense<0xFF800000> : vector<8xf32>
    %206 = vector.multi_reduction <maximumf>, %205, %cst_56 [1] : vector<8x8xf32> to vector<8xf32>
    %207 = vector.shape_cast %206 : vector<8xf32> to vector<8x1xf32>
    %208 = vector.broadcast %207 : vector<8x1xf32> to vector<8x8xf32>
    %209 = arith.subf %205, %208 : vector<8x8xf32>
    %210 = math.exp %209 : vector<8x8xf32>
    %cst_57 = arith.constant dense<0.000000e+00> : vector<8xf32>
    %211 = vector.multi_reduction <add>, %210, %cst_57 [1] : vector<8x8xf32> to vector<8xf32>
    %212 = vector.shape_cast %211 : vector<8xf32> to vector<8x1xf32>
    %213 = tpu.reciprocal %212 {approx = true} : vector<8x1xf32> -> vector<8x1xf32>
    %214 = vector.broadcast %213 : vector<8x1xf32> to vector<8x8xf32>
    %215 = arith.mulf %210, %214 : vector<8x8xf32>
    %216 = arith.truncf %215 : vector<8x8xf32> to vector<8x8xbf16>
    %cst_58 = arith.constant dense<0.000000e+00> : vector<8x8xf32>
    %217 = tpu.matmul %216, %203, %cst_58 {dimension_numbers = #tpu.dot_dimension_numbers<[1], [0], [0], [1], [0, 0, 1, 1], [], []>} : vector<8x8xbf16>, vector<8x8xbf16>, vector<8x8xf32> -> vector<8x8xf32>
    %218 = tpu.concatenate %151, %173, %195, %217 in 1 : vector<8x8xf32>, vector<8x8xf32>, vector<8x8xf32>, vector<8x8xf32> -> vector<8x32xf32>
    %219 = tpu.concatenate %128, %218 in 0 : vector<8x32xf32>, vector<8x32xf32> -> vector<16x32xf32>
    %220 = arith.truncf %219 : vector<16x32xf32> to vector<16x32xbf16>
    %c0_59 = arith.constant 0 : index
    %c0_60 = arith.constant 0 : index
    %c0_61 = arith.constant 0 : index
    %221 = vector.load %arg6[%c0_59, %c0_60, %c0_61] : memref<2x32x32xbf16, #tpu.memory_space<vmem>>, vector<1x32x32xbf16>
    %222 = vector.shape_cast %221 : vector<1x32x32xbf16> to vector<32x32xbf16>
    %cst_62 = arith.constant dense<0.000000e+00> : vector<16x32xf32>
    %223 = tpu.matmul %220, %222, %cst_62 {dimension_numbers = #tpu.dot_dimension_numbers<[1], [0], [0], [1], [0, 0, 1, 1], [], []>} : vector<16x32xbf16>, vector<32x32xbf16>, vector<16x32xf32> -> vector<16x32xf32>
    %c0_63 = arith.constant 0 : index
    %c0_64 = arith.constant 0 : index
    %c0_65 = arith.constant 0 : index
    %224 = vector.load %arg7[%c0_63, %c0_64, %c0_65] : memref<2x1x32xf32, #tpu.memory_space<vmem>>, vector<1x1x32xf32>
    %225 = vector.shape_cast %224 : vector<1x1x32xf32> to vector<1x32xf32>
    %226 = vector.broadcast %225 : vector<1x32xf32> to vector<16x32xf32>
    %227 = arith.addf %223, %226 : vector<16x32xf32>
    %228 = arith.addf %24, %227 : vector<16x32xf32>
    %c0_66 = arith.constant 0 : index
    %c0_67 = arith.constant 0 : index
    %c0_68 = arith.constant 0 : index
    %229 = vector.load %arg8[%c0_66, %c0_67, %c0_68] : memref<2x1x32xf32, #tpu.memory_space<vmem>>, vector<1x1x32xf32>
    %230 = vector.shape_cast %229 : vector<1x1x32xf32> to vector<1x32xf32>
    %c0_69 = arith.constant 0 : index
    %c0_70 = arith.constant 0 : index
    %c0_71 = arith.constant 0 : index
    %231 = vector.load %arg9[%c0_69, %c0_70, %c0_71] : memref<2x1x32xf32, #tpu.memory_space<vmem>>, vector<1x1x32xf32>
    %232 = vector.shape_cast %231 : vector<1x1x32xf32> to vector<1x32xf32>
    %cst_72 = arith.constant dense<0.000000e+00> : vector<16xf32>
    %233 = vector.multi_reduction <add>, %228, %cst_72 [1] : vector<16x32xf32> to vector<16xf32>
    %234 = vector.shape_cast %233 : vector<16xf32> to vector<16x1xf32>
    %cst_73 = arith.constant 3.200000e+01 : f32
    %235 = vector.broadcast %cst_73 : f32 to vector<16x1xf32>
    %236 = arith.divf %234, %235 : vector<16x1xf32>
    %237 = vector.broadcast %236 : vector<16x1xf32> to vector<16x32xf32>
    %238 = arith.subf %228, %237 : vector<16x32xf32>
    %239 = arith.mulf %238, %238 : vector<16x32xf32>
    %cst_74 = arith.constant dense<0.000000e+00> : vector<16xf32>
    %240 = vector.multi_reduction <add>, %239, %cst_74 [1] : vector<16x32xf32> to vector<16xf32>
    %241 = vector.shape_cast %240 : vector<16xf32> to vector<16x1xf32>
    %cst_75 = arith.constant 3.200000e+01 : f32
    %242 = vector.broadcast %cst_75 : f32 to vector<16x1xf32>
    %243 = arith.divf %241, %242 : vector<16x1xf32>
    %244 = vector.broadcast %236 : vector<16x1xf32> to vector<16x32xf32>
    %245 = arith.subf %228, %244 : vector<16x32xf32>
    %cst_76 = arith.constant 9.99999996E-13 : f32
    %246 = vector.broadcast %cst_76 : f32 to vector<16x1xf32>
    %247 = arith.addf %243, %246 : vector<16x1xf32>
    %248 = math.rsqrt %247 : vector<16x1xf32>
    %249 = vector.broadcast %248 : vector<16x1xf32> to vector<16x32xf32>
    %250 = arith.mulf %245, %249 : vector<16x32xf32>
    %251 = vector.broadcast %230 : vector<1x32xf32> to vector<16x32xf32>
    %252 = arith.mulf %250, %251 : vector<16x32xf32>
    %253 = vector.broadcast %232 : vector<1x32xf32> to vector<16x32xf32>
    %254 = arith.addf %252, %253 : vector<16x32xf32>
    %255 = arith.truncf %254 : vector<16x32xf32> to vector<16x32xbf16>
    %c0_77 = arith.constant 0 : index
    %c0_78 = arith.constant 0 : index
    %c0_79 = arith.constant 0 : index
    %256 = vector.load %arg10[%c0_77, %c0_78, %c0_79] : memref<2x32x128xbf16, #tpu.memory_space<vmem>>, vector<1x32x128xbf16>
    %257 = vector.shape_cast %256 : vector<1x32x128xbf16> to vector<32x128xbf16>
    %cst_80 = arith.constant dense<0.000000e+00> : vector<16x128xf32>
    %258 = tpu.matmul %255, %257, %cst_80 {dimension_numbers = #tpu.dot_dimension_numbers<[1], [0], [0], [1], [0, 0, 1, 1], [], []>} : vector<16x32xbf16>, vector<32x128xbf16>, vector<16x128xf32> -> vector<16x128xf32>
    %c0_81 = arith.constant 0 : index
    %c0_82 = arith.constant 0 : index
    %c0_83 = arith.constant 0 : index
    %259 = vector.load %arg11[%c0_81, %c0_82, %c0_83] : memref<2x1x128xf32, #tpu.memory_space<vmem>>, vector<1x1x128xf32>
    %260 = vector.shape_cast %259 : vector<1x1x128xf32> to vector<1x128xf32>
    %261 = vector.broadcast %260 : vector<1x128xf32> to vector<16x128xf32>
    %262 = arith.addf %258, %261 : vector<16x128xf32>
    %cst_84 = arith.constant 5.000000e-01 : f32
    %263 = vector.broadcast %cst_84 : f32 to vector<16x128xf32>
    %264 = arith.mulf %263, %262 : vector<16x128xf32>
    %cst_85 = arith.constant 0.707106769 : f32
    %265 = vector.broadcast %cst_85 : f32 to vector<16x128xf32>
    %266 = arith.mulf %262, %265 : vector<16x128xf32>
    %267 = math.erf %266 : vector<16x128xf32>
    %cst_86 = arith.constant 1.000000e+00 : f32
    %268 = vector.broadcast %cst_86 : f32 to vector<16x128xf32>
    %269 = arith.addf %268, %267 : vector<16x128xf32>
    %270 = arith.mulf %264, %269 : vector<16x128xf32>
    %271 = arith.truncf %270 : vector<16x128xf32> to vector<16x128xbf16>
    %c0_87 = arith.constant 0 : index
    %c0_88 = arith.constant 0 : index
    %c0_89 = arith.constant 0 : index
    %272 = vector.load %arg12[%c0_87, %c0_88, %c0_89] : memref<2x128x32xbf16, #tpu.memory_space<vmem>>, vector<1x128x32xbf16>
    %273 = vector.shape_cast %272 : vector<1x128x32xbf16> to vector<128x32xbf16>
    %cst_90 = arith.constant dense<0.000000e+00> : vector<16x32xf32>
    %274 = tpu.matmul %271, %273, %cst_90 {dimension_numbers = #tpu.dot_dimension_numbers<[1], [0], [0], [1], [0, 0, 1, 1], [], []>} : vector<16x128xbf16>, vector<128x32xbf16>, vector<16x32xf32> -> vector<16x32xf32>
    %c0_91 = arith.constant 0 : index
    %c0_92 = arith.constant 0 : index
    %c0_93 = arith.constant 0 : index
    %275 = vector.load %arg13[%c0_91, %c0_92, %c0_93] : memref<2x1x32xf32, #tpu.memory_space<vmem>>, vector<1x1x32xf32>
    %276 = vector.shape_cast %275 : vector<1x1x32xf32> to vector<1x32xf32>
    %277 = vector.broadcast %276 : vector<1x32xf32> to vector<16x32xf32>
    %278 = arith.addf %274, %277 : vector<16x32xf32>
    %279 = arith.addf %254, %278 : vector<16x32xf32>
    %c0_94 = arith.constant 0 : index
    %c0_95 = arith.constant 0 : index
    %c0_96 = arith.constant 0 : index
    %280 = vector.load %arg14[%c0_94, %c0_95, %c0_96] : memref<2x1x32xf32, #tpu.memory_space<vmem>>, vector<1x1x32xf32>
    %281 = vector.shape_cast %280 : vector<1x1x32xf32> to vector<1x32xf32>
    %c0_97 = arith.constant 0 : index
    %c0_98 = arith.constant 0 : index
    %c0_99 = arith.constant 0 : index
    %282 = vector.load %arg15[%c0_97, %c0_98, %c0_99] : memref<2x1x32xf32, #tpu.memory_space<vmem>>, vector<1x1x32xf32>
    %283 = vector.shape_cast %282 : vector<1x1x32xf32> to vector<1x32xf32>
    %cst_100 = arith.constant dense<0.000000e+00> : vector<16xf32>
    %284 = vector.multi_reduction <add>, %279, %cst_100 [1] : vector<16x32xf32> to vector<16xf32>
    %285 = vector.shape_cast %284 : vector<16xf32> to vector<16x1xf32>
    %cst_101 = arith.constant 3.200000e+01 : f32
    %286 = vector.broadcast %cst_101 : f32 to vector<16x1xf32>
    %287 = arith.divf %285, %286 : vector<16x1xf32>
    %288 = vector.broadcast %287 : vector<16x1xf32> to vector<16x32xf32>
    %289 = arith.subf %279, %288 : vector<16x32xf32>
    %290 = arith.mulf %289, %289 : vector<16x32xf32>
    %cst_102 = arith.constant dense<0.000000e+00> : vector<16xf32>
    %291 = vector.multi_reduction <add>, %290, %cst_102 [1] : vector<16x32xf32> to vector<16xf32>
    %292 = vector.shape_cast %291 : vector<16xf32> to vector<16x1xf32>
    %cst_103 = arith.constant 3.200000e+01 : f32
    %293 = vector.broadcast %cst_103 : f32 to vector<16x1xf32>
    %294 = arith.divf %292, %293 : vector<16x1xf32>
    %295 = vector.broadcast %287 : vector<16x1xf32> to vector<16x32xf32>
    %296 = arith.subf %279, %295 : vector<16x32xf32>
    %cst_104 = arith.constant 9.99999996E-13 : f32
    %297 = vector.broadcast %cst_104 : f32 to vector<16x1xf32>
    %298 = arith.addf %294, %297 : vector<16x1xf32>
    %299 = math.rsqrt %298 : vector<16x1xf32>
    %300 = vector.broadcast %299 : vector<16x1xf32> to vector<16x32xf32>
    %301 = arith.mulf %296, %300 : vector<16x32xf32>
    %302 = vector.broadcast %281 : vector<1x32xf32> to vector<16x32xf32>
    %303 = arith.mulf %301, %302 : vector<16x32xf32>
    %304 = vector.broadcast %283 : vector<1x32xf32> to vector<16x32xf32>
    %305 = arith.addf %303, %304 : vector<16x32xf32>
    %306 = arith.truncf %305 : vector<16x32xf32> to vector<16x32xbf16>
    %c1_105 = arith.constant 1 : index
    %c0_106 = arith.constant 0 : index
    %c0_107 = arith.constant 0 : index
    %307 = vector.load %arg4[%c1_105, %c0_106, %c0_107] : memref<2x32x96xbf16, #tpu.memory_space<vmem>>, vector<1x32x96xbf16>
    %308 = vector.shape_cast %307 : vector<1x32x96xbf16> to vector<32x96xbf16>
    %cst_108 = arith.constant dense<0.000000e+00> : vector<16x96xf32>
    %309 = tpu.matmul %306, %308, %cst_108 {dimension_numbers = #tpu.dot_dimension_numbers<[1], [0], [0], [1], [0, 0, 1, 1], [], []>} : vector<16x32xbf16>, vector<32x96xbf16>, vector<16x96xf32> -> vector<16x96xf32>
    %c1_109 = arith.constant 1 : index
    %c0_110 = arith.constant 0 : index
    %c0_111 = arith.constant 0 : index
    %310 = vector.load %arg5[%c1_109, %c0_110, %c0_111] : memref<2x1x96xf32, #tpu.memory_space<vmem>>, vector<1x1x96xf32>
    %311 = vector.shape_cast %310 : vector<1x1x96xf32> to vector<1x96xf32>
    %312 = vector.broadcast %311 : vector<1x96xf32> to vector<16x96xf32>
    %313 = arith.addf %309, %312 : vector<16x96xf32>
    %314 = vector.extract_strided_slice %313 {offsets = [0, 0], sizes = [8, 96], strides = [1, 1]} : vector<16x96xf32> to vector<8x96xf32>
    %315 = vector.extract_strided_slice %314 {offsets = [0, 0], sizes = [8, 8], strides = [1, 1]} : vector<8x96xf32> to vector<8x8xf32>
    %cst_112 = arith.constant 0.353553385 : f32
    %316 = vector.broadcast %cst_112 : f32 to vector<8x8xf32>
    %317 = arith.mulf %315, %316 : vector<8x8xf32>
    %318 = arith.truncf %317 : vector<8x8xf32> to vector<8x8xbf16>
    %319 = vector.extract_strided_slice %314 {offsets = [0, 32], sizes = [8, 8], strides = [1, 1]} : vector<8x96xf32> to vector<8x8xf32>
    %320 = arith.truncf %319 : vector<8x8xf32> to vector<8x8xbf16>
    %321 = vector.extract_strided_slice %314 {offsets = [0, 64], sizes = [8, 8], strides = [1, 1]} : vector<8x96xf32> to vector<8x8xf32>
    %322 = arith.truncf %321 : vector<8x8xf32> to vector<8x8xbf16>
    %cst_113 = arith.constant dense<0.000000e+00> : vector<8x8xf32>
    %323 = tpu.matmul %318, %320, %cst_113 {dimension_numbers = #tpu.dot_dimension_numbers<[1], [1], [0], [0], [0, 0, 1, 0], [], []>} : vector<8x8xbf16>, vector<8x8xbf16>, vector<8x8xf32> -> vector<8x8xf32>
    %324 = arith.addf %323, %27 : vector<8x8xf32>
    %cst_114 = arith.constant dense<0xFF800000> : vector<8xf32>
    %325 = vector.multi_reduction <maximumf>, %324, %cst_114 [1] : vector<8x8xf32> to vector<8xf32>
    %326 = vector.shape_cast %325 : vector<8xf32> to vector<8x1xf32>
    %327 = vector.broadcast %326 : vector<8x1xf32> to vector<8x8xf32>
    %328 = arith.subf %324, %327 : vector<8x8xf32>
    %329 = math.exp %328 : vector<8x8xf32>
    %cst_115 = arith.constant dense<0.000000e+00> : vector<8xf32>
    %330 = vector.multi_reduction <add>, %329, %cst_115 [1] : vector<8x8xf32> to vector<8xf32>
    %331 = vector.shape_cast %330 : vector<8xf32> to vector<8x1xf32>
    %332 = tpu.reciprocal %331 {approx = true} : vector<8x1xf32> -> vector<8x1xf32>
    %333 = vector.broadcast %332 : vector<8x1xf32> to vector<8x8xf32>
    %334 = arith.mulf %329, %333 : vector<8x8xf32>
    %335 = arith.truncf %334 : vector<8x8xf32> to vector<8x8xbf16>
    %cst_116 = arith.constant dense<0.000000e+00> : vector<8x8xf32>
    %336 = tpu.matmul %335, %322, %cst_116 {dimension_numbers = #tpu.dot_dimension_numbers<[1], [0], [0], [1], [0, 0, 1, 1], [], []>} : vector<8x8xbf16>, vector<8x8xbf16>, vector<8x8xf32> -> vector<8x8xf32>
    %337 = vector.extract_strided_slice %314 {offsets = [0, 8], sizes = [8, 8], strides = [1, 1]} : vector<8x96xf32> to vector<8x8xf32>
    %cst_117 = arith.constant 0.353553385 : f32
    %338 = vector.broadcast %cst_117 : f32 to vector<8x8xf32>
    %339 = arith.mulf %337, %338 : vector<8x8xf32>
    %340 = arith.truncf %339 : vector<8x8xf32> to vector<8x8xbf16>
    %341 = vector.extract_strided_slice %314 {offsets = [0, 40], sizes = [8, 8], strides = [1, 1]} : vector<8x96xf32> to vector<8x8xf32>
    %342 = arith.truncf %341 : vector<8x8xf32> to vector<8x8xbf16>
    %343 = vector.extract_strided_slice %314 {offsets = [0, 72], sizes = [8, 8], strides = [1, 1]} : vector<8x96xf32> to vector<8x8xf32>
    %344 = arith.truncf %343 : vector<8x8xf32> to vector<8x8xbf16>
    %cst_118 = arith.constant dense<0.000000e+00> : vector<8x8xf32>
    %345 = tpu.matmul %340, %342, %cst_118 {dimension_numbers = #tpu.dot_dimension_numbers<[1], [1], [0], [0], [0, 0, 1, 0], [], []>} : vector<8x8xbf16>, vector<8x8xbf16>, vector<8x8xf32> -> vector<8x8xf32>
    %346 = arith.addf %345, %27 : vector<8x8xf32>
    %cst_119 = arith.constant dense<0xFF800000> : vector<8xf32>
    %347 = vector.multi_reduction <maximumf>, %346, %cst_119 [1] : vector<8x8xf32> to vector<8xf32>
    %348 = vector.shape_cast %347 : vector<8xf32> to vector<8x1xf32>
    %349 = vector.broadcast %348 : vector<8x1xf32> to vector<8x8xf32>
    %350 = arith.subf %346, %349 : vector<8x8xf32>
    %351 = math.exp %350 : vector<8x8xf32>
    %cst_120 = arith.constant dense<0.000000e+00> : vector<8xf32>
    %352 = vector.multi_reduction <add>, %351, %cst_120 [1] : vector<8x8xf32> to vector<8xf32>
    %353 = vector.shape_cast %352 : vector<8xf32> to vector<8x1xf32>
    %354 = tpu.reciprocal %353 {approx = true} : vector<8x1xf32> -> vector<8x1xf32>
    %355 = vector.broadcast %354 : vector<8x1xf32> to vector<8x8xf32>
    %356 = arith.mulf %351, %355 : vector<8x8xf32>
    %357 = arith.truncf %356 : vector<8x8xf32> to vector<8x8xbf16>
    %cst_121 = arith.constant dense<0.000000e+00> : vector<8x8xf32>
    %358 = tpu.matmul %357, %344, %cst_121 {dimension_numbers = #tpu.dot_dimension_numbers<[1], [0], [0], [1], [0, 0, 1, 1], [], []>} : vector<8x8xbf16>, vector<8x8xbf16>, vector<8x8xf32> -> vector<8x8xf32>
    %359 = vector.extract_strided_slice %314 {offsets = [0, 16], sizes = [8, 8], strides = [1, 1]} : vector<8x96xf32> to vector<8x8xf32>
    %cst_122 = arith.constant 0.353553385 : f32
    %360 = vector.broadcast %cst_122 : f32 to vector<8x8xf32>
    %361 = arith.mulf %359, %360 : vector<8x8xf32>
    %362 = arith.truncf %361 : vector<8x8xf32> to vector<8x8xbf16>
    %363 = vector.extract_strided_slice %314 {offsets = [0, 48], sizes = [8, 8], strides = [1, 1]} : vector<8x96xf32> to vector<8x8xf32>
    %364 = arith.truncf %363 : vector<8x8xf32> to vector<8x8xbf16>
    %365 = vector.extract_strided_slice %314 {offsets = [0, 80], sizes = [8, 8], strides = [1, 1]} : vector<8x96xf32> to vector<8x8xf32>
    %366 = arith.truncf %365 : vector<8x8xf32> to vector<8x8xbf16>
    %cst_123 = arith.constant dense<0.000000e+00> : vector<8x8xf32>
    %367 = tpu.matmul %362, %364, %cst_123 {dimension_numbers = #tpu.dot_dimension_numbers<[1], [1], [0], [0], [0, 0, 1, 0], [], []>} : vector<8x8xbf16>, vector<8x8xbf16>, vector<8x8xf32> -> vector<8x8xf32>
    %368 = arith.addf %367, %27 : vector<8x8xf32>
    %cst_124 = arith.constant dense<0xFF800000> : vector<8xf32>
    %369 = vector.multi_reduction <maximumf>, %368, %cst_124 [1] : vector<8x8xf32> to vector<8xf32>
    %370 = vector.shape_cast %369 : vector<8xf32> to vector<8x1xf32>
    %371 = vector.broadcast %370 : vector<8x1xf32> to vector<8x8xf32>
    %372 = arith.subf %368, %371 : vector<8x8xf32>
    %373 = math.exp %372 : vector<8x8xf32>
    %cst_125 = arith.constant dense<0.000000e+00> : vector<8xf32>
    %374 = vector.multi_reduction <add>, %373, %cst_125 [1] : vector<8x8xf32> to vector<8xf32>
    %375 = vector.shape_cast %374 : vector<8xf32> to vector<8x1xf32>
    %376 = tpu.reciprocal %375 {approx = true} : vector<8x1xf32> -> vector<8x1xf32>
    %377 = vector.broadcast %376 : vector<8x1xf32> to vector<8x8xf32>
    %378 = arith.mulf %373, %377 : vector<8x8xf32>
    %379 = arith.truncf %378 : vector<8x8xf32> to vector<8x8xbf16>
    %cst_126 = arith.constant dense<0.000000e+00> : vector<8x8xf32>
    %380 = tpu.matmul %379, %366, %cst_126 {dimension_numbers = #tpu.dot_dimension_numbers<[1], [0], [0], [1], [0, 0, 1, 1], [], []>} : vector<8x8xbf16>, vector<8x8xbf16>, vector<8x8xf32> -> vector<8x8xf32>
    %381 = vector.extract_strided_slice %314 {offsets = [0, 24], sizes = [8, 8], strides = [1, 1]} : vector<8x96xf32> to vector<8x8xf32>
    %cst_127 = arith.constant 0.353553385 : f32
    %382 = vector.broadcast %cst_127 : f32 to vector<8x8xf32>
    %383 = arith.mulf %381, %382 : vector<8x8xf32>
    %384 = arith.truncf %383 : vector<8x8xf32> to vector<8x8xbf16>
    %385 = vector.extract_strided_slice %314 {offsets = [0, 56], sizes = [8, 8], strides = [1, 1]} : vector<8x96xf32> to vector<8x8xf32>
    %386 = arith.truncf %385 : vector<8x8xf32> to vector<8x8xbf16>
    %387 = vector.extract_strided_slice %314 {offsets = [0, 88], sizes = [8, 8], strides = [1, 1]} : vector<8x96xf32> to vector<8x8xf32>
    %388 = arith.truncf %387 : vector<8x8xf32> to vector<8x8xbf16>
    %cst_128 = arith.constant dense<0.000000e+00> : vector<8x8xf32>
    %389 = tpu.matmul %384, %386, %cst_128 {dimension_numbers = #tpu.dot_dimension_numbers<[1], [1], [0], [0], [0, 0, 1, 0], [], []>} : vector<8x8xbf16>, vector<8x8xbf16>, vector<8x8xf32> -> vector<8x8xf32>
    %390 = arith.addf %389, %27 : vector<8x8xf32>
    %cst_129 = arith.constant dense<0xFF800000> : vector<8xf32>
    %391 = vector.multi_reduction <maximumf>, %390, %cst_129 [1] : vector<8x8xf32> to vector<8xf32>
    %392 = vector.shape_cast %391 : vector<8xf32> to vector<8x1xf32>
    %393 = vector.broadcast %392 : vector<8x1xf32> to vector<8x8xf32>
    %394 = arith.subf %390, %393 : vector<8x8xf32>
    %395 = math.exp %394 : vector<8x8xf32>
    %cst_130 = arith.constant dense<0.000000e+00> : vector<8xf32>
    %396 = vector.multi_reduction <add>, %395, %cst_130 [1] : vector<8x8xf32> to vector<8xf32>
    %397 = vector.shape_cast %396 : vector<8xf32> to vector<8x1xf32>
    %398 = tpu.reciprocal %397 {approx = true} : vector<8x1xf32> -> vector<8x1xf32>
    %399 = vector.broadcast %398 : vector<8x1xf32> to vector<8x8xf32>
    %400 = arith.mulf %395, %399 : vector<8x8xf32>
    %401 = arith.truncf %400 : vector<8x8xf32> to vector<8x8xbf16>
    %cst_131 = arith.constant dense<0.000000e+00> : vector<8x8xf32>
    %402 = tpu.matmul %401, %388, %cst_131 {dimension_numbers = #tpu.dot_dimension_numbers<[1], [0], [0], [1], [0, 0, 1, 1], [], []>} : vector<8x8xbf16>, vector<8x8xbf16>, vector<8x8xf32> -> vector<8x8xf32>
    %403 = tpu.concatenate %336, %358, %380, %402 in 1 : vector<8x8xf32>, vector<8x8xf32>, vector<8x8xf32>, vector<8x8xf32> -> vector<8x32xf32>
    %404 = vector.extract_strided_slice %313 {offsets = [8, 0], sizes = [8, 96], strides = [1, 1]} : vector<16x96xf32> to vector<8x96xf32>
    %405 = vector.extract_strided_slice %404 {offsets = [0, 0], sizes = [8, 8], strides = [1, 1]} : vector<8x96xf32> to vector<8x8xf32>
    %cst_132 = arith.constant 0.353553385 : f32
    %406 = vector.broadcast %cst_132 : f32 to vector<8x8xf32>
    %407 = arith.mulf %405, %406 : vector<8x8xf32>
    %408 = arith.truncf %407 : vector<8x8xf32> to vector<8x8xbf16>
    %409 = vector.extract_strided_slice %404 {offsets = [0, 32], sizes = [8, 8], strides = [1, 1]} : vector<8x96xf32> to vector<8x8xf32>
    %410 = arith.truncf %409 : vector<8x8xf32> to vector<8x8xbf16>
    %411 = vector.extract_strided_slice %404 {offsets = [0, 64], sizes = [8, 8], strides = [1, 1]} : vector<8x96xf32> to vector<8x8xf32>
    %412 = arith.truncf %411 : vector<8x8xf32> to vector<8x8xbf16>
    %cst_133 = arith.constant dense<0.000000e+00> : vector<8x8xf32>
    %413 = tpu.matmul %408, %410, %cst_133 {dimension_numbers = #tpu.dot_dimension_numbers<[1], [1], [0], [0], [0, 0, 1, 0], [], []>} : vector<8x8xbf16>, vector<8x8xbf16>, vector<8x8xf32> -> vector<8x8xf32>
    %414 = arith.addf %413, %30 : vector<8x8xf32>
    %cst_134 = arith.constant dense<0xFF800000> : vector<8xf32>
    %415 = vector.multi_reduction <maximumf>, %414, %cst_134 [1] : vector<8x8xf32> to vector<8xf32>
    %416 = vector.shape_cast %415 : vector<8xf32> to vector<8x1xf32>
    %417 = vector.broadcast %416 : vector<8x1xf32> to vector<8x8xf32>
    %418 = arith.subf %414, %417 : vector<8x8xf32>
    %419 = math.exp %418 : vector<8x8xf32>
    %cst_135 = arith.constant dense<0.000000e+00> : vector<8xf32>
    %420 = vector.multi_reduction <add>, %419, %cst_135 [1] : vector<8x8xf32> to vector<8xf32>
    %421 = vector.shape_cast %420 : vector<8xf32> to vector<8x1xf32>
    %422 = tpu.reciprocal %421 {approx = true} : vector<8x1xf32> -> vector<8x1xf32>
    %423 = vector.broadcast %422 : vector<8x1xf32> to vector<8x8xf32>
    %424 = arith.mulf %419, %423 : vector<8x8xf32>
    %425 = arith.truncf %424 : vector<8x8xf32> to vector<8x8xbf16>
    %cst_136 = arith.constant dense<0.000000e+00> : vector<8x8xf32>
    %426 = tpu.matmul %425, %412, %cst_136 {dimension_numbers = #tpu.dot_dimension_numbers<[1], [0], [0], [1], [0, 0, 1, 1], [], []>} : vector<8x8xbf16>, vector<8x8xbf16>, vector<8x8xf32> -> vector<8x8xf32>
    %427 = vector.extract_strided_slice %404 {offsets = [0, 8], sizes = [8, 8], strides = [1, 1]} : vector<8x96xf32> to vector<8x8xf32>
    %cst_137 = arith.constant 0.353553385 : f32
    %428 = vector.broadcast %cst_137 : f32 to vector<8x8xf32>
    %429 = arith.mulf %427, %428 : vector<8x8xf32>
    %430 = arith.truncf %429 : vector<8x8xf32> to vector<8x8xbf16>
    %431 = vector.extract_strided_slice %404 {offsets = [0, 40], sizes = [8, 8], strides = [1, 1]} : vector<8x96xf32> to vector<8x8xf32>
    %432 = arith.truncf %431 : vector<8x8xf32> to vector<8x8xbf16>
    %433 = vector.extract_strided_slice %404 {offsets = [0, 72], sizes = [8, 8], strides = [1, 1]} : vector<8x96xf32> to vector<8x8xf32>
    %434 = arith.truncf %433 : vector<8x8xf32> to vector<8x8xbf16>
    %cst_138 = arith.constant dense<0.000000e+00> : vector<8x8xf32>
    %435 = tpu.matmul %430, %432, %cst_138 {dimension_numbers = #tpu.dot_dimension_numbers<[1], [1], [0], [0], [0, 0, 1, 0], [], []>} : vector<8x8xbf16>, vector<8x8xbf16>, vector<8x8xf32> -> vector<8x8xf32>
    %436 = arith.addf %435, %30 : vector<8x8xf32>
    %cst_139 = arith.constant dense<0xFF800000> : vector<8xf32>
    %437 = vector.multi_reduction <maximumf>, %436, %cst_139 [1] : vector<8x8xf32> to vector<8xf32>
    %438 = vector.shape_cast %437 : vector<8xf32> to vector<8x1xf32>
    %439 = vector.broadcast %438 : vector<8x1xf32> to vector<8x8xf32>
    %440 = arith.subf %436, %439 : vector<8x8xf32>
    %441 = math.exp %440 : vector<8x8xf32>
    %cst_140 = arith.constant dense<0.000000e+00> : vector<8xf32>
    %442 = vector.multi_reduction <add>, %441, %cst_140 [1] : vector<8x8xf32> to vector<8xf32>
    %443 = vector.shape_cast %442 : vector<8xf32> to vector<8x1xf32>
    %444 = tpu.reciprocal %443 {approx = true} : vector<8x1xf32> -> vector<8x1xf32>
    %445 = vector.broadcast %444 : vector<8x1xf32> to vector<8x8xf32>
    %446 = arith.mulf %441, %445 : vector<8x8xf32>
    %447 = arith.truncf %446 : vector<8x8xf32> to vector<8x8xbf16>
    %cst_141 = arith.constant dense<0.000000e+00> : vector<8x8xf32>
    %448 = tpu.matmul %447, %434, %cst_141 {dimension_numbers = #tpu.dot_dimension_numbers<[1], [0], [0], [1], [0, 0, 1, 1], [], []>} : vector<8x8xbf16>, vector<8x8xbf16>, vector<8x8xf32> -> vector<8x8xf32>
    %449 = vector.extract_strided_slice %404 {offsets = [0, 16], sizes = [8, 8], strides = [1, 1]} : vector<8x96xf32> to vector<8x8xf32>
    %cst_142 = arith.constant 0.353553385 : f32
    %450 = vector.broadcast %cst_142 : f32 to vector<8x8xf32>
    %451 = arith.mulf %449, %450 : vector<8x8xf32>
    %452 = arith.truncf %451 : vector<8x8xf32> to vector<8x8xbf16>
    %453 = vector.extract_strided_slice %404 {offsets = [0, 48], sizes = [8, 8], strides = [1, 1]} : vector<8x96xf32> to vector<8x8xf32>
    %454 = arith.truncf %453 : vector<8x8xf32> to vector<8x8xbf16>
    %455 = vector.extract_strided_slice %404 {offsets = [0, 80], sizes = [8, 8], strides = [1, 1]} : vector<8x96xf32> to vector<8x8xf32>
    %456 = arith.truncf %455 : vector<8x8xf32> to vector<8x8xbf16>
    %cst_143 = arith.constant dense<0.000000e+00> : vector<8x8xf32>
    %457 = tpu.matmul %452, %454, %cst_143 {dimension_numbers = #tpu.dot_dimension_numbers<[1], [1], [0], [0], [0, 0, 1, 0], [], []>} : vector<8x8xbf16>, vector<8x8xbf16>, vector<8x8xf32> -> vector<8x8xf32>
    %458 = arith.addf %457, %30 : vector<8x8xf32>
    %cst_144 = arith.constant dense<0xFF800000> : vector<8xf32>
    %459 = vector.multi_reduction <maximumf>, %458, %cst_144 [1] : vector<8x8xf32> to vector<8xf32>
    %460 = vector.shape_cast %459 : vector<8xf32> to vector<8x1xf32>
    %461 = vector.broadcast %460 : vector<8x1xf32> to vector<8x8xf32>
    %462 = arith.subf %458, %461 : vector<8x8xf32>
    %463 = math.exp %462 : vector<8x8xf32>
    %cst_145 = arith.constant dense<0.000000e+00> : vector<8xf32>
    %464 = vector.multi_reduction <add>, %463, %cst_145 [1] : vector<8x8xf32> to vector<8xf32>
    %465 = vector.shape_cast %464 : vector<8xf32> to vector<8x1xf32>
    %466 = tpu.reciprocal %465 {approx = true} : vector<8x1xf32> -> vector<8x1xf32>
    %467 = vector.broadcast %466 : vector<8x1xf32> to vector<8x8xf32>
    %468 = arith.mulf %463, %467 : vector<8x8xf32>
    %469 = arith.truncf %468 : vector<8x8xf32> to vector<8x8xbf16>
    %cst_146 = arith.constant dense<0.000000e+00> : vector<8x8xf32>
    %470 = tpu.matmul %469, %456, %cst_146 {dimension_numbers = #tpu.dot_dimension_numbers<[1], [0], [0], [1], [0, 0, 1, 1], [], []>} : vector<8x8xbf16>, vector<8x8xbf16>, vector<8x8xf32> -> vector<8x8xf32>
    %471 = vector.extract_strided_slice %404 {offsets = [0, 24], sizes = [8, 8], strides = [1, 1]} : vector<8x96xf32> to vector<8x8xf32>
    %cst_147 = arith.constant 0.353553385 : f32
    %472 = vector.broadcast %cst_147 : f32 to vector<8x8xf32>
    %473 = arith.mulf %471, %472 : vector<8x8xf32>
    %474 = arith.truncf %473 : vector<8x8xf32> to vector<8x8xbf16>
    %475 = vector.extract_strided_slice %404 {offsets = [0, 56], sizes = [8, 8], strides = [1, 1]} : vector<8x96xf32> to vector<8x8xf32>
    %476 = arith.truncf %475 : vector<8x8xf32> to vector<8x8xbf16>
    %477 = vector.extract_strided_slice %404 {offsets = [0, 88], sizes = [8, 8], strides = [1, 1]} : vector<8x96xf32> to vector<8x8xf32>
    %478 = arith.truncf %477 : vector<8x8xf32> to vector<8x8xbf16>
    %cst_148 = arith.constant dense<0.000000e+00> : vector<8x8xf32>
    %479 = tpu.matmul %474, %476, %cst_148 {dimension_numbers = #tpu.dot_dimension_numbers<[1], [1], [0], [0], [0, 0, 1, 0], [], []>} : vector<8x8xbf16>, vector<8x8xbf16>, vector<8x8xf32> -> vector<8x8xf32>
    %480 = arith.addf %479, %30 : vector<8x8xf32>
    %cst_149 = arith.constant dense<0xFF800000> : vector<8xf32>
    %481 = vector.multi_reduction <maximumf>, %480, %cst_149 [1] : vector<8x8xf32> to vector<8xf32>
    %482 = vector.shape_cast %481 : vector<8xf32> to vector<8x1xf32>
    %483 = vector.broadcast %482 : vector<8x1xf32> to vector<8x8xf32>
    %484 = arith.subf %480, %483 : vector<8x8xf32>
    %485 = math.exp %484 : vector<8x8xf32>
    %cst_150 = arith.constant dense<0.000000e+00> : vector<8xf32>
    %486 = vector.multi_reduction <add>, %485, %cst_150 [1] : vector<8x8xf32> to vector<8xf32>
    %487 = vector.shape_cast %486 : vector<8xf32> to vector<8x1xf32>
    %488 = tpu.reciprocal %487 {approx = true} : vector<8x1xf32> -> vector<8x1xf32>
    %489 = vector.broadcast %488 : vector<8x1xf32> to vector<8x8xf32>
    %490 = arith.mulf %485, %489 : vector<8x8xf32>
    %491 = arith.truncf %490 : vector<8x8xf32> to vector<8x8xbf16>
    %cst_151 = arith.constant dense<0.000000e+00> : vector<8x8xf32>
    %492 = tpu.matmul %491, %478, %cst_151 {dimension_numbers = #tpu.dot_dimension_numbers<[1], [0], [0], [1], [0, 0, 1, 1], [], []>} : vector<8x8xbf16>, vector<8x8xbf16>, vector<8x8xf32> -> vector<8x8xf32>
    %493 = tpu.concatenate %426, %448, %470, %492 in 1 : vector<8x8xf32>, vector<8x8xf32>, vector<8x8xf32>, vector<8x8xf32> -> vector<8x32xf32>
    %494 = tpu.concatenate %403, %493 in 0 : vector<8x32xf32>, vector<8x32xf32> -> vector<16x32xf32>
    %495 = arith.truncf %494 : vector<16x32xf32> to vector<16x32xbf16>
    %c1_152 = arith.constant 1 : index
    %c0_153 = arith.constant 0 : index
    %c0_154 = arith.constant 0 : index
    %496 = vector.load %arg6[%c1_152, %c0_153, %c0_154] : memref<2x32x32xbf16, #tpu.memory_space<vmem>>, vector<1x32x32xbf16>
    %497 = vector.shape_cast %496 : vector<1x32x32xbf16> to vector<32x32xbf16>
    %cst_155 = arith.constant dense<0.000000e+00> : vector<16x32xf32>
    %498 = tpu.matmul %495, %497, %cst_155 {dimension_numbers = #tpu.dot_dimension_numbers<[1], [0], [0], [1], [0, 0, 1, 1], [], []>} : vector<16x32xbf16>, vector<32x32xbf16>, vector<16x32xf32> -> vector<16x32xf32>
    %c1_156 = arith.constant 1 : index
    %c0_157 = arith.constant 0 : index
    %c0_158 = arith.constant 0 : index
    %499 = vector.load %arg7[%c1_156, %c0_157, %c0_158] : memref<2x1x32xf32, #tpu.memory_space<vmem>>, vector<1x1x32xf32>
    %500 = vector.shape_cast %499 : vector<1x1x32xf32> to vector<1x32xf32>
    %501 = vector.broadcast %500 : vector<1x32xf32> to vector<16x32xf32>
    %502 = arith.addf %498, %501 : vector<16x32xf32>
    %503 = arith.addf %305, %502 : vector<16x32xf32>
    %c1_159 = arith.constant 1 : index
    %c0_160 = arith.constant 0 : index
    %c0_161 = arith.constant 0 : index
    %504 = vector.load %arg8[%c1_159, %c0_160, %c0_161] : memref<2x1x32xf32, #tpu.memory_space<vmem>>, vector<1x1x32xf32>
    %505 = vector.shape_cast %504 : vector<1x1x32xf32> to vector<1x32xf32>
    %c1_162 = arith.constant 1 : index
    %c0_163 = arith.constant 0 : index
    %c0_164 = arith.constant 0 : index
    %506 = vector.load %arg9[%c1_162, %c0_163, %c0_164] : memref<2x1x32xf32, #tpu.memory_space<vmem>>, vector<1x1x32xf32>
    %507 = vector.shape_cast %506 : vector<1x1x32xf32> to vector<1x32xf32>
    %cst_165 = arith.constant dense<0.000000e+00> : vector<16xf32>
    %508 = vector.multi_reduction <add>, %503, %cst_165 [1] : vector<16x32xf32> to vector<16xf32>
    %509 = vector.shape_cast %508 : vector<16xf32> to vector<16x1xf32>
    %cst_166 = arith.constant 3.200000e+01 : f32
    %510 = vector.broadcast %cst_166 : f32 to vector<16x1xf32>
    %511 = arith.divf %509, %510 : vector<16x1xf32>
    %512 = vector.broadcast %511 : vector<16x1xf32> to vector<16x32xf32>
    %513 = arith.subf %503, %512 : vector<16x32xf32>
    %514 = arith.mulf %513, %513 : vector<16x32xf32>
    %cst_167 = arith.constant dense<0.000000e+00> : vector<16xf32>
    %515 = vector.multi_reduction <add>, %514, %cst_167 [1] : vector<16x32xf32> to vector<16xf32>
    %516 = vector.shape_cast %515 : vector<16xf32> to vector<16x1xf32>
    %cst_168 = arith.constant 3.200000e+01 : f32
    %517 = vector.broadcast %cst_168 : f32 to vector<16x1xf32>
    %518 = arith.divf %516, %517 : vector<16x1xf32>
    %519 = vector.broadcast %511 : vector<16x1xf32> to vector<16x32xf32>
    %520 = arith.subf %503, %519 : vector<16x32xf32>
    %cst_169 = arith.constant 9.99999996E-13 : f32
    %521 = vector.broadcast %cst_169 : f32 to vector<16x1xf32>
    %522 = arith.addf %518, %521 : vector<16x1xf32>
    %523 = math.rsqrt %522 : vector<16x1xf32>
    %524 = vector.broadcast %523 : vector<16x1xf32> to vector<16x32xf32>
    %525 = arith.mulf %520, %524 : vector<16x32xf32>
    %526 = vector.broadcast %505 : vector<1x32xf32> to vector<16x32xf32>
    %527 = arith.mulf %525, %526 : vector<16x32xf32>
    %528 = vector.broadcast %507 : vector<1x32xf32> to vector<16x32xf32>
    %529 = arith.addf %527, %528 : vector<16x32xf32>
    %530 = arith.truncf %529 : vector<16x32xf32> to vector<16x32xbf16>
    %c1_170 = arith.constant 1 : index
    %c0_171 = arith.constant 0 : index
    %c0_172 = arith.constant 0 : index
    %531 = vector.load %arg10[%c1_170, %c0_171, %c0_172] : memref<2x32x128xbf16, #tpu.memory_space<vmem>>, vector<1x32x128xbf16>
    %532 = vector.shape_cast %531 : vector<1x32x128xbf16> to vector<32x128xbf16>
    %cst_173 = arith.constant dense<0.000000e+00> : vector<16x128xf32>
    %533 = tpu.matmul %530, %532, %cst_173 {dimension_numbers = #tpu.dot_dimension_numbers<[1], [0], [0], [1], [0, 0, 1, 1], [], []>} : vector<16x32xbf16>, vector<32x128xbf16>, vector<16x128xf32> -> vector<16x128xf32>
    %c1_174 = arith.constant 1 : index
    %c0_175 = arith.constant 0 : index
    %c0_176 = arith.constant 0 : index
    %534 = vector.load %arg11[%c1_174, %c0_175, %c0_176] : memref<2x1x128xf32, #tpu.memory_space<vmem>>, vector<1x1x128xf32>
    %535 = vector.shape_cast %534 : vector<1x1x128xf32> to vector<1x128xf32>
    %536 = vector.broadcast %535 : vector<1x128xf32> to vector<16x128xf32>
    %537 = arith.addf %533, %536 : vector<16x128xf32>
    %cst_177 = arith.constant 5.000000e-01 : f32
    %538 = vector.broadcast %cst_177 : f32 to vector<16x128xf32>
    %539 = arith.mulf %538, %537 : vector<16x128xf32>
    %cst_178 = arith.constant 0.707106769 : f32
    %540 = vector.broadcast %cst_178 : f32 to vector<16x128xf32>
    %541 = arith.mulf %537, %540 : vector<16x128xf32>
    %542 = math.erf %541 : vector<16x128xf32>
    %cst_179 = arith.constant 1.000000e+00 : f32
    %543 = vector.broadcast %cst_179 : f32 to vector<16x128xf32>
    %544 = arith.addf %543, %542 : vector<16x128xf32>
    %545 = arith.mulf %539, %544 : vector<16x128xf32>
    %546 = arith.truncf %545 : vector<16x128xf32> to vector<16x128xbf16>
    %c1_180 = arith.constant 1 : index
    %c0_181 = arith.constant 0 : index
    %c0_182 = arith.constant 0 : index
    %547 = vector.load %arg12[%c1_180, %c0_181, %c0_182] : memref<2x128x32xbf16, #tpu.memory_space<vmem>>, vector<1x128x32xbf16>
    %548 = vector.shape_cast %547 : vector<1x128x32xbf16> to vector<128x32xbf16>
    %cst_183 = arith.constant dense<0.000000e+00> : vector<16x32xf32>
    %549 = tpu.matmul %546, %548, %cst_183 {dimension_numbers = #tpu.dot_dimension_numbers<[1], [0], [0], [1], [0, 0, 1, 1], [], []>} : vector<16x128xbf16>, vector<128x32xbf16>, vector<16x32xf32> -> vector<16x32xf32>
    %c1_184 = arith.constant 1 : index
    %c0_185 = arith.constant 0 : index
    %c0_186 = arith.constant 0 : index
    %550 = vector.load %arg13[%c1_184, %c0_185, %c0_186] : memref<2x1x32xf32, #tpu.memory_space<vmem>>, vector<1x1x32xf32>
    %551 = vector.shape_cast %550 : vector<1x1x32xf32> to vector<1x32xf32>
    %552 = vector.broadcast %551 : vector<1x32xf32> to vector<16x32xf32>
    %553 = arith.addf %549, %552 : vector<16x32xf32>
    %554 = arith.addf %529, %553 : vector<16x32xf32>
    %c1_187 = arith.constant 1 : index
    %c0_188 = arith.constant 0 : index
    %c0_189 = arith.constant 0 : index
    %555 = vector.load %arg14[%c1_187, %c0_188, %c0_189] : memref<2x1x32xf32, #tpu.memory_space<vmem>>, vector<1x1x32xf32>
    %556 = vector.shape_cast %555 : vector<1x1x32xf32> to vector<1x32xf32>
    %c1_190 = arith.constant 1 : index
    %c0_191 = arith.constant 0 : index
    %c0_192 = arith.constant 0 : index
    %557 = vector.load %arg15[%c1_190, %c0_191, %c0_192] : memref<2x1x32xf32, #tpu.memory_space<vmem>>, vector<1x1x32xf32>
    %558 = vector.shape_cast %557 : vector<1x1x32xf32> to vector<1x32xf32>
    %cst_193 = arith.constant dense<0.000000e+00> : vector<16xf32>
    %559 = vector.multi_reduction <add>, %554, %cst_193 [1] : vector<16x32xf32> to vector<16xf32>
    %560 = vector.shape_cast %559 : vector<16xf32> to vector<16x1xf32>
    %cst_194 = arith.constant 3.200000e+01 : f32
    %561 = vector.broadcast %cst_194 : f32 to vector<16x1xf32>
    %562 = arith.divf %560, %561 : vector<16x1xf32>
    %563 = vector.broadcast %562 : vector<16x1xf32> to vector<16x32xf32>
    %564 = arith.subf %554, %563 : vector<16x32xf32>
    %565 = arith.mulf %564, %564 : vector<16x32xf32>
    %cst_195 = arith.constant dense<0.000000e+00> : vector<16xf32>
    %566 = vector.multi_reduction <add>, %565, %cst_195 [1] : vector<16x32xf32> to vector<16xf32>
    %567 = vector.shape_cast %566 : vector<16xf32> to vector<16x1xf32>
    %cst_196 = arith.constant 3.200000e+01 : f32
    %568 = vector.broadcast %cst_196 : f32 to vector<16x1xf32>
    %569 = arith.divf %567, %568 : vector<16x1xf32>
    %570 = vector.broadcast %562 : vector<16x1xf32> to vector<16x32xf32>
    %571 = arith.subf %554, %570 : vector<16x32xf32>
    %cst_197 = arith.constant 9.99999996E-13 : f32
    %572 = vector.broadcast %cst_197 : f32 to vector<16x1xf32>
    %573 = arith.addf %569, %572 : vector<16x1xf32>
    %574 = math.rsqrt %573 : vector<16x1xf32>
    %575 = vector.broadcast %574 : vector<16x1xf32> to vector<16x32xf32>
    %576 = arith.mulf %571, %575 : vector<16x32xf32>
    %577 = vector.broadcast %556 : vector<1x32xf32> to vector<16x32xf32>
    %578 = arith.mulf %576, %577 : vector<16x32xf32>
    %579 = vector.broadcast %558 : vector<1x32xf32> to vector<16x32xf32>
    %580 = arith.addf %578, %579 : vector<16x32xf32>
    %581 = vector.extract_strided_slice %580 {offsets = [0, 0], sizes = [1, 32], strides = [1, 1]} : vector<16x32xf32> to vector<1x32xf32>
    %582 = vector.extract_strided_slice %580 {offsets = [8, 0], sizes = [1, 32], strides = [1, 1]} : vector<16x32xf32> to vector<1x32xf32>
    %583 = tpu.concatenate %581, %582 in 0 : vector<1x32xf32>, vector<1x32xf32> -> vector<2x32xf32>
    %584 = arith.truncf %583 : vector<2x32xf32> to vector<2x32xbf16>
    %c0_198 = arith.constant 0 : index
    %c0_199 = arith.constant 0 : index
    %585 = vector.load %arg16[%c0_198, %c0_199] : memref<32x32xbf16, #tpu.memory_space<vmem>>, vector<32x32xbf16>
    %cst_200 = arith.constant dense<0.000000e+00> : vector<2x32xf32>
    %586 = tpu.matmul %584, %585, %cst_200 {dimension_numbers = #tpu.dot_dimension_numbers<[1], [0], [0], [1], [0, 0, 1, 1], [], []>} : vector<2x32xbf16>, vector<32x32xbf16>, vector<2x32xf32> -> vector<2x32xf32>
    %c0_201 = arith.constant 0 : index
    %c0_202 = arith.constant 0 : index
    %587 = vector.load %arg17[%c0_201, %c0_202] : memref<1x32xf32, #tpu.memory_space<vmem>>, vector<1x32xf32>
    %588 = vector.broadcast %587 : vector<1x32xf32> to vector<2x32xf32>
    %589 = arith.addf %586, %588 : vector<2x32xf32>
    %cst_203 = arith.constant 0.000000e+00 : f32
    %590 = vector.broadcast %cst_203 : f32 to vector<2x32xf32>
    %591 = arith.maximumf %589, %590 : vector<2x32xf32>
    %592 = arith.truncf %591 : vector<2x32xf32> to vector<2x32xbf16>
    %c0_204 = arith.constant 0 : index
    %c0_205 = arith.constant 0 : index
    %593 = vector.load %arg18[%c0_204, %c0_205] : memref<32x2xbf16, #tpu.memory_space<vmem>>, vector<32x2xbf16>
    %cst_206 = arith.constant dense<0.000000e+00> : vector<2x2xf32>
    %594 = tpu.matmul %592, %593, %cst_206 {dimension_numbers = #tpu.dot_dimension_numbers<[1], [0], [0], [1], [0, 0, 1, 1], [], []>} : vector<2x32xbf16>, vector<32x2xbf16>, vector<2x2xf32> -> vector<2x2xf32>
    %c0_207 = arith.constant 0 : index
    %c0_208 = arith.constant 0 : index
    %595 = vector.load %arg19[%c0_207, %c0_208] : memref<1x2xf32, #tpu.memory_space<vmem>>, vector<1x2xf32>
    %596 = vector.broadcast %595 : vector<1x2xf32> to vector<2x2xf32>
    %597 = arith.addf %594, %596 : vector<2x2xf32>
    %c0_209 = arith.constant 0 : index
    %c0_210 = arith.constant 0 : index
    %598 = vector.load %arg20[%c0_209, %c0_210] : memref<2x2xf32, #tpu.memory_space<vmem>>, vector<2x2xf32>
    tpu.vector_store %arg20[%c0_209, %c0_210], %597 {strides = array<i32>} : memref<2x2xf32, #tpu.memory_space<vmem>>, vector<2x2xf32>,
    return
  }
}

</mosaic_0001>

<llo_original>
// kernel: tpu_custom_call.1
$region0: #{tpu_custom_call.1}
  #allocation0 [shape = 'u32[]', space=smem, size = 0x4, offset = 0x4, fixed_abs, tag = 'smem constant byte address 0x4 - core index']
  #allocation1 [shape = 'u32[144,128]{1,0:T(1,128)}', space=vmem, size = 0x12000, scoped, tag = 'internal scratch']
  %s0 = inlined_call_operand.vmem [shape: f32[16,32], index: 0, kind: input, shape index: {}]
  %s1 = inlined_call_operand.vmem [shape: f32[2,8], index: 1, kind: input, shape index: {}]
  %s2 = inlined_call_operand.vmem [shape: f32[1,32], index: 2, kind: input, shape index: {}]
  %s3 = inlined_call_operand.vmem [shape: f32[1,32], index: 3, kind: input, shape index: {}]
  %s4 = inlined_call_operand.vmem [shape: bf16[2,32,96], index: 4, kind: input, shape index: {}]
  %s5 = inlined_call_operand.vmem [shape: f32[2,1,96], index: 5, kind: input, shape index: {}]
  %s6 = inlined_call_operand.vmem [shape: bf16[2,32,32], index: 6, kind: input, shape index: {}]
  %s7 = inlined_call_operand.vmem [shape: f32[2,1,32], index: 7, kind: input, shape index: {}]
  %s8 = inlined_call_operand.vmem [shape: f32[2,1,32], index: 8, kind: input, shape index: {}]
  %s9 = inlined_call_operand.vmem [shape: f32[2,1,32], index: 9, kind: input, shape index: {}]
  %s10 = inlined_call_operand.vmem [shape: bf16[2,32,128], index: 10, kind: input, shape index: {}]
  %s11 = inlined_call_operand.vmem [shape: f32[2,1,128], index: 11, kind: input, shape index: {}]
  %s12 = inlined_call_operand.vmem [shape: bf16[2,128,32], index: 12, kind: input, shape index: {}]
  %s13 = inlined_call_operand.vmem [shape: f32[2,1,32], index: 13, kind: input, shape index: {}]
  %s14 = inlined_call_operand.vmem [shape: f32[2,1,32], index: 14, kind: input, shape index: {}]
  %s15 = inlined_call_operand.vmem [shape: f32[2,1,32], index: 15, kind: input, shape index: {}]
  %s16 = inlined_call_operand.vmem [shape: bf16[32,32], index: 16, kind: input, shape index: {}]
  %s17 = inlined_call_operand.vmem [shape: f32[1,32], index: 17, kind: input, shape index: {}]
  %s18 = inlined_call_operand.vmem [shape: bf16[32,2], index: 18, kind: input, shape index: {}]
  %s19 = inlined_call_operand.vmem [shape: f32[1,2], index: 19, kind: input, shape index: {}]
  %s20 = inlined_call_operand.hbm [shape: f32[2,2], index: 20, kind: output, shape index: {}]
  %s21 = sld [smem:[#allocation0]]
  $region90: #{tpu_custom_call.1} parent=0
    _
  %s23 = ssub.s32 1, %s21
  %s24 = scalar_select 0, %s23, %s21
  $region1: #{tpu_custom_call.1} parent=0
    #allocation2 [shape = 'u8[1024]{0}', space=vmem, size = 0x400, scoped, tag = 'output window, operand 0, single buffered']
    #allocation3 [shape = 's32[1]{0}', space=sflag, size = 0x4, scoped, tag = 'scoped memory for tpu_custom_call.1']
    %25 = vsyncpa [#allocation3], 0
    // Predicated region
    $region2: #{tpu_custom_call.1} parent=1 // pred_check
      _
    $region3: #{tpu_custom_call.1} parent=1 // pred_check_branch
      %27 = sbr.rel (0) target = $region5
    $region4: #{tpu_custom_call.1} parent=1 // pred_region
      _
    $region5: #{tpu_custom_call.1} parent=1 // pred_fallthru
      _
    // Predicated region
    $region6: #{tpu_custom_call.1} parent=1 // pred_check
      _
    $region7: #{tpu_custom_call.1} parent=1 // pred_check_branch
      %29 = sbr.rel (0) target = $region9
    $region8: #{tpu_custom_call.1} parent=1 // pred_region
      _
    $region9: #{tpu_custom_call.1} parent=1 // pred_fallthru
      _
    // Predicated region
    $region10: #{tpu_custom_call.1} parent=1 // pred_check
      _
    $region11: #{tpu_custom_call.1} parent=1 // pred_check_branch
      %31 = sbr.rel (0) target = $region13
    $region12: #{tpu_custom_call.1} parent=1 // pred_region
      _
    $region13: #{tpu_custom_call.1} parent=1 // pred_fallthru
      _
    // Predicated region
    $region14: #{tpu_custom_call.1} parent=1 // pred_check
      _
    $region15: #{tpu_custom_call.1} parent=1 // pred_check_branch
      %33 = sbr.rel (0) target = $region17
    $region16: #{tpu_custom_call.1} parent=1 // pred_region
      _
    $region17: #{tpu_custom_call.1} parent=1 // pred_fallthru
      _
    // Predicated region
    $region18: #{tpu_custom_call.1} parent=1 // pred_check
      _
    $region19: #{tpu_custom_call.1} parent=1 // pred_check_branch
      %35 = sbr.rel (0) target = $region21
    $region20: #{tpu_custom_call.1} parent=1 // pred_region
      _
    $region21: #{tpu_custom_call.1} parent=1 // pred_fallthru
      _
    // Predicated region
    $region22: #{tpu_custom_call.1} parent=1 // pred_check
      _
    $region23: #{tpu_custom_call.1} parent=1 // pred_check_branch
      %37 = sbr.rel (0) target = $region25
    $region24: #{tpu_custom_call.1} parent=1 // pred_region
      _
    $region25: #{tpu_custom_call.1} parent=1 // pred_fallthru
      _
    // Predicated region
    $region26: #{tpu_custom_call.1} parent=1 // pred_check
      _
    $region27: #{tpu_custom_call.1} parent=1 // pred_check_branch
      %39 = sbr.rel (0) target = $region29
    $region28: #{tpu_custom_call.1} parent=1 // pred_region
      _
    $region29: #{tpu_custom_call.1} parent=1 // pred_fallthru
      _
    // Predicated region
    $region30: #{tpu_custom_call.1} parent=1 // pred_check
      _
    $region31: #{tpu_custom_call.1} parent=1 // pred_check_branch
      %41 = sbr.rel (0) target = $region33
    $region32: #{tpu_custom_call.1} parent=1 // pred_region
      _
    $region33: #{tpu_custom_call.1} parent=1 // pred_fallthru
      _
    // Predicated region
    $region34: #{tpu_custom_call.1} parent=1 // pred_check
      _
    $region35: #{tpu_custom_call.1} parent=1 // pred_check_branch
      %43 = sbr.rel (0) target = $region37
    $region36: #{tpu_custom_call.1} parent=1 // pred_region
      _
    $region37: #{tpu_custom_call.1} parent=1 // pred_fallthru
      _
    // Predicated region
    $region38: #{tpu_custom_call.1} parent=1 // pred_check
      _
    $region39: #{tpu_custom_call.1} parent=1 // pred_check_branch
      %45 = sbr.rel (0) target = $region41
    $region40: #{tpu_custom_call.1} parent=1 // pred_region
      _
    $region41: #{tpu_custom_call.1} parent=1 // pred_fallthru
      _
    // Predicated region
    $region42: #{tpu_custom_call.1} parent=1 // pred_check
      _
    $region43: #{tpu_custom_call.1} parent=1 // pred_check_branch
      %47 = sbr.rel (0) target = $region45
    $region44: #{tpu_custom_call.1} parent=1 // pred_region
      _
    $region45: #{tpu_custom_call.1} parent=1 // pred_fallthru
      _
    // Predicated region
    $region46: #{tpu_custom_call.1} parent=1 // pred_check
      _
    $region47: #{tpu_custom_call.1} parent=1 // pred_check_branch
      %49 = sbr.rel (0) target = $region49
    $region48: #{tpu_custom_call.1} parent=1 // pred_region
      _
    $region49: #{tpu_custom_call.1} parent=1 // pred_fallthru
      _
    // Predicated region
    $region50: #{tpu_custom_call.1} parent=1 // pred_check
      _
    $region51: #{tpu_custom_call.1} parent=1 // pred_check_branch
      %51 = sbr.rel (0) target = $region53
    $region52: #{tpu_custom_call.1} parent=1 // pred_region
      _
    $region53: #{tpu_custom_call.1} parent=1 // pred_fallthru
      _
    // Predicated region
    $region54: #{tpu_custom_call.1} parent=1 // pred_check
      _
    $region55: #{tpu_custom_call.1} parent=1 // pred_check_branch
      %53 = sbr.rel (0) target = $region57
    $region56: #{tpu_custom_call.1} parent=1 // pred_region
      _
    $region57: #{tpu_custom_call.1} parent=1 // pred_fallthru
      _
    // Predicated region
    $region58: #{tpu_custom_call.1} parent=1 // pred_check
      _
    $region59: #{tpu_custom_call.1} parent=1 // pred_check_branch
      %55 = sbr.rel (0) target = $region61
    $region60: #{tpu_custom_call.1} parent=1 // pred_region
      _
    $region61: #{tpu_custom_call.1} parent=1 // pred_fallthru
      _
    // Predicated region
    $region62: #{tpu_custom_call.1} parent=1 // pred_check
      _
    $region63: #{tpu_custom_call.1} parent=1 // pred_check_branch
      %57 = sbr.rel (0) target = $region65
    $region64: #{tpu_custom_call.1} parent=1 // pred_region
      _
    $region65: #{tpu_custom_call.1} parent=1 // pred_fallthru
      _
    // Predicated region
    $region66: #{tpu_custom_call.1} parent=1 // pred_check
      _
    $region67: #{tpu_custom_call.1} parent=1 // pred_check_branch
      %59 = sbr.rel (0) target = $region69
    $region68: #{tpu_custom_call.1} parent=1 // pred_region
      _
    $region69: #{tpu_custom_call.1} parent=1 // pred_fallthru
      _
    // Predicated region
    $region70: #{tpu_custom_call.1} parent=1 // pred_check
      _
    $region71: #{tpu_custom_call.1} parent=1 // pred_check_branch
      %61 = sbr.rel (0) target = $region73
    $region72: #{tpu_custom_call.1} parent=1 // pred_region
      _
    $region73: #{tpu_custom_call.1} parent=1 // pred_fallthru
      _
    // Predicated region
    $region74: #{tpu_custom_call.1} parent=1 // pred_check
      _
    $region75: #{tpu_custom_call.1} parent=1 // pred_check_branch
      %63 = sbr.rel (0) target = $region77
    $region76: #{tpu_custom_call.1} parent=1 // pred_region
      _
    $region77: #{tpu_custom_call.1} parent=1 // pred_fallthru
      _
    // Predicated region
    $region78: #{tpu_custom_call.1} parent=1 // pred_check
      _
    $region79: #{tpu_custom_call.1} parent=1 // pred_check_branch
      %65 = sbr.rel (0) target = $region81
    $region80: #{tpu_custom_call.1} parent=1 // pred_region
      _
    $region81: #{tpu_custom_call.1} parent=1 // pred_fallthru
      _
    %v67 = vld [vmem:[%s0] sm:$0xff]
    %v68 = vld [vmem:[%s0 + $0x8] sm:$0xff]
    %v69 = vld [vmem:[%s2] sm:$0x1]
    %v70 = vld [vmem:[%s3] sm:$0x1]
    %vm71 = vcmask 261120
    %v72 = vsel %vm71, %v67, 0.0
    %73 = vadd.xlane.f32.xlu0 %v72
    %v74 = vpop.xlane.xlu0 %73
    %v75 = vsel %vm71, %v68, 0.0
    %76 = vadd.xlane.f32.xlu0 %v75
    %v77 = vpop.xlane.xlu0 %76
    %v78 = vrcp.pop 32.0
    %v79 = vmul.f32 %v74, %v78
    %v80 = vmul.f32 %v77, %v78
    %v81 = vsub.f32 %v67, %v79
    %v82 = vsub.f32 %v68, %v80
    %v83 = vmul.f32 %v81, %v81
    %v84 = vmul.f32 %v82, %v82
    %v85 = vsel %vm71, %v83, 0.0
    %86 = vadd.xlane.f32.xlu0 %v85
    %v87 = vpop.xlane.xlu0 %86
    %v88 = vsel %vm71, %v84, 0.0
    %89 = vadd.xlane.f32.xlu0 %v88
    %v90 = vpop.xlane.xlu0 %89
    %v91 = vmul.f32 %v87, %v78
    %v92 = vmul.f32 %v90, %v78
    %v93 = vadd.f32 %v91, 1e-12
    %v94 = vadd.f32 %v92, 1e-12
    %v95 = vrsqrt.pop %v93
    %v96 = vrsqrt.pop %v94
    %v97 = vmul.f32 %v81, %v95
    %v98 = vmul.f32 %v82, %v96
    %v100 = vlaneseq
    %v101 = vshrl.u32 %v100, 7
    %v102 = vsub.s32 0, %v101
    %v103 = vrot.slane %v69, %v102
    %v105 = vmul.f32 %v97, %v103
    %v106 = vmul.f32 %v98, %v103
    %v108 = vlaneseq
    %v109 = vshrl.u32 %v108, 7
    %v110 = vsub.s32 0, %v109
    %v111 = vrot.slane %v70, %v110
    %v113 = vadd.f32 %v105, %v111
    %v114 = vadd.f32 %v106, %v111
    %v115 = vld [vmem:[%s1] sm:$0x1]
    %v116 = vlaneseq
    %v117 = vshrl.u32 %v116, 7
    %v118 = vsub.s32 0, %v117
    %v119 = vrot.slane %v115, %v118
    %v120 = vld [vmem:[%s1 + $0x1] sm:$0x1]
    %v121 = vlaneseq
    %v122 = vshrl.u32 %v121, 7
    %v123 = vsub.s32 0, %v122
    %v124 = vrot.slane %v120, %v123
    %v125 = vpack.c.bf16 %v114, %v113
    %v126 = vld [vmem:[%s4] sm:$0xf]
    %v127 = vld [vmem:[%s4 + $0x4] sm:$0xf]
    %v128 = vld [vmem:[%s4 + $0x8] sm:$0xf]
    %v129 = vld [vmem:[%s4 + $0xc] sm:$0xf]
    %v130 = vld [vmem:[%s5] sm:$0x1]
    %v132 = vlaneseq
    %v133 = vshrl.u32 %v132, 7
    %v134 = vsub.s32 0, %v133
    %v135 = vrot.slane %v130, %v134
    %v141 = vunpack.c.l.b16 %v126
    %v142 = vunpack.c.l.b16 %v127
    %v143 = vunpack.c.l.b16 %v128
    %v144 = vunpack.c.l.b16 %v129
    %v145 = vpack.c.b16 %v142, %v141
    %v146 = vpack.c.b16 %v144, %v143
    %v150 = vsel %vm71, %v125, 0
    %152 = vmatprep.subr.bf16.mxu0 0
    %153 = vmatpush1.bf16.msra.mxu0 %v145
    %154 = vmatprep.subr.bf16.mxu0 0
    %155 = vmatpush1.bf16.msra.mxu0 %v146
    %156 = vmatprep.subr.bf16.mxu0 0
    %157 = vmatpush1.bf16.msra.mxu0 0
    %158 = vmatprep.subr.bf16.mxu0 0
    %159 = vmatpush1.bf16.msra.mxu0 0
    %160 = vmatprep.subr.bf16.mxu0 0
    %161 = vmatpush1.bf16.msra.mxu0 0
    %162 = vmatprep.subr.bf16.mxu0 0
    %163 = vmatpush1.bf16.msra.mxu0 0
    %164 = vmatprep.subr.bf16.mxu0 0
    %165 = vmatpush1.bf16.msra.mxu0 0
    %166 = vmatprep.subr.bf16.mxu0 0
    %167 = vmatpush1.bf16.msra.mxu0 0
    %168 = vmatprep.subr.bf16.mxu0 0
    %169 = vmatpush1.bf16.msra.mxu0 0
    %170 = vmatprep.subr.bf16.mxu0 0
    %171 = vmatpush1.bf16.msra.mxu0 0
    %172 = vmatprep.subr.bf16.mxu0 0
    %173 = vmatpush1.bf16.msra.mxu0 0
    %174 = vmatprep.subr.bf16.mxu0 0
    %175 = vmatpush1.bf16.msra.mxu0 0
    %176 = vmatprep.subr.bf16.mxu0 0
    %177 = vmatpush1.bf16.msra.mxu0 0
    %178 = vmatprep.subr.bf16.mxu0 0
    %179 = vmatpush1.bf16.msra.mxu0 0
    %180 = vmatprep.subr.bf16.mxu0 0
    %181 = vmatpush1.bf16.msra.mxu0 0
    %182 = vmatprep.subr.bf16.mxu0 0
    %183 = vmatpush1.bf16.msra.mxu0 0
    %184 = vmatprep.mubr.bf16.mxu0 0
    %185 = vmatmul.mubr.bf16.gmra.mrb[0].mxu0 %v150
    %v186 = vpop.f32.mrb[0].mxu0
    %v187 = vadd.f32 %v135, %v186
    %v188 = vpop.f32.mrb[0].mxu0
    %v189 = vpop.f32.mrb[0].mxu0
    %v190 = vadd.f32 %v135, %v189
    %v191 = vpop.f32.mrb[0].mxu0
    %192 = vdwg.mxu0
    %v193 = vmul.f32 %v187, 0.35355338
    %v194 = vpack.c.bf16 %v193, %v193
    %v195 = vpack.c.bf16 %v187, %v187
    %197 = vrot.lane.b32.xlu0 %v195, 96
    %v198 = vpop.permute.xlu0 %197
    %vm199 = vcmask 64512
    %v201 = vsel %vm199, %v194, 0
    %v204 = vsel %vm199, %v198, 0
    %206 = vmatprep.subr.bf16.mxu0 0
    %207 = vmatpush1.bf16.xpose.msra.mxu0 %v204
    %208 = vmatprep.subr.bf16.mxu0 0
    %209 = vmatpush1.bf16.xpose.msra.mxu0 0
    %210 = vmatprep.subr.bf16.mxu0 0
    %211 = vmatpush1.bf16.xpose.msra.mxu0 0
    %212 = vmatprep.subr.bf16.mxu0 0
    %213 = vmatpush1.bf16.xpose.msra.mxu0 0
    %214 = vmatprep.subr.bf16.mxu0 0
    %215 = vmatpush1.bf16.xpose.msra.mxu0 0
    %216 = vmatprep.subr.bf16.mxu0 0
    %217 = vmatpush1.bf16.xpose.msra.mxu0 0
    %218 = vmatprep.subr.bf16.mxu0 0
    %219 = vmatpush1.bf16.xpose.msra.mxu0 0
    %220 = vmatprep.subr.bf16.mxu0 0
    %221 = vmatpush1.bf16.xpose.msra.mxu0 0
    %222 = vmatprep.subr.bf16.mxu0 0
    %223 = vmatpush1.bf16.xpose.msra.mxu0 0
    %224 = vmatprep.subr.bf16.mxu0 0
    %225 = vmatpush1.bf16.xpose.msra.mxu0 0
    %226 = vmatprep.subr.bf16.mxu0 0
    %227 = vmatpush1.bf16.xpose.msra.mxu0 0
    %228 = vmatprep.subr.bf16.mxu0 0
    %229 = vmatpush1.bf16.xpose.msra.mxu0 0
    %230 = vmatprep.subr.bf16.mxu0 0
    %231 = vmatpush1.bf16.xpose.msra.mxu0 0
    %232 = vmatprep.subr.bf16.mxu0 0
    %233 = vmatpush1.bf16.xpose.msra.mxu0 0
    %234 = vmatprep.subr.bf16.mxu0 0
    %235 = vmatpush1.bf16.xpose.msra.mxu0 0
    %236 = vmatprep.subr.bf16.mxu0 0
    %237 = vmatpush1.bf16.xpose.msra.mxu0 0
    %238 = vmatprep.mubr.bf16.mxu0 0
    %239 = vmatmul.mubr.bf16.gmra.mrb[0].mxu0 %v201
    %v240 = vpop.f32.mrb[0].mxu0
    %v241 = vadd.f32 %v119, %v240
    %v242 = vpop.f32.mrb[0].mxu0
    %v243 = vpop.f32.mrb[0].mxu0
    %v244 = vpop.f32.mrb[0].mxu0
    %245 = vdwg.mxu0
    %v246 = vsel %vm199, %v241, -inf
    %247 = vmax.xlane.f32.xlu0 %v246
    %v248 = vpop.xlane.xlu0 %247
    %v249 = vsub.f32 %v241, %v248
    %v250 = vmul.f32 %v249, 1.442695
    %v251 = vpow.pop %v250
    %v252 = vsel %vm199, %v251, 0.0
    %253 = vadd.xlane.f32.xlu0 %v252
    %v254 = vpop.xlane.xlu0 %253
    %v255 = vrcp.pop %v254
    %v256 = vmul.f32 %v251, %v255
    %v257 = vpack.c.bf16 %v256, %v256
    %258 = vrot.lane.b32.xlu0 %v195, 64
    %v259 = vpop.permute.xlu0 %258
    %v261 = vsel %vm199, %v257, 0
    %vm263 = vcmask 1043456
    %v265 = vsel %vm263, %v259, 0
    %267 = vmatprep.subr.bf16.mxu0 0
    %268 = vmatpush1.bf16.msra.mxu0 %v265
    %269 = vmatprep.subr.bf16.mxu0 0
    %270 = vmatpush1.bf16.msra.mxu0 0
    %271 = vmatprep.subr.bf16.mxu0 0
    %272 = vmatpush1.bf16.msra.mxu0 0
    %273 = vmatprep.subr.bf16.mxu0 0
    %274 = vmatpush1.bf16.msra.mxu0 0
    %275 = vmatprep.subr.bf16.mxu0 0
    %276 = vmatpush1.bf16.msra.mxu0 0
    %277 = vmatprep.subr.bf16.mxu0 0
    %278 = vmatpush1.bf16.msra.mxu0 0
    %279 = vmatprep.subr.bf16.mxu0 0
    %280 = vmatpush1.bf16.msra.mxu0 0
    %281 = vmatprep.subr.bf16.mxu0 0
    %282 = vmatpush1.bf16.msra.mxu0 0
    %283 = vmatprep.subr.bf16.mxu0 0
    %284 = vmatpush1.bf16.msra.mxu0 0
    %285 = vmatprep.subr.bf16.mxu0 0
    %286 = vmatpush1.bf16.msra.mxu0 0
    %287 = vmatprep.subr.bf16.mxu0 0
    %288 = vmatpush1.bf16.msra.mxu0 0
    %289 = vmatprep.subr.bf16.mxu0 0
    %290 = vmatpush1.bf16.msra.mxu0 0
    %291 = vmatprep.subr.bf16.mxu0 0
    %292 = vmatpush1.bf16.msra.mxu0 0
    %293 = vmatprep.subr.bf16.mxu0 0
    %294 = vmatpush1.bf16.msra.mxu0 0
    %295 = vmatprep.subr.bf16.mxu0 0
    %296 = vmatpush1.bf16.msra.mxu0 0
    %297 = vmatprep.subr.bf16.mxu0 0
    %298 = vmatpush1.bf16.msra.mxu0 0
    %299 = vmatprep.mubr.bf16.mxu0 0
    %300 = vmatmul.mubr.bf16.gmra.mrb[0].mxu0 %v261
    %v301 = vpop.f32.mrb[0].mxu0
    %v302 = vadd.f32 0.0, %v301
    %v303 = vpop.f32.mrb[0].mxu0
    %v304 = vpop.f32.mrb[0].mxu0
    %v305 = vpop.f32.mrb[0].mxu0
    %306 = vdwg.mxu0
    %308 = vrot.lane.b32.xlu0 %v194, 120
    %v309 = vpop.permute.xlu0 %308
    %310 = vrot.lane.b32.xlu0 %v195, 88
    %v311 = vpop.permute.xlu0 %310
    %v313 = vsel %vm199, %v309, 0
    %v316 = vsel %vm199, %v311, 0
    %318 = vmatprep.subr.bf16.mxu0 0
    %319 = vmatpush1.bf16.xpose.msra.mxu0 %v316
    %320 = vmatprep.subr.bf16.mxu0 0
    %321 = vmatpush1.bf16.xpose.msra.mxu0 0
    %322 = vmatprep.subr.bf16.mxu0 0
    %323 = vmatpush1.bf16.xpose.msra.mxu0 0
    %324 = vmatprep.subr.bf16.mxu0 0
    %325 = vmatpush1.bf16.xpose.msra.mxu0 0
    %326 = vmatprep.subr.bf16.mxu0 0
    %327 = vmatpush1.bf16.xpose.msra.mxu0 0
    %328 = vmatprep.subr.bf16.mxu0 0
    %329 = vmatpush1.bf16.xpose.msra.mxu0 0
    %330 = vmatprep.subr.bf16.mxu0 0
    %331 = vmatpush1.bf16.xpose.msra.mxu0 0
    %332 = vmatprep.subr.bf16.mxu0 0
    %333 = vmatpush1.bf16.xpose.msra.mxu0 0
    %334 = vmatprep.subr.bf16.mxu0 0
    %335 = vmatpush1.bf16.xpose.msra.mxu0 0
    %336 = vmatprep.subr.bf16.mxu0 0
    %337 = vmatpush1.bf16.xpose.msra.mxu0 0
    %338 = vmatprep.subr.bf16.mxu0 0
    %339 = vmatpush1.bf16.xpose.msra.mxu0 0
    %340 = vmatprep.subr.bf16.mxu0 0
    %341 = vmatpush1.bf16.xpose.msra.mxu0 0
    %342 = vmatprep.subr.bf16.mxu0 0
    %343 = vmatpush1.bf16.xpose.msra.mxu0 0
    %344 = vmatprep.subr.bf16.mxu0 0
    %345 = vmatpush1.bf16.xpose.msra.mxu0 0
    %346 = vmatprep.subr.bf16.mxu0 0
    %347 = vmatpush1.bf16.xpose.msra.mxu0 0
    %348 = vmatprep.subr.bf16.mxu0 0
    %349 = vmatpush1.bf16.xpose.msra.mxu0 0
    %350 = vmatprep.mubr.bf16.mxu0 0
    %351 = vmatmul.mubr.bf16.gmra.mrb[0].mxu0 %v313
    %v352 = vpop.f32.mrb[0].mxu0
    %v353 = vadd.f32 %v119, %v352
    %v354 = vpop.f32.mrb[0].mxu0
    %v355 = vpop.f32.mrb[0].mxu0
    %v356 = vpop.f32.mrb[0].mxu0
    %357 = vdwg.mxu0
    %v358 = vsel %vm199, %v353, -inf
    %359 = vmax.xlane.f32.xlu0 %v358
    %v360 = vpop.xlane.xlu0 %359
    %v361 = vsub.f32 %v353, %v360
    %v362 = vmul.f32 %v361, 1.442695
    %v363 = vpow.pop %v362
    %v364 = vsel %vm199, %v363, 0.0
    %365 = vadd.xlane.f32.xlu0 %v364
    %v366 = vpop.xlane.xlu0 %365
    %v367 = vrcp.pop %v366
    %v368 = vmul.f32 %v363, %v367
    %v369 = vpack.c.bf16 %v368, %v368
    %370 = vrot.lane.b32.xlu0 %v195, 56
    %v371 = vpop.permute.xlu0 %370
    %v373 = vsel %vm199, %v369, 0
    %v376 = vsel %vm263, %v371, 0
    %378 = vmatprep.subr.bf16.mxu0 0
    %379 = vmatpush1.bf16.msra.mxu0 %v376
    %380 = vmatprep.subr.bf16.mxu0 0
    %381 = vmatpush1.bf16.msra.mxu0 0
    %382 = vmatprep.subr.bf16.mxu0 0
    %383 = vmatpush1.bf16.msra.mxu0 0
    %384 = vmatprep.subr.bf16.mxu0 0
    %385 = vmatpush1.bf16.msra.mxu0 0
    %386 = vmatprep.subr.bf16.mxu0 0
    %387 = vmatpush1.bf16.msra.mxu0 0
    %388 = vmatprep.subr.bf16.mxu0 0
    %389 = vmatpush1.bf16.msra.mxu0 0
    %390 = vmatprep.subr.bf16.mxu0 0
    %391 = vmatpush1.bf16.msra.mxu0 0
    %392 = vmatprep.subr.bf16.mxu0 0
    %393 = vmatpush1.bf16.msra.mxu0 0
    %394 = vmatprep.subr.bf16.mxu0 0
    %395 = vmatpush1.bf16.msra.mxu0 0
    %396 = vmatprep.subr.bf16.mxu0 0
    %397 = vmatpush1.bf16.msra.mxu0 0
    %398 = vmatprep.subr.bf16.mxu0 0
    %399 = vmatpush1.bf16.msra.mxu0 0
    %400 = vmatprep.subr.bf16.mxu0 0
    %401 = vmatpush1.bf16.msra.mxu0 0
    %402 = vmatprep.subr.bf16.mxu0 0
    %403 = vmatpush1.bf16.msra.mxu0 0
    %404 = vmatprep.subr.bf16.mxu0 0
    %405 = vmatpush1.bf16.msra.mxu0 0
    %406 = vmatprep.subr.bf16.mxu0 0
    %407 = vmatpush1.bf16.msra.mxu0 0
    %408 = vmatprep.subr.bf16.mxu0 0
    %409 = vmatpush1.bf16.msra.mxu0 0
    %410 = vmatprep.mubr.bf16.mxu0 0
    %411 = vmatmul.mubr.bf16.gmra.mrb[0].mxu0 %v373
    %v412 = vpop.f32.mrb[0].mxu0
    %v413 = vadd.f32 0.0, %v412
    %v414 = vpop.f32.mrb[0].mxu0
    %v415 = vpop.f32.mrb[0].mxu0
    %v416 = vpop.f32.mrb[0].mxu0
    %417 = vdwg.mxu0
    %418 = vrot.lane.b32.xlu0 %v194, 112
    %v419 = vpop.permute.xlu0 %418
    %420 = vrot.lane.b32.xlu0 %v195, 80
    %v421 = vpop.permute.xlu0 %420
    %v423 = vsel %vm199, %v419, 0
    %v426 = vsel %vm199, %v421, 0
    %428 = vmatprep.subr.bf16.mxu0 0
    %429 = vmatpush1.bf16.xpose.msra.mxu0 %v426
    %430 = vmatprep.subr.bf16.mxu0 0
    %431 = vmatpush1.bf16.xpose.msra.mxu0 0
    %432 = vmatprep.subr.bf16.mxu0 0
    %433 = vmatpush1.bf16.xpose.msra.mxu0 0
    %434 = vmatprep.subr.bf16.mxu0 0
    %435 = vmatpush1.bf16.xpose.msra.mxu0 0
    %436 = vmatprep.subr.bf16.mxu0 0
    %437 = vmatpush1.bf16.xpose.msra.mxu0 0
    %438 = vmatprep.subr.bf16.mxu0 0
    %439 = vmatpush1.bf16.xpose.msra.mxu0 0
    %440 = vmatprep.subr.bf16.mxu0 0
    %441 = vmatpush1.bf16.xpose.msra.mxu0 0
    %442 = vmatprep.subr.bf16.mxu0 0
    %443 = vmatpush1.bf16.xpose.msra.mxu0 0
    %444 = vmatprep.subr.bf16.mxu0 0
    %445 = vmatpush1.bf16.xpose.msra.mxu0 0
    %446 = vmatprep.subr.bf16.mxu0 0
    %447 = vmatpush1.bf16.xpose.msra.mxu0 0
    %448 = vmatprep.subr.bf16.mxu0 0
    %449 = vmatpush1.bf16.xpose.msra.mxu0 0
    %450 = vmatprep.subr.bf16.mxu0 0
    %451 = vmatpush1.bf16.xpose.msra.mxu0 0
    %452 = vmatprep.subr.bf16.mxu0 0
    %453 = vmatpush1.bf16.xpose.msra.mxu0 0
    %454 = vmatprep.subr.bf16.mxu0 0
    %455 = vmatpush1.bf16.xpose.msra.mxu0 0
    %456 = vmatprep.subr.bf16.mxu0 0
    %457 = vmatpush1.bf16.xpose.msra.mxu0 0
    %458 = vmatprep.subr.bf16.mxu0 0
    %459 = vmatpush1.bf16.xpose.msra.mxu0 0
    %460 = vmatprep.mubr.bf16.mxu0 0
    %461 = vmatmul.mubr.bf16.gmra.mrb[0].mxu0 %v423
    %v462 = vpop.f32.mrb[0].mxu0
    %v463 = vadd.f32 %v119, %v462
    %v464 = vpop.f32.mrb[0].mxu0
    %v465 = vpop.f32.mrb[0].mxu0
    %v466 = vpop.f32.mrb[0].mxu0
    %467 = vdwg.mxu0
    %v468 = vsel %vm199, %v463, -inf
    %469 = vmax.xlane.f32.xlu0 %v468
    %v470 = vpop.xlane.xlu0 %469
    %v471 = vsub.f32 %v463, %v470
    %v472 = vmul.f32 %v471, 1.442695
    %v473 = vpow.pop %v472
    %v474 = vsel %vm199, %v473, 0.0
    %475 = vadd.xlane.f32.xlu0 %v474
    %v476 = vpop.xlane.xlu0 %475
    %v477 = vrcp.pop %v476
    %v478 = vmul.f32 %v473, %v477
    %v479 = vpack.c.bf16 %v478, %v478
    %480 = vrot.lane.b32.xlu0 %v195, 48
    %v481 = vpop.permute.xlu0 %480
    %v483 = vsel %vm199, %v479, 0
    %v486 = vsel %vm263, %v481, 0
    %488 = vmatprep.subr.bf16.mxu0 0
    %489 = vmatpush1.bf16.msra.mxu0 %v486
    %490 = vmatprep.subr.bf16.mxu0 0
    %491 = vmatpush1.bf16.msra.mxu0 0
    %492 = vmatprep.subr.bf16.mxu0 0
    %493 = vmatpush1.bf16.msra.mxu0 0
    %494 = vmatprep.subr.bf16.mxu0 0
    %495 = vmatpush1.bf16.msra.mxu0 0
    %496 = vmatprep.subr.bf16.mxu0 0
    %497 = vmatpush1.bf16.msra.mxu0 0
    %498 = vmatprep.subr.bf16.mxu0 0
    %499 = vmatpush1.bf16.msra.mxu0 0
    %500 = vmatprep.subr.bf16.mxu0 0
    %501 = vmatpush1.bf16.msra.mxu0 0
    %502 = vmatprep.subr.bf16.mxu0 0
    %503 = vmatpush1.bf16.msra.mxu0 0
    %504 = vmatprep.subr.bf16.mxu0 0
    %505 = vmatpush1.bf16.msra.mxu0 0
    %506 = vmatprep.subr.bf16.mxu0 0
    %507 = vmatpush1.bf16.msra.mxu0 0
    %508 = vmatprep.subr.bf16.mxu0 0
    %509 = vmatpush1.bf16.msra.mxu0 0
    %510 = vmatprep.subr.bf16.mxu0 0
    %511 = vmatpush1.bf16.msra.mxu0 0
    %512 = vmatprep.subr.bf16.mxu0 0
    %513 = vmatpush1.bf16.msra.mxu0 0
    %514 = vmatprep.subr.bf16.mxu0 0
    %515 = vmatpush1.bf16.msra.mxu0 0
    %516 = vmatprep.subr.bf16.mxu0 0
    %517 = vmatpush1.bf16.msra.mxu0 0
    %518 = vmatprep.subr.bf16.mxu0 0
    %519 = vmatpush1.bf16.msra.mxu0 0
    %520 = vmatprep.mubr.bf16.mxu0 0
    %521 = vmatmul.mubr.bf16.gmra.mrb[0].mxu0 %v483
    %v522 = vpop.f32.mrb[0].mxu0
    %v523 = vadd.f32 0.0, %v522
    %v524 = vpop.f32.mrb[0].mxu0
    %v525 = vpop.f32.mrb[0].mxu0
    %v526 = vpop.f32.mrb[0].mxu0
    %527 = vdwg.mxu0
    %528 = vrot.lane.b32.xlu0 %v194, 104
    %v529 = vpop.permute.xlu0 %528
    %530 = vrot.lane.b32.xlu0 %v195, 72
    %v531 = vpop.permute.xlu0 %530
    %v533 = vsel %vm199, %v529, 0
    %v536 = vsel %vm199, %v531, 0
    %538 = vmatprep.subr.bf16.mxu0 0
    %539 = vmatpush1.bf16.xpose.msra.mxu0 %v536
    %540 = vmatprep.subr.bf16.mxu0 0
    %541 = vmatpush1.bf16.xpose.msra.mxu0 0
    %542 = vmatprep.subr.bf16.mxu0 0
    %543 = vmatpush1.bf16.xpose.msra.mxu0 0
    %544 = vmatprep.subr.bf16.mxu0 0
    %545 = vmatpush1.bf16.xpose.msra.mxu0 0
    %546 = vmatprep.subr.bf16.mxu0 0
    %547 = vmatpush1.bf16.xpose.msra.mxu0 0
    %548 = vmatprep.subr.bf16.mxu0 0
    %549 = vmatpush1.bf16.xpose.msra.mxu0 0
    %550 = vmatprep.subr.bf16.mxu0 0
    %551 = vmatpush1.bf16.xpose.msra.mxu0 0
    %552 = vmatprep.subr.bf16.mxu0 0
    %553 = vmatpush1.bf16.xpose.msra.mxu0 0
    %554 = vmatprep.subr.bf16.mxu0 0
    %555 = vmatpush1.bf16.xpose.msra.mxu0 0
    %556 = vmatprep.subr.bf16.mxu0 0
    %557 = vmatpush1.bf16.xpose.msra.mxu0 0
    %558 = vmatprep.subr.bf16.mxu0 0
    %559 = vmatpush1.bf16.xpose.msra.mxu0 0
    %560 = vmatprep.subr.bf16.mxu0 0
    %561 = vmatpush1.bf16.xpose.msra.mxu0 0
    %562 = vmatprep.subr.bf16.mxu0 0
    %563 = vmatpush1.bf16.xpose.msra.mxu0 0
    %564 = vmatprep.subr.bf16.mxu0 0
    %565 = vmatpush1.bf16.xpose.msra.mxu0 0
    %566 = vmatprep.subr.bf16.mxu0 0
    %567 = vmatpush1.bf16.xpose.msra.mxu0 0
    %568 = vmatprep.subr.bf16.mxu0 0
    %569 = vmatpush1.bf16.xpose.msra.mxu0 0
    %570 = vmatprep.mubr.bf16.mxu0 0
    %571 = vmatmul.mubr.bf16.gmra.mrb[0].mxu0 %v533
    %v572 = vpop.f32.mrb[0].mxu0
    %v573 = vadd.f32 %v119, %v572
    %v574 = vpop.f32.mrb[0].mxu0
    %v575 = vpop.f32.mrb[0].mxu0
    %v576 = vpop.f32.mrb[0].mxu0
    %577 = vdwg.mxu0
    %v578 = vsel %vm199, %v573, -inf
    %579 = vmax.xlane.f32.xlu0 %v578
    %v580 = vpop.xlane.xlu0 %579
    %v581 = vsub.f32 %v573, %v580
    %v582 = vmul.f32 %v581, 1.442695
    %v583 = vpow.pop %v582
    %v584 = vsel %vm199, %v583, 0.0
    %585 = vadd.xlane.f32.xlu0 %v584
    %v586 = vpop.xlane.xlu0 %585
    %v587 = vrcp.pop %v586
    %v588 = vmul.f32 %v583, %v587
    %v589 = vpack.c.bf16 %v588, %v588
    %590 = vrot.lane.b32.xlu0 %v195, 40
    %v591 = vpop.permute.xlu0 %590
    %v593 = vsel %vm199, %v589, 0
    %v596 = vsel %vm263, %v591, 0
    %598 = vmatprep.subr.bf16.mxu0 0
    %599 = vmatpush1.bf16.msra.mxu0 %v596
    %600 = vmatprep.subr.bf16.mxu0 0
    %601 = vmatpush1.bf16.msra.mxu0 0
    %602 = vmatprep.subr.bf16.mxu0 0
    %603 = vmatpush1.bf16.msra.mxu0 0
    %604 = vmatprep.subr.bf16.mxu0 0
    %605 = vmatpush1.bf16.msra.mxu0 0
    %606 = vmatprep.subr.bf16.mxu0 0
    %607 = vmatpush1.bf16.msra.mxu0 0
    %608 = vmatprep.subr.bf16.mxu0 0
    %609 = vmatpush1.bf16.msra.mxu0 0
    %610 = vmatprep.subr.bf16.mxu0 0
    %611 = vmatpush1.bf16.msra.mxu0 0
    %612 = vmatprep.subr.bf16.mxu0 0
    %613 = vmatpush1.bf16.msra.mxu0 0
    %614 = vmatprep.subr.bf16.mxu0 0
    %615 = vmatpush1.bf16.msra.mxu0 0
    %616 = vmatprep.subr.bf16.mxu0 0
    %617 = vmatpush1.bf16.msra.mxu0 0
    %618 = vmatprep.subr.bf16.mxu0 0
    %619 = vmatpush1.bf16.msra.mxu0 0
    %620 = vmatprep.subr.bf16.mxu0 0
    %621 = vmatpush1.bf16.msra.mxu0 0
    %622 = vmatprep.subr.bf16.mxu0 0
    %623 = vmatpush1.bf16.msra.mxu0 0
    %624 = vmatprep.subr.bf16.mxu0 0
    %625 = vmatpush1.bf16.msra.mxu0 0
    %626 = vmatprep.subr.bf16.mxu0 0
    %627 = vmatpush1.bf16.msra.mxu0 0
    %628 = vmatprep.subr.bf16.mxu0 0
    %629 = vmatpush1.bf16.msra.mxu0 0
    %630 = vmatprep.mubr.bf16.mxu0 0
    %631 = vmatmul.mubr.bf16.gmra.mrb[0].mxu0 %v593
    %v632 = vpop.f32.mrb[0].mxu0
    %v633 = vadd.f32 0.0, %v632
    %v634 = vpop.f32.mrb[0].mxu0
    %v635 = vpop.f32.mrb[0].mxu0
    %v636 = vpop.f32.mrb[0].mxu0
    %637 = vdwg.mxu0
    %639 = vrot.lane.b32.xlu0 %v413, 8
    %v640 = vpop.permute.xlu0 %639
    %643 = vrot.lane.b32.xlu0 %v523, 16
    %v644 = vpop.permute.xlu0 %643
    %647 = vrot.lane.b32.xlu0 %v633, 24
    %v648 = vpop.permute.xlu0 %647
    %v650 = vsel %vm199, %v302, %v640
    %vm651 = vcmask 130048
    %v652 = vsel %vm651, %v650, %v644
    %vm653 = vcmask 195584
    %v654 = vsel %vm653, %v652, %v648
    %v655 = vmul.f32 %v190, 0.35355338
    %v656 = vpack.c.bf16 %v655, %v655
    %v657 = vpack.c.bf16 %v190, %v190
    %659 = vrot.lane.b32.xlu0 %v657, 96
    %v660 = vpop.permute.xlu0 %659
    %v662 = vsel %vm199, %v656, 0
    %v665 = vsel %vm199, %v660, 0
    %667 = vmatprep.subr.bf16.mxu0 0
    %668 = vmatpush1.bf16.xpose.msra.mxu0 %v665
    %669 = vmatprep.subr.bf16.mxu0 0
    %670 = vmatpush1.bf16.xpose.msra.mxu0 0
    %671 = vmatprep.subr.bf16.mxu0 0
    %672 = vmatpush1.bf16.xpose.msra.mxu0 0
    %673 = vmatprep.subr.bf16.mxu0 0
    %674 = vmatpush1.bf16.xpose.msra.mxu0 0
    %675 = vmatprep.subr.bf16.mxu0 0
    %676 = vmatpush1.bf16.xpose.msra.mxu0 0
    %677 = vmatprep.subr.bf16.mxu0 0
    %678 = vmatpush1.bf16.xpose.msra.mxu0 0
    %679 = vmatprep.subr.bf16.mxu0 0
    %680 = vmatpush1.bf16.xpose.msra.mxu0 0
    %681 = vmatprep.subr.bf16.mxu0 0
    %682 = vmatpush1.bf16.xpose.msra.mxu0 0
    %683 = vmatprep.subr.bf16.mxu0 0
    %684 = vmatpush1.bf16.xpose.msra.mxu0 0
    %685 = vmatprep.subr.bf16.mxu0 0
    %686 = vmatpush1.bf16.xpose.msra.mxu0 0
    %687 = vmatprep.subr.bf16.mxu0 0
    %688 = vmatpush1.bf16.xpose.msra.mxu0 0
    %689 = vmatprep.subr.bf16.mxu0 0
    %690 = vmatpush1.bf16.xpose.msra.mxu0 0
    %691 = vmatprep.subr.bf16.mxu0 0
    %692 = vmatpush1.bf16.xpose.msra.mxu0 0
    %693 = vmatprep.subr.bf16.mxu0 0
    %694 = vmatpush1.bf16.xpose.msra.mxu0 0
    %695 = vmatprep.subr.bf16.mxu0 0
    %696 = vmatpush1.bf16.xpose.msra.mxu0 0
    %697 = vmatprep.subr.bf16.mxu0 0
    %698 = vmatpush1.bf16.xpose.msra.mxu0 0
    %699 = vmatprep.mubr.bf16.mxu0 0
    %700 = vmatmul.mubr.bf16.gmra.mrb[0].mxu0 %v662
    %v701 = vpop.f32.mrb[0].mxu0
    %v702 = vadd.f32 %v124, %v701
    %v703 = vpop.f32.mrb[0].mxu0
    %v704 = vpop.f32.mrb[0].mxu0
    %v705 = vpop.f32.mrb[0].mxu0
    %706 = vdwg.mxu0
    %v707 = vsel %vm199, %v702, -inf
    %708 = vmax.xlane.f32.xlu0 %v707
    %v709 = vpop.xlane.xlu0 %708
    %v710 = vsub.f32 %v702, %v709
    %v711 = vmul.f32 %v710, 1.442695
    %v712 = vpow.pop %v711
    %v713 = vsel %vm199, %v712, 0.0
    %714 = vadd.xlane.f32.xlu0 %v713
    %v715 = vpop.xlane.xlu0 %714
    %v716 = vrcp.pop %v715
    %v717 = vmul.f32 %v712, %v716
    %v718 = vpack.c.bf16 %v717, %v717
    %719 = vrot.lane.b32.xlu0 %v657, 64
    %v720 = vpop.permute.xlu0 %719
    %v722 = vsel %vm199, %v718, 0
    %v725 = vsel %vm263, %v720, 0
    %727 = vmatprep.subr.bf16.mxu0 0
    %728 = vmatpush1.bf16.msra.mxu0 %v725
    %729 = vmatprep.subr.bf16.mxu0 0
    %730 = vmatpush1.bf16.msra.mxu0 0
    %731 = vmatprep.subr.bf16.mxu0 0
    %732 = vmatpush1.bf16.msra.mxu0 0
    %733 = vmatprep.subr.bf16.mxu0 0
    %734 = vmatpush1.bf16.msra.mxu0 0
    %735 = vmatprep.subr.bf16.mxu0 0
    %736 = vmatpush1.bf16.msra.mxu0 0
    %737 = vmatprep.subr.bf16.mxu0 0
    %738 = vmatpush1.bf16.msra.mxu0 0
    %739 = vmatprep.subr.bf16.mxu0 0
    %740 = vmatpush1.bf16.msra.mxu0 0
    %741 = vmatprep.subr.bf16.mxu0 0
    %742 = vmatpush1.bf16.msra.mxu0 0
    %743 = vmatprep.subr.bf16.mxu0 0
    %744 = vmatpush1.bf16.msra.mxu0 0
    %745 = vmatprep.subr.bf16.mxu0 0
    %746 = vmatpush1.bf16.msra.mxu0 0
    %747 = vmatprep.subr.bf16.mxu0 0
    %748 = vmatpush1.bf16.msra.mxu0 0
    %749 = vmatprep.subr.bf16.mxu0 0
    %750 = vmatpush1.bf16.msra.mxu0 0
    %751 = vmatprep.subr.bf16.mxu0 0
    %752 = vmatpush1.bf16.msra.mxu0 0
    %753 = vmatprep.subr.bf16.mxu0 0
    %754 = vmatpush1.bf16.msra.mxu0 0
    %755 = vmatprep.subr.bf16.mxu0 0
    %756 = vmatpush1.bf16.msra.mxu0 0
    %757 = vmatprep.subr.bf16.mxu0 0
    %758 = vmatpush1.bf16.msra.mxu0 0
    %759 = vmatprep.mubr.bf16.mxu0 0
    %760 = vmatmul.mubr.bf16.gmra.mrb[0].mxu0 %v722
    %v761 = vpop.f32.mrb[0].mxu0
    %v762 = vadd.f32 0.0, %v761
    %v763 = vpop.f32.mrb[0].mxu0
    %v764 = vpop.f32.mrb[0].mxu0
    %v765 = vpop.f32.mrb[0].mxu0
    %766 = vdwg.mxu0
    %768 = vrot.lane.b32.xlu0 %v656, 120
    %v769 = vpop.permute.xlu0 %768
    %770 = vrot.lane.b32.xlu0 %v657, 88
    %v771 = vpop.permute.xlu0 %770
    %v773 = vsel %vm199, %v769, 0
    %v776 = vsel %vm199, %v771, 0
    %778 = vmatprep.subr.bf16.mxu0 0
    %779 = vmatpush1.bf16.xpose.msra.mxu0 %v776
    %780 = vmatprep.subr.bf16.mxu0 0
    %781 = vmatpush1.bf16.xpose.msra.mxu0 0
    %782 = vmatprep.subr.bf16.mxu0 0
    %783 = vmatpush1.bf16.xpose.msra.mxu0 0
    %784 = vmatprep.subr.bf16.mxu0 0
    %785 = vmatpush1.bf16.xpose.msra.mxu0 0
    %786 = vmatprep.subr.bf16.mxu0 0
    %787 = vmatpush1.bf16.xpose.msra.mxu0 0
    %788 = vmatprep.subr.bf16.mxu0 0
    %789 = vmatpush1.bf16.xpose.msra.mxu0 0
    %790 = vmatprep.subr.bf16.mxu0 0
    %791 = vmatpush1.bf16.xpose.msra.mxu0 0
    %792 = vmatprep.subr.bf16.mxu0 0
    %793 = vmatpush1.bf16.xpose.msra.mxu0 0
    %794 = vmatprep.subr.bf16.mxu0 0
    %795 = vmatpush1.bf16.xpose.msra.mxu0 0
    %796 = vmatprep.subr.bf16.mxu0 0
    %797 = vmatpush1.bf16.xpose.msra.mxu0 0
    %798 = vmatprep.subr.bf16.mxu0 0
    %799 = vmatpush1.bf16.xpose.msra.mxu0 0
    %800 = vmatprep.subr.bf16.mxu0 0
    %801 = vmatpush1.bf16.xpose.msra.mxu0 0
    %802 = vmatprep.subr.bf16.mxu0 0
    %803 = vmatpush1.bf16.xpose.msra.mxu0 0
    %804 = vmatprep.subr.bf16.mxu0 0
    %805 = vmatpush1.bf16.xpose.msra.mxu0 0
    %806 = vmatprep.subr.bf16.mxu0 0
    %807 = vmatpush1.bf16.xpose.msra.mxu0 0
    %808 = vmatprep.subr.bf16.mxu0 0
    %809 = vmatpush1.bf16.xpose.msra.mxu0 0
    %810 = vmatprep.mubr.bf16.mxu0 0
    %811 = vmatmul.mubr.bf16.gmra.mrb[0].mxu0 %v773
    %v812 = vpop.f32.mrb[0].mxu0
    %v813 = vadd.f32 %v124, %v812
    %v814 = vpop.f32.mrb[0].mxu0
    %v815 = vpop.f32.mrb[0].mxu0
    %v816 = vpop.f32.mrb[0].mxu0
    %817 = vdwg.mxu0
    %v818 = vsel %vm199, %v813, -inf
    %819 = vmax.xlane.f32.xlu0 %v818
    %v820 = vpop.xlane.xlu0 %819
    %v821 = vsub.f32 %v813, %v820
    %v822 = vmul.f32 %v821, 1.442695
    %v823 = vpow.pop %v822
    %v824 = vsel %vm199, %v823, 0.0
    %825 = vadd.xlane.f32.xlu0 %v824
    %v826 = vpop.xlane.xlu0 %825
    %v827 = vrcp.pop %v826
    %v828 = vmul.f32 %v823, %v827
    %v829 = vpack.c.bf16 %v828, %v828
    %830 = vrot.lane.b32.xlu0 %v657, 56
    %v831 = vpop.permute.xlu0 %830
    %v833 = vsel %vm199, %v829, 0
    %v836 = vsel %vm263, %v831, 0
    %838 = vmatprep.subr.bf16.mxu0 0
    %839 = vmatpush1.bf16.msra.mxu0 %v836
    %840 = vmatprep.subr.bf16.mxu0 0
    %841 = vmatpush1.bf16.msra.mxu0 0
    %842 = vmatprep.subr.bf16.mxu0 0
    %843 = vmatpush1.bf16.msra.mxu0 0
    %844 = vmatprep.subr.bf16.mxu0 0
    %845 = vmatpush1.bf16.msra.mxu0 0
    %846 = vmatprep.subr.bf16.mxu0 0
    %847 = vmatpush1.bf16.msra.mxu0 0
    %848 = vmatprep.subr.bf16.mxu0 0
    %849 = vmatpush1.bf16.msra.mxu0 0
    %850 = vmatprep.subr.bf16.mxu0 0
    %851 = vmatpush1.bf16.msra.mxu0 0
    %852 = vmatprep.subr.bf16.mxu0 0
    %853 = vmatpush1.bf16.msra.mxu0 0
    %854 = vmatprep.subr.bf16.mxu0 0
    %855 = vmatpush1.bf16.msra.mxu0 0
    %856 = vmatprep.subr.bf16.mxu0 0
    %857 = vmatpush1.bf16.msra.mxu0 0
    %858 = vmatprep.subr.bf16.mxu0 0
    %859 = vmatpush1.bf16.msra.mxu0 0
    %860 = vmatprep.subr.bf16.mxu0 0
    %861 = vmatpush1.bf16.msra.mxu0 0
    %862 = vmatprep.subr.bf16.mxu0 0
    %863 = vmatpush1.bf16.msra.mxu0 0
    %864 = vmatprep.subr.bf16.mxu0 0
    %865 = vmatpush1.bf16.msra.mxu0 0
    %866 = vmatprep.subr.bf16.mxu0 0
    %867 = vmatpush1.bf16.msra.mxu0 0
    %868 = vmatprep.subr.bf16.mxu0 0
    %869 = vmatpush1.bf16.msra.mxu0 0
    %870 = vmatprep.mubr.bf16.mxu0 0
    %871 = vmatmul.mubr.bf16.gmra.mrb[0].mxu0 %v833
    %v872 = vpop.f32.mrb[0].mxu0
    %v873 = vadd.f32 0.0, %v872
    %v874 = vpop.f32.mrb[0].mxu0
    %v875 = vpop.f32.mrb[0].mxu0
    %v876 = vpop.f32.mrb[0].mxu0
    %877 = vdwg.mxu0
    %878 = vrot.lane.b32.xlu0 %v656, 112
    %v879 = vpop.permute.xlu0 %878
    %880 = vrot.lane.b32.xlu0 %v657, 80
    %v881 = vpop.permute.xlu0 %880
    %v883 = vsel %vm199, %v879, 0
    %v886 = vsel %vm199, %v881, 0
    %888 = vmatprep.subr.bf16.mxu0 0
    %889 = vmatpush1.bf16.xpose.msra.mxu0 %v886
    %890 = vmatprep.subr.bf16.mxu0 0
    %891 = vmatpush1.bf16.xpose.msra.mxu0 0
    %892 = vmatprep.subr.bf16.mxu0 0
    %893 = vmatpush1.bf16.xpose.msra.mxu0 0
    %894 = vmatprep.subr.bf16.mxu0 0
    %895 = vmatpush1.bf16.xpose.msra.mxu0 0
    %896 = vmatprep.subr.bf16.mxu0 0
    %897 = vmatpush1.bf16.xpose.msra.mxu0 0
    %898 = vmatprep.subr.bf16.mxu0 0
    %899 = vmatpush1.bf16.xpose.msra.mxu0 0
    %900 = vmatprep.subr.bf16.mxu0 0
    %901 = vmatpush1.bf16.xpose.msra.mxu0 0
    %902 = vmatprep.subr.bf16.mxu0 0
    %903 = vmatpush1.bf16.xpose.msra.mxu0 0
    %904 = vmatprep.subr.bf16.mxu0 0
    %905 = vmatpush1.bf16.xpose.msra.mxu0 0
    %906 = vmatprep.subr.bf16.mxu0 0
    %907 = vmatpush1.bf16.xpose.msra.mxu0 0
    %908 = vmatprep.subr.bf16.mxu0 0
    %909 = vmatpush1.bf16.xpose.msra.mxu0 0
    %910 = vmatprep.subr.bf16.mxu0 0
    %911 = vmatpush1.bf16.xpose.msra.mxu0 0
    %912 = vmatprep.subr.bf16.mxu0 0
    %913 = vmatpush1.bf16.xpose.msra.mxu0 0
    %914 = vmatprep.subr.bf16.mxu0 0
    %915 = vmatpush1.bf16.xpose.msra.mxu0 0
    %916 = vmatprep.subr.bf16.mxu0 0
    %917 = vmatpush1.bf16.xpose.msra.mxu0 0
    %918 = vmatprep.subr.bf16.mxu0 0
    %919 = vmatpush1.bf16.xpose.msra.mxu0 0
    %920 = vmatprep.mubr.bf16.mxu0 0
    %921 = vmatmul.mubr.bf16.gmra.mrb[0].mxu0 %v883
    %v922 = vpop.f32.mrb[0].mxu0
    %v923 = vadd.f32 %v124, %v922
    %v924 = vpop.f32.mrb[0].mxu0
    %v925 = vpop.f32.mrb[0].mxu0
    %v926 = vpop.f32.mrb[0].mxu0
    %927 = vdwg.mxu0
    %v928 = vsel %vm199, %v923, -inf
    %929 = vmax.xlane.f32.xlu0 %v928
    %v930 = vpop.xlane.xlu0 %929
    %v931 = vsub.f32 %v923, %v930
    %v932 = vmul.f32 %v931, 1.442695
    %v933 = vpow.pop %v932
    %v934 = vsel %vm199, %v933, 0.0
    %935 = vadd.xlane.f32.xlu0 %v934
    %v936 = vpop.xlane.xlu0 %935
    %v937 = vrcp.pop %v936
    %v938 = vmul.f32 %v933, %v937
    %v939 = vpack.c.bf16 %v938, %v938
    %940 = vrot.lane.b32.xlu0 %v657, 48
    %v941 = vpop.permute.xlu0 %940
    %v943 = vsel %vm199, %v939, 0
    %v946 = vsel %vm263, %v941, 0
    %948 = vmatprep.subr.bf16.mxu0 0
    %949 = vmatpush1.bf16.msra.mxu0 %v946
    %950 = vmatprep.subr.bf16.mxu0 0
    %951 = vmatpush1.bf16.msra.mxu0 0
    %952 = vmatprep.subr.bf16.mxu0 0
    %953 = vmatpush1.bf16.msra.mxu0 0
    %954 = vmatprep.subr.bf16.mxu0 0
    %955 = vmatpush1.bf16.msra.mxu0 0
    %956 = vmatprep.subr.bf16.mxu0 0
    %957 = vmatpush1.bf16.msra.mxu0 0
    %958 = vmatprep.subr.bf16.mxu0 0
    %959 = vmatpush1.bf16.msra.mxu0 0
    %960 = vmatprep.subr.bf16.mxu0 0
    %961 = vmatpush1.bf16.msra.mxu0 0
    %962 = vmatprep.subr.bf16.mxu0 0
    %963 = vmatpush1.bf16.msra.mxu0 0
    %964 = vmatprep.subr.bf16.mxu0 0
    %965 = vmatpush1.bf16.msra.mxu0 0
    %966 = vmatprep.subr.bf16.mxu0 0
    %967 = vmatpush1.bf16.msra.mxu0 0
    %968 = vmatprep.subr.bf16.mxu0 0
    %969 = vmatpush1.bf16.msra.mxu0 0
    %970 = vmatprep.subr.bf16.mxu0 0
    %971 = vmatpush1.bf16.msra.mxu0 0
    %972 = vmatprep.subr.bf16.mxu0 0
    %973 = vmatpush1.bf16.msra.mxu0 0
    %974 = vmatprep.subr.bf16.mxu0 0
    %975 = vmatpush1.bf16.msra.mxu0 0
    %976 = vmatprep.subr.bf16.mxu0 0
    %977 = vmatpush1.bf16.msra.mxu0 0
    %978 = vmatprep.subr.bf16.mxu0 0
    %979 = vmatpush1.bf16.msra.mxu0 0
    %980 = vmatprep.mubr.bf16.mxu0 0
    %981 = vmatmul.mubr.bf16.gmra.mrb[0].mxu0 %v943
    %v982 = vpop.f32.mrb[0].mxu0
    %v983 = vadd.f32 0.0, %v982
    %v984 = vpop.f32.mrb[0].mxu0
    %v985 = vpop.f32.mrb[0].mxu0
    %v986 = vpop.f32.mrb[0].mxu0
    %987 = vdwg.mxu0
    %988 = vrot.lane.b32.xlu0 %v656, 104
    %v989 = vpop.permute.xlu0 %988
    %990 = vrot.lane.b32.xlu0 %v657, 72
    %v991 = vpop.permute.xlu0 %990
    %v993 = vsel %vm199, %v989, 0
    %v996 = vsel %vm199, %v991, 0
    %998 = vmatprep.subr.bf16.mxu0 0
    %999 = vmatpush1.bf16.xpose.msra.mxu0 %v996
    %1000 = vmatprep.subr.bf16.mxu0 0
    %1001 = vmatpush1.bf16.xpose.msra.mxu0 0
    %1002 = vmatprep.subr.bf16.mxu0 0
    %1003 = vmatpush1.bf16.xpose.msra.mxu0 0
    %1004 = vmatprep.subr.bf16.mxu0 0
    %1005 = vmatpush1.bf16.xpose.msra.mxu0 0
    %1006 = vmatprep.subr.bf16.mxu0 0
    %1007 = vmatpush1.bf16.xpose.msra.mxu0 0
    %1008 = vmatprep.subr.bf16.mxu0 0
    %1009 = vmatpush1.bf16.xpose.msra.mxu0 0
    %1010 = vmatprep.subr.bf16.mxu0 0
    %1011 = vmatpush1.bf16.xpose.msra.mxu0 0
    %1012 = vmatprep.subr.bf16.mxu0 0
    %1013 = vmatpush1.bf16.xpose.msra.mxu0 0
    %1014 = vmatprep.subr.bf16.mxu0 0
    %1015 = vmatpush1.bf16.xpose.msra.mxu0 0
    %1016 = vmatprep.subr.bf16.mxu0 0
    %1017 = vmatpush1.bf16.xpose.msra.mxu0 0
    %1018 = vmatprep.subr.bf16.mxu0 0
    %1019 = vmatpush1.bf16.xpose.msra.mxu0 0
    %1020 = vmatprep.subr.bf16.mxu0 0
    %1021 = vmatpush1.bf16.xpose.msra.mxu0 0
    %1022 = vmatprep.subr.bf16.mxu0 0
    %1023 = vmatpush1.bf16.xpose.msra.mxu0 0
    %1024 = vmatprep.subr.bf16.mxu0 0
    %1025 = vmatpush1.bf16.xpose.msra.mxu0 0
    %1026 = vmatprep.subr.bf16.mxu0 0
    %1027 = vmatpush1.bf16.xpose.msra.mxu0 0
    %1028 = vmatprep.subr.bf16.mxu0 0
    %1029 = vmatpush1.bf16.xpose.msra.mxu0 0
    %1030 = vmatprep.mubr.bf16.mxu0 0
    %1031 = vmatmul.mubr.bf16.gmra.mrb[0].mxu0 %v993
    %v1032 = vpop.f32.mrb[0].mxu0
    %v1033 = vadd.f32 %v124, %v1032
    %v1034 = vpop.f32.mrb[0].mxu0
    %v1035 = vpop.f32.mrb[0].mxu0
    %v1036 = vpop.f32.mrb[0].mxu0
    %1037 = vdwg.mxu0
    %v1038 = vsel %vm199, %v1033, -inf
    %1039 = vmax.xlane.f32.xlu0 %v1038
    %v1040 = vpop.xlane.xlu0 %1039
    %v1041 = vsub.f32 %v1033, %v1040
    %v1042 = vmul.f32 %v1041, 1.442695
    %v1043 = vpow.pop %v1042
    %v1044 = vsel %vm199, %v1043, 0.0
    %1045 = vadd.xlane.f32.xlu0 %v1044
    %v1046 = vpop.xlane.xlu0 %1045
    %v1047 = vrcp.pop %v1046
    %v1048 = vmul.f32 %v1043, %v1047
    %v1049 = vpack.c.bf16 %v1048, %v1048
    %1050 = vrot.lane.b32.xlu0 %v657, 40
    %v1051 = vpop.permute.xlu0 %1050
    %v1053 = vsel %vm199, %v1049, 0
    %v1056 = vsel %vm263, %v1051, 0
    %1058 = vmatprep.subr.bf16.mxu0 0
    %1059 = vmatpush1.bf16.msra.mxu0 %v1056
    %1060 = vmatprep.subr.bf16.mxu0 0
    %1061 = vmatpush1.bf16.msra.mxu0 0
    %1062 = vmatprep.subr.bf16.mxu0 0
    %1063 = vmatpush1.bf16.msra.mxu0 0
    %1064 = vmatprep.subr.bf16.mxu0 0
    %1065 = vmatpush1.bf16.msra.mxu0 0
    %1066 = vmatprep.subr.bf16.mxu0 0
    %1067 = vmatpush1.bf16.msra.mxu0 0
    %1068 = vmatprep.subr.bf16.mxu0 0
    %1069 = vmatpush1.bf16.msra.mxu0 0
    %1070 = vmatprep.subr.bf16.mxu0 0
    %1071 = vmatpush1.bf16.msra.mxu0 0
    %1072 = vmatprep.subr.bf16.mxu0 0
    %1073 = vmatpush1.bf16.msra.mxu0 0
    %1074 = vmatprep.subr.bf16.mxu0 0
    %1075 = vmatpush1.bf16.msra.mxu0 0
    %1076 = vmatprep.subr.bf16.mxu0 0
    %1077 = vmatpush1.bf16.msra.mxu0 0
    %1078 = vmatprep.subr.bf16.mxu0 0
    %1079 = vmatpush1.bf16.msra.mxu0 0
    %1080 = vmatprep.subr.bf16.mxu0 0
    %1081 = vmatpush1.bf16.msra.mxu0 0
    %1082 = vmatprep.subr.bf16.mxu0 0
    %1083 = vmatpush1.bf16.msra.mxu0 0
    %1084 = vmatprep.subr.bf16.mxu0 0
    %1085 = vmatpush1.bf16.msra.mxu0 0
    %1086 = vmatprep.subr.bf16.mxu0 0
    %1087 = vmatpush1.bf16.msra.mxu0 0
    %1088 = vmatprep.subr.bf16.mxu0 0
    %1089 = vmatpush1.bf16.msra.mxu0 0
    %1090 = vmatprep.mubr.bf16.mxu0 0
    %1091 = vmatmul.mubr.bf16.gmra.mrb[0].mxu0 %v1053
    %v1092 = vpop.f32.mrb[0].mxu0
    %v1093 = vadd.f32 0.0, %v1092
    %v1094 = vpop.f32.mrb[0].mxu0
    %v1095 = vpop.f32.mrb[0].mxu0
    %v1096 = vpop.f32.mrb[0].mxu0
    %1097 = vdwg.mxu0
    %1099 = vrot.lane.b32.xlu0 %v873, 8
    %v1100 = vpop.permute.xlu0 %1099
    %1103 = vrot.lane.b32.xlu0 %v983, 16
    %v1104 = vpop.permute.xlu0 %1103
    %1107 = vrot.lane.b32.xlu0 %v1093, 24
    %v1108 = vpop.permute.xlu0 %1107
    %v1110 = vsel %vm199, %v762, %v1100
    %v1111 = vsel %vm651, %v1110, %v1104
    %v1112 = vsel %vm653, %v1111, %v1108
    %v1113 = vpack.c.bf16 %v1112, %v654
    %v1114 = vld [vmem:[%s6] sm:$0xf]
    %v1115 = vld [vmem:[%s6 + $0x4] sm:$0xf]
    %v1116 = vld [vmem:[%s6 + $0x8] sm:$0xf]
    %v1117 = vld [vmem:[%s6 + $0xc] sm:$0xf]
    %v1118 = vld [vmem:[%s7] sm:$0x1]
    %v1120 = vlaneseq
    %v1121 = vshrl.u32 %v1120, 7
    %v1122 = vsub.s32 0, %v1121
    %v1123 = vrot.slane %v1118, %v1122
    %v1129 = vunpack.c.l.b16 %v1114
    %v1130 = vunpack.c.l.b16 %v1115
    %v1131 = vunpack.c.l.b16 %v1116
    %v1132 = vunpack.c.l.b16 %v1117
    %v1133 = vpack.c.b16 %v1130, %v1129
    %v1134 = vpack.c.b16 %v1132, %v1131
    %v1138 = vsel %vm71, %v1113, 0
    %1140 = vmatprep.subr.bf16.mxu0 0
    %1141 = vmatpush1.bf16.msra.mxu0 %v1133
    %1142 = vmatprep.subr.bf16.mxu0 0
    %1143 = vmatpush1.bf16.msra.mxu0 %v1134
    %1144 = vmatprep.subr.bf16.mxu0 0
    %1145 = vmatpush1.bf16.msra.mxu0 0
    %1146 = vmatprep.subr.bf16.mxu0 0
    %1147 = vmatpush1.bf16.msra.mxu0 0
    %1148 = vmatprep.subr.bf16.mxu0 0
    %1149 = vmatpush1.bf16.msra.mxu0 0
    %1150 = vmatprep.subr.bf16.mxu0 0
    %1151 = vmatpush1.bf16.msra.mxu0 0
    %1152 = vmatprep.subr.bf16.mxu0 0
    %1153 = vmatpush1.bf16.msra.mxu0 0
    %1154 = vmatprep.subr.bf16.mxu0 0
    %1155 = vmatpush1.bf16.msra.mxu0 0
    %1156 = vmatprep.subr.bf16.mxu0 0
    %1157 = vmatpush1.bf16.msra.mxu0 0
    %1158 = vmatprep.subr.bf16.mxu0 0
    %1159 = vmatpush1.bf16.msra.mxu0 0
    %1160 = vmatprep.subr.bf16.mxu0 0
    %1161 = vmatpush1.bf16.msra.mxu0 0
    %1162 = vmatprep.subr.bf16.mxu0 0
    %1163 = vmatpush1.bf16.msra.mxu0 0
    %1164 = vmatprep.subr.bf16.mxu0 0
    %1165 = vmatpush1.bf16.msra.mxu0 0
    %1166 = vmatprep.subr.bf16.mxu0 0
    %1167 = vmatpush1.bf16.msra.mxu0 0
    %1168 = vmatprep.subr.bf16.mxu0 0
    %1169 = vmatpush1.bf16.msra.mxu0 0
    %1170 = vmatprep.subr.bf16.mxu0 0
    %1171 = vmatpush1.bf16.msra.mxu0 0
    %1172 = vmatprep.mubr.bf16.mxu0 0
    %1173 = vmatmul.mubr.bf16.gmra.mrb[0].mxu0 %v1138
    %v1174 = vpop.f32.mrb[0].mxu0
    %v1175 = vadd.f32 %v1123, %v1174
    %v1176 = vpop.f32.mrb[0].mxu0
    %v1177 = vpop.f32.mrb[0].mxu0
    %v1178 = vadd.f32 %v1123, %v1177
    %v1179 = vpop.f32.mrb[0].mxu0
    %1180 = vdwg.mxu0
    %v1181 = vadd.f32 %v113, %v1175
    %v1182 = vadd.f32 %v114, %v1178
    %v1183 = vld [vmem:[%s8] sm:$0x1]
    %v1184 = vld [vmem:[%s9] sm:$0x1]
    %v1185 = vsel %vm71, %v1181, 0.0
    %1186 = vadd.xlane.f32.xlu0 %v1185
    %v1187 = vpop.xlane.xlu0 %1186
    %v1188 = vsel %vm71, %v1182, 0.0
    %1189 = vadd.xlane.f32.xlu0 %v1188
    %v1190 = vpop.xlane.xlu0 %1189
    %v1191 = vmul.f32 %v1187, %v78
    %v1192 = vmul.f32 %v1190, %v78
    %v1193 = vsub.f32 %v1181, %v1191
    %v1194 = vsub.f32 %v1182, %v1192
    %v1195 = vmul.f32 %v1193, %v1193
    %v1196 = vmul.f32 %v1194, %v1194
    %v1197 = vsel %vm71, %v1195, 0.0
    %1198 = vadd.xlane.f32.xlu0 %v1197
    %v1199 = vpop.xlane.xlu0 %1198
    %v1200 = vsel %vm71, %v1196, 0.0
    %1201 = vadd.xlane.f32.xlu0 %v1200
    %v1202 = vpop.xlane.xlu0 %1201
    %v1203 = vmul.f32 %v1199, %v78
    %v1204 = vmul.f32 %v1202, %v78
    %v1205 = vadd.f32 %v1203, 1e-12
    %v1206 = vadd.f32 %v1204, 1e-12
    %v1207 = vrsqrt.pop %v1205
    %v1208 = vrsqrt.pop %v1206
    %v1209 = vmul.f32 %v1193, %v1207
    %v1210 = vmul.f32 %v1194, %v1208
    %v1212 = vlaneseq
    %v1213 = vshrl.u32 %v1212, 7
    %v1214 = vsub.s32 0, %v1213
    %v1215 = vrot.slane %v1183, %v1214
    %v1217 = vmul.f32 %v1209, %v1215
    %v1218 = vmul.f32 %v1210, %v1215
    %v1220 = vlaneseq
    %v1221 = vshrl.u32 %v1220, 7
    %v1222 = vsub.s32 0, %v1221
    %v1223 = vrot.slane %v1184, %v1222
    %v1225 = vadd.f32 %v1217, %v1223
    %v1226 = vadd.f32 %v1218, %v1223
    %v1227 = vpack.c.bf16 %v1226, %v1225
    %v1228 = vld [vmem:[%s10] sm:$0xf]
    %v1229 = vld [vmem:[%s10 + $0x4] sm:$0xf]
    %v1230 = vld [vmem:[%s10 + $0x8] sm:$0xf]
    %v1231 = vld [vmem:[%s10 + $0xc] sm:$0xf]
    %v1232 = vld [vmem:[%s11] sm:$0x1]
    %v1234 = vlaneseq
    %v1235 = vshrl.u32 %v1234, 7
    %v1236 = vsub.s32 0, %v1235
    %v1237 = vrot.slane %v1232, %v1236
    %v1243 = vunpack.c.l.b16 %v1228
    %v1244 = vunpack.c.l.b16 %v1229
    %v1245 = vunpack.c.l.b16 %v1230
    %v1246 = vunpack.c.l.b16 %v1231
    %v1247 = vpack.c.b16 %v1244, %v1243
    %v1248 = vpack.c.b16 %v1246, %v1245
    %v1252 = vsel %vm71, %v1227, 0
    %1254 = vmatprep.subr.bf16.mxu0 0
    %1255 = vmatpush1.bf16.msra.mxu0 %v1247
    %1256 = vmatprep.subr.bf16.mxu0 0
    %1257 = vmatpush1.bf16.msra.mxu0 %v1248
    %1258 = vmatprep.subr.bf16.mxu0 0
    %1259 = vmatpush1.bf16.msra.mxu0 0
    %1260 = vmatprep.subr.bf16.mxu0 0
    %1261 = vmatpush1.bf16.msra.mxu0 0
    %1262 = vmatprep.subr.bf16.mxu0 0
    %1263 = vmatpush1.bf16.msra.mxu0 0
    %1264 = vmatprep.subr.bf16.mxu0 0
    %1265 = vmatpush1.bf16.msra.mxu0 0
    %1266 = vmatprep.subr.bf16.mxu0 0
    %1267 = vmatpush1.bf16.msra.mxu0 0
    %1268 = vmatprep.subr.bf16.mxu0 0
    %1269 = vmatpush1.bf16.msra.mxu0 0
    %1270 = vmatprep.subr.bf16.mxu0 0
    %1271 = vmatpush1.bf16.msra.mxu0 0
    %1272 = vmatprep.subr.bf16.mxu0 0
    %1273 = vmatpush1.bf16.msra.mxu0 0
    %1274 = vmatprep.subr.bf16.mxu0 0
    %1275 = vmatpush1.bf16.msra.mxu0 0
    %1276 = vmatprep.subr.bf16.mxu0 0
    %1277 = vmatpush1.bf16.msra.mxu0 0
    %1278 = vmatprep.subr.bf16.mxu0 0
    %1279 = vmatpush1.bf16.msra.mxu0 0
    %1280 = vmatprep.subr.bf16.mxu0 0
    %1281 = vmatpush1.bf16.msra.mxu0 0
    %1282 = vmatprep.subr.bf16.mxu0 0
    %1283 = vmatpush1.bf16.msra.mxu0 0
    %1284 = vmatprep.subr.bf16.mxu0 0
    %1285 = vmatpush1.bf16.msra.mxu0 0
    %1286 = vmatprep.mubr.bf16.mxu0 0
    %1287 = vmatmul.mubr.bf16.gmra.mrb[0].mxu0 %v1252
    %v1288 = vpop.f32.mrb[0].mxu0
    %v1289 = vadd.f32 %v1237, %v1288
    %v1290 = vpop.f32.mrb[0].mxu0
    %v1291 = vpop.f32.mrb[0].mxu0
    %v1292 = vadd.f32 %v1237, %v1291
    %v1293 = vpop.f32.mrb[0].mxu0
    %1294 = vdwg.mxu0
    %v1295 = vmul.f32 %v1289, 0.5
    %v1296 = vmul.f32 %v1292, 0.5
    %v1297 = vmul.f32 %v1289, 0.70710677
    %v1298 = vmul.f32 %v1292, 0.70710677
    %v1299 = verf.f32.pop %v1297
    %v1300 = verf.f32.pop %v1298
    %v1301 = vadd.f32 %v1299, 1.0
    %v1302 = vadd.f32 %v1300, 1.0
    %v1303 = vmul.f32 %v1295, %v1301
    %v1304 = vmul.f32 %v1296, %v1302
    %v1305 = vpack.c.bf16 %v1304, %v1303
    %v1306 = vld [vmem:[%s12] sm:$0xf]
    %v1307 = vld [vmem:[%s12 + $0x4] sm:$0xf]
    %v1308 = vld [vmem:[%s12 + $0x8] sm:$0xf]
    %v1309 = vld [vmem:[%s12 + $0xc] sm:$0xf]
    %v1310 = vld [vmem:[%s12 + $0x10] sm:$0xf]
    %v1311 = vld [vmem:[%s12 + $0x14] sm:$0xf]
    %v1312 = vld [vmem:[%s12 + $0x18] sm:$0xf]
    %v1313 = vld [vmem:[%s12 + $0x1c] sm:$0xf]
    %v1314 = vld [vmem:[%s12 + $0x20] sm:$0xf]
    %v1315 = vld [vmem:[%s12 + $0x24] sm:$0xf]
    %v1316 = vld [vmem:[%s12 + $0x28] sm:$0xf]
    %v1317 = vld [vmem:[%s12 + $0x2c] sm:$0xf]
    %v1318 = vld [vmem:[%s12 + $0x30] sm:$0xf]
    %v1319 = vld [vmem:[%s12 + $0x34] sm:$0xf]
    %v1320 = vld [vmem:[%s12 + $0x38] sm:$0xf]
    %v1321 = vld [vmem:[%s12 + $0x3c] sm:$0xf]
    %v1322 = vld [vmem:[%s13] sm:$0x1]
    %v1324 = vlaneseq
    %v1325 = vshrl.u32 %v1324, 7
    %v1326 = vsub.s32 0, %v1325
    %v1327 = vrot.slane %v1322, %v1326
    %v1345 = vunpack.c.l.b16 %v1306
    %v1346 = vunpack.c.l.b16 %v1307
    %v1347 = vunpack.c.l.b16 %v1308
    %v1348 = vunpack.c.l.b16 %v1309
    %v1349 = vunpack.c.l.b16 %v1310
    %v1350 = vunpack.c.l.b16 %v1311
    %v1351 = vunpack.c.l.b16 %v1312
    %v1352 = vunpack.c.l.b16 %v1313
    %v1353 = vunpack.c.l.b16 %v1314
    %v1354 = vunpack.c.l.b16 %v1315
    %v1355 = vunpack.c.l.b16 %v1316
    %v1356 = vunpack.c.l.b16 %v1317
    %v1357 = vunpack.c.l.b16 %v1318
    %v1358 = vunpack.c.l.b16 %v1319
    %v1359 = vunpack.c.l.b16 %v1320
    %v1360 = vunpack.c.l.b16 %v1321
    %v1361 = vpack.c.b16 %v1346, %v1345
    %v1362 = vpack.c.b16 %v1348, %v1347
    %v1363 = vpack.c.b16 %v1350, %v1349
    %v1364 = vpack.c.b16 %v1352, %v1351
    %v1365 = vpack.c.b16 %v1354, %v1353
    %v1366 = vpack.c.b16 %v1356, %v1355
    %v1367 = vpack.c.b16 %v1358, %v1357
    %v1368 = vpack.c.b16 %v1360, %v1359
    %1377 = vmatprep.subr.bf16.mxu0 0
    %1378 = vmatpush1.bf16.msra.mxu0 %v1361
    %1379 = vmatprep.subr.bf16.mxu0 0
    %1380 = vmatpush1.bf16.msra.mxu0 %v1362
    %1381 = vmatprep.subr.bf16.mxu0 0
    %1382 = vmatpush1.bf16.msra.mxu0 %v1363
    %1383 = vmatprep.subr.bf16.mxu0 0
    %1384 = vmatpush1.bf16.msra.mxu0 %v1364
    %1385 = vmatprep.subr.bf16.mxu0 0
    %1386 = vmatpush1.bf16.msra.mxu0 %v1365
    %1387 = vmatprep.subr.bf16.mxu0 0
    %1388 = vmatpush1.bf16.msra.mxu0 %v1366
    %1389 = vmatprep.subr.bf16.mxu0 0
    %1390 = vmatpush1.bf16.msra.mxu0 %v1367
    %1391 = vmatprep.subr.bf16.mxu0 0
    %1392 = vmatpush1.bf16.msra.mxu0 %v1368
    %1393 = vmatprep.subr.bf16.mxu0 0
    %1394 = vmatpush1.bf16.msra.mxu0 0
    %1395 = vmatprep.subr.bf16.mxu0 0
    %1396 = vmatpush1.bf16.msra.mxu0 0
    %1397 = vmatprep.subr.bf16.mxu0 0
    %1398 = vmatpush1.bf16.msra.mxu0 0
    %1399 = vmatprep.subr.bf16.mxu0 0
    %1400 = vmatpush1.bf16.msra.mxu0 0
    %1401 = vmatprep.subr.bf16.mxu0 0
    %1402 = vmatpush1.bf16.msra.mxu0 0
    %1403 = vmatprep.subr.bf16.mxu0 0
    %1404 = vmatpush1.bf16.msra.mxu0 0
    %1405 = vmatprep.subr.bf16.mxu0 0
    %1406 = vmatpush1.bf16.msra.mxu0 0
    %1407 = vmatprep.subr.bf16.mxu0 0
    %1408 = vmatpush1.bf16.msra.mxu0 0
    %1409 = vmatprep.mubr.bf16.mxu0 0
    %1410 = vmatmul.mubr.bf16.gmra.mrb[0].mxu0 %v1305
    %v1411 = vpop.f32.mrb[0].mxu0
    %v1412 = vadd.f32 %v1327, %v1411
    %v1413 = vpop.f32.mrb[0].mxu0
    %v1414 = vpop.f32.mrb[0].mxu0
    %v1415 = vadd.f32 %v1327, %v1414
    %v1416 = vpop.f32.mrb[0].mxu0
    %1417 = vdwg.mxu0
    %v1418 = vadd.f32 %v1225, %v1412
    %v1419 = vadd.f32 %v1226, %v1415
    %v1420 = vld [vmem:[%s14] sm:$0x1]
    %v1421 = vld [vmem:[%s15] sm:$0x1]
    %v1422 = vsel %vm71, %v1418, 0.0
    %1423 = vadd.xlane.f32.xlu0 %v1422
    %v1424 = vpop.xlane.xlu0 %1423
    %v1425 = vsel %vm71, %v1419, 0.0
    %1426 = vadd.xlane.f32.xlu0 %v1425
    %v1427 = vpop.xlane.xlu0 %1426
    %v1428 = vmul.f32 %v1424, %v78
    %v1429 = vmul.f32 %v1427, %v78
    %v1430 = vsub.f32 %v1418, %v1428
    %v1431 = vsub.f32 %v1419, %v1429
    %v1432 = vmul.f32 %v1430, %v1430
    %v1433 = vmul.f32 %v1431, %v1431
    %v1434 = vsel %vm71, %v1432, 0.0
    %1435 = vadd.xlane.f32.xlu0 %v1434
    %v1436 = vpop.xlane.xlu0 %1435
    %v1437 = vsel %vm71, %v1433, 0.0
    %1438 = vadd.xlane.f32.xlu0 %v1437
    %v1439 = vpop.xlane.xlu0 %1438
    %v1440 = vmul.f32 %v1436, %v78
    %v1441 = vmul.f32 %v1439, %v78
    %v1442 = vadd.f32 %v1440, 1e-12
    %v1443 = vadd.f32 %v1441, 1e-12
    %v1444 = vrsqrt.pop %v1442
    %v1445 = vrsqrt.pop %v1443
    %v1446 = vmul.f32 %v1430, %v1444
    %v1447 = vmul.f32 %v1431, %v1445
    %v1449 = vlaneseq
    %v1450 = vshrl.u32 %v1449, 7
    %v1451 = vsub.s32 0, %v1450
    %v1452 = vrot.slane %v1420, %v1451
    %v1454 = vmul.f32 %v1446, %v1452
    %v1455 = vmul.f32 %v1447, %v1452
    %v1457 = vlaneseq
    %v1458 = vshrl.u32 %v1457, 7
    %v1459 = vsub.s32 0, %v1458
    %v1460 = vrot.slane %v1421, %v1459
    %v1462 = vadd.f32 %v1454, %v1460
    %v1463 = vadd.f32 %v1455, %v1460
    %v1464 = vpack.c.bf16 %v1463, %v1462
    %s1465 = scalar_lea.vmem %s4, 16
    %v1466 = vld [vmem:[%s1465] sm:$0xf]
    %v1467 = vld [vmem:[%s1465 + $0x4] sm:$0xf]
    %v1468 = vld [vmem:[%s1465 + $0x8] sm:$0xf]
    %v1469 = vld [vmem:[%s1465 + $0xc] sm:$0xf]
    %s1470 = scalar_lea.vmem %s5, 1
    %v1471 = vld [vmem:[%s1470] sm:$0x1]
    %v1473 = vlaneseq
    %v1474 = vshrl.u32 %v1473, 7
    %v1475 = vsub.s32 0, %v1474
    %v1476 = vrot.slane %v1471, %v1475
    %v1482 = vunpack.c.l.b16 %v1466
    %v1483 = vunpack.c.l.b16 %v1467
    %v1484 = vunpack.c.l.b16 %v1468
    %v1485 = vunpack.c.l.b16 %v1469
    %v1486 = vpack.c.b16 %v1483, %v1482
    %v1487 = vpack.c.b16 %v1485, %v1484
    %v1491 = vsel %vm71, %v1464, 0
    %1493 = vmatprep.subr.bf16.mxu0 0
    %1494 = vmatpush1.bf16.msra.mxu0 %v1486
    %1495 = vmatprep.subr.bf16.mxu0 0
    %1496 = vmatpush1.bf16.msra.mxu0 %v1487
    %1497 = vmatprep.subr.bf16.mxu0 0
    %1498 = vmatpush1.bf16.msra.mxu0 0
    %1499 = vmatprep.subr.bf16.mxu0 0
    %1500 = vmatpush1.bf16.msra.mxu0 0
    %1501 = vmatprep.subr.bf16.mxu0 0
    %1502 = vmatpush1.bf16.msra.mxu0 0
    %1503 = vmatprep.subr.bf16.mxu0 0
    %1504 = vmatpush1.bf16.msra.mxu0 0
    %1505 = vmatprep.subr.bf16.mxu0 0
    %1506 = vmatpush1.bf16.msra.mxu0 0
    %1507 = vmatprep.subr.bf16.mxu0 0
    %1508 = vmatpush1.bf16.msra.mxu0 0
    %1509 = vmatprep.subr.bf16.mxu0 0
    %1510 = vmatpush1.bf16.msra.mxu0 0
    %1511 = vmatprep.subr.bf16.mxu0 0
    %1512 = vmatpush1.bf16.msra.mxu0 0
    %1513 = vmatprep.subr.bf16.mxu0 0
    %1514 = vmatpush1.bf16.msra.mxu0 0
    %1515 = vmatprep.subr.bf16.mxu0 0
    %1516 = vmatpush1.bf16.msra.mxu0 0
    %1517 = vmatprep.subr.bf16.mxu0 0
    %1518 = vmatpush1.bf16.msra.mxu0 0
    %1519 = vmatprep.subr.bf16.mxu0 0
    %1520 = vmatpush1.bf16.msra.mxu0 0
    %1521 = vmatprep.subr.bf16.mxu0 0
    %1522 = vmatpush1.bf16.msra.mxu0 0
    %1523 = vmatprep.subr.bf16.mxu0 0
    %1524 = vmatpush1.bf16.msra.mxu0 0
    %1525 = vmatprep.mubr.bf16.mxu0 0
    %1526 = vmatmul.mubr.bf16.gmra.mrb[0].mxu0 %v1491
    %v1527 = vpop.f32.mrb[0].mxu0
    %v1528 = vadd.f32 %v1476, %v1527
    %v1529 = vpop.f32.mrb[0].mxu0
    %v1530 = vpop.f32.mrb[0].mxu0
    %v1531 = vadd.f32 %v1476, %v1530
    %v1532 = vpop.f32.mrb[0].mxu0
    %1533 = vdwg.mxu0
    %v1534 = vmul.f32 %v1528, 0.35355338
    %v1535 = vpack.c.bf16 %v1534, %v1534
    %v1536 = vpack.c.bf16 %v1528, %v1528
    %1538 = vrot.lane.b32.xlu0 %v1536, 96
    %v1539 = vpop.permute.xlu0 %1538
    %v1541 = vsel %vm199, %v1535, 0
    %v1544 = vsel %vm199, %v1539, 0
    %1546 = vmatprep.subr.bf16.mxu0 0
    %1547 = vmatpush1.bf16.xpose.msra.mxu0 %v1544
    %1548 = vmatprep.subr.bf16.mxu0 0
    %1549 = vmatpush1.bf16.xpose.msra.mxu0 0
    %1550 = vmatprep.subr.bf16.mxu0 0
    %1551 = vmatpush1.bf16.xpose.msra.mxu0 0
    %1552 = vmatprep.subr.bf16.mxu0 0
    %1553 = vmatpush1.bf16.xpose.msra.mxu0 0
    %1554 = vmatprep.subr.bf16.mxu0 0
    %1555 = vmatpush1.bf16.xpose.msra.mxu0 0
    %1556 = vmatprep.subr.bf16.mxu0 0
    %1557 = vmatpush1.bf16.xpose.msra.mxu0 0
    %1558 = vmatprep.subr.bf16.mxu0 0
    %1559 = vmatpush1.bf16.xpose.msra.mxu0 0
    %1560 = vmatprep.subr.bf16.mxu0 0
    %1561 = vmatpush1.bf16.xpose.msra.mxu0 0
    %1562 = vmatprep.subr.bf16.mxu0 0
    %1563 = vmatpush1.bf16.xpose.msra.mxu0 0
    %1564 = vmatprep.subr.bf16.mxu0 0
    %1565 = vmatpush1.bf16.xpose.msra.mxu0 0
    %1566 = vmatprep.subr.bf16.mxu0 0
    %1567 = vmatpush1.bf16.xpose.msra.mxu0 0
    %1568 = vmatprep.subr.bf16.mxu0 0
    %1569 = vmatpush1.bf16.xpose.msra.mxu0 0
    %1570 = vmatprep.subr.bf16.mxu0 0
    %1571 = vmatpush1.bf16.xpose.msra.mxu0 0
    %1572 = vmatprep.subr.bf16.mxu0 0
    %1573 = vmatpush1.bf16.xpose.msra.mxu0 0
    %1574 = vmatprep.subr.bf16.mxu0 0
    %1575 = vmatpush1.bf16.xpose.msra.mxu0 0
    %1576 = vmatprep.subr.bf16.mxu0 0
    %1577 = vmatpush1.bf16.xpose.msra.mxu0 0
    %1578 = vmatprep.mubr.bf16.mxu0 0
    %1579 = vmatmul.mubr.bf16.gmra.mrb[0].mxu0 %v1541
    %v1580 = vpop.f32.mrb[0].mxu0
    %v1581 = vadd.f32 %v119, %v1580
    %v1582 = vpop.f32.mrb[0].mxu0
    %v1583 = vpop.f32.mrb[0].mxu0
    %v1584 = vpop.f32.mrb[0].mxu0
    %1585 = vdwg.mxu0
    %v1586 = vsel %vm199, %v1581, -inf
    %1587 = vmax.xlane.f32.xlu0 %v1586
    %v1588 = vpop.xlane.xlu0 %1587
    %v1589 = vsub.f32 %v1581, %v1588
    %v1590 = vmul.f32 %v1589, 1.442695
    %v1591 = vpow.pop %v1590
    %v1592 = vsel %vm199, %v1591, 0.0
    %1593 = vadd.xlane.f32.xlu0 %v1592
    %v1594 = vpop.xlane.xlu0 %1593
    %v1595 = vrcp.pop %v1594
    %v1596 = vmul.f32 %v1591, %v1595
    %v1597 = vpack.c.bf16 %v1596, %v1596
    %1598 = vrot.lane.b32.xlu0 %v1536, 64
    %v1599 = vpop.permute.xlu0 %1598
    %v1601 = vsel %vm199, %v1597, 0
    %v1604 = vsel %vm263, %v1599, 0
    %1606 = vmatprep.subr.bf16.mxu0 0
    %1607 = vmatpush1.bf16.msra.mxu0 %v1604
    %1608 = vmatprep.subr.bf16.mxu0 0
    %1609 = vmatpush1.bf16.msra.mxu0 0
    %1610 = vmatprep.subr.bf16.mxu0 0
    %1611 = vmatpush1.bf16.msra.mxu0 0
    %1612 = vmatprep.subr.bf16.mxu0 0
    %1613 = vmatpush1.bf16.msra.mxu0 0
    %1614 = vmatprep.subr.bf16.mxu0 0
    %1615 = vmatpush1.bf16.msra.mxu0 0
    %1616 = vmatprep.subr.bf16.mxu0 0
    %1617 = vmatpush1.bf16.msra.mxu0 0
    %1618 = vmatprep.subr.bf16.mxu0 0
    %1619 = vmatpush1.bf16.msra.mxu0 0
    %1620 = vmatprep.subr.bf16.mxu0 0
    %1621 = vmatpush1.bf16.msra.mxu0 0
    %1622 = vmatprep.subr.bf16.mxu0 0
    %1623 = vmatpush1.bf16.msra.mxu0 0
    %1624 = vmatprep.subr.bf16.mxu0 0
    %1625 = vmatpush1.bf16.msra.mxu0 0
    %1626 = vmatprep.subr.bf16.mxu0 0
    %1627 = vmatpush1.bf16.msra.mxu0 0
    %1628 = vmatprep.subr.bf16.mxu0 0
    %1629 = vmatpush1.bf16.msra.mxu0 0
    %1630 = vmatprep.subr.bf16.mxu0 0
    %1631 = vmatpush1.bf16.msra.mxu0 0
    %1632 = vmatprep.subr.bf16.mxu0 0
    %1633 = vmatpush1.bf16.msra.mxu0 0
    %1634 = vmatprep.subr.bf16.mxu0 0
    %1635 = vmatpush1.bf16.msra.mxu0 0
    %1636 = vmatprep.subr.bf16.mxu0 0
    %1637 = vmatpush1.bf16.msra.mxu0 0
    %1638 = vmatprep.mubr.bf16.mxu0 0
    %1639 = vmatmul.mubr.bf16.gmra.mrb[0].mxu0 %v1601
    %v1640 = vpop.f32.mrb[0].mxu0
    %v1641 = vadd.f32 0.0, %v1640
    %v1642 = vpop.f32.mrb[0].mxu0
    %v1643 = vpop.f32.mrb[0].mxu0
    %v1644 = vpop.f32.mrb[0].mxu0
    %1645 = vdwg.mxu0
    %1647 = vrot.lane.b32.xlu0 %v1535, 120
    %v1648 = vpop.permute.xlu0 %1647
    %1649 = vrot.lane.b32.xlu0 %v1536, 88
    %v1650 = vpop.permute.xlu0 %1649
    %v1652 = vsel %vm199, %v1648, 0
    %v1655 = vsel %vm199, %v1650, 0
    %1657 = vmatprep.subr.bf16.mxu0 0
    %1658 = vmatpush1.bf16.xpose.msra.mxu0 %v1655
    %1659 = vmatprep.subr.bf16.mxu0 0
    %1660 = vmatpush1.bf16.xpose.msra.mxu0 0
    %1661 = vmatprep.subr.bf16.mxu0 0
    %1662 = vmatpush1.bf16.xpose.msra.mxu0 0
    %1663 = vmatprep.subr.bf16.mxu0 0
    %1664 = vmatpush1.bf16.xpose.msra.mxu0 0
    %1665 = vmatprep.subr.bf16.mxu0 0
    %1666 = vmatpush1.bf16.xpose.msra.mxu0 0
    %1667 = vmatprep.subr.bf16.mxu0 0
    %1668 = vmatpush1.bf16.xpose.msra.mxu0 0
    %1669 = vmatprep.subr.bf16.mxu0 0
    %1670 = vmatpush1.bf16.xpose.msra.mxu0 0
    %1671 = vmatprep.subr.bf16.mxu0 0
    %1672 = vmatpush1.bf16.xpose.msra.mxu0 0
    %1673 = vmatprep.subr.bf16.mxu0 0
    %1674 = vmatpush1.bf16.xpose.msra.mxu0 0
    %1675 = vmatprep.subr.bf16.mxu0 0
    %1676 = vmatpush1.bf16.xpose.msra.mxu0 0
    %1677 = vmatprep.subr.bf16.mxu0 0
    %1678 = vmatpush1.bf16.xpose.msra.mxu0 0
    %1679 = vmatprep.subr.bf16.mxu0 0
    %1680 = vmatpush1.bf16.xpose.msra.mxu0 0
    %1681 = vmatprep.subr.bf16.mxu0 0
    %1682 = vmatpush1.bf16.xpose.msra.mxu0 0
    %1683 = vmatprep.subr.bf16.mxu0 0
    %1684 = vmatpush1.bf16.xpose.msra.mxu0 0
    %1685 = vmatprep.subr.bf16.mxu0 0
    %1686 = vmatpush1.bf16.xpose.msra.mxu0 0
    %1687 = vmatprep.subr.bf16.mxu0 0
    %1688 = vmatpush1.bf16.xpose.msra.mxu0 0
    %1689 = vmatprep.mubr.bf16.mxu0 0
    %1690 = vmatmul.mubr.bf16.gmra.mrb[0].mxu0 %v1652
    %v1691 = vpop.f32.mrb[0].mxu0
    %v1692 = vadd.f32 %v119, %v1691
    %v1693 = vpop.f32.mrb[0].mxu0
    %v1694 = vpop.f32.mrb[0].mxu0
    %v1695 = vpop.f32.mrb[0].mxu0
    %1696 = vdwg.mxu0
    %v1697 = vsel %vm199, %v1692, -inf
    %1698 = vmax.xlane.f32.xlu0 %v1697
    %v1699 = vpop.xlane.xlu0 %1698
    %v1700 = vsub.f32 %v1692, %v1699
    %v1701 = vmul.f32 %v1700, 1.442695
    %v1702 = vpow.pop %v1701
    %v1703 = vsel %vm199, %v1702, 0.0
    %1704 = vadd.xlane.f32.xlu0 %v1703
    %v1705 = vpop.xlane.xlu0 %1704
    %v1706 = vrcp.pop %v1705
    %v1707 = vmul.f32 %v1702, %v1706
    %v1708 = vpack.c.bf16 %v1707, %v1707
    %1709 = vrot.lane.b32.xlu0 %v1536, 56
    %v1710 = vpop.permute.xlu0 %1709
    %v1712 = vsel %vm199, %v1708, 0
    %v1715 = vsel %vm263, %v1710, 0
    %1717 = vmatprep.subr.bf16.mxu0 0
    %1718 = vmatpush1.bf16.msra.mxu0 %v1715
    %1719 = vmatprep.subr.bf16.mxu0 0
    %1720 = vmatpush1.bf16.msra.mxu0 0
    %1721 = vmatprep.subr.bf16.mxu0 0
    %1722 = vmatpush1.bf16.msra.mxu0 0
    %1723 = vmatprep.subr.bf16.mxu0 0
    %1724 = vmatpush1.bf16.msra.mxu0 0
    %1725 = vmatprep.subr.bf16.mxu0 0
    %1726 = vmatpush1.bf16.msra.mxu0 0
    %1727 = vmatprep.subr.bf16.mxu0 0
    %1728 = vmatpush1.bf16.msra.mxu0 0
    %1729 = vmatprep.subr.bf16.mxu0 0
    %1730 = vmatpush1.bf16.msra.mxu0 0
    %1731 = vmatprep.subr.bf16.mxu0 0
    %1732 = vmatpush1.bf16.msra.mxu0 0
    %1733 = vmatprep.subr.bf16.mxu0 0
    %1734 = vmatpush1.bf16.msra.mxu0 0
    %1735 = vmatprep.subr.bf16.mxu0 0
    %1736 = vmatpush1.bf16.msra.mxu0 0
    %1737 = vmatprep.subr.bf16.mxu0 0
    %1738 = vmatpush1.bf16.msra.mxu0 0
    %1739 = vmatprep.subr.bf16.mxu0 0
    %1740 = vmatpush1.bf16.msra.mxu0 0
    %1741 = vmatprep.subr.bf16.mxu0 0
    %1742 = vmatpush1.bf16.msra.mxu0 0
    %1743 = vmatprep.subr.bf16.mxu0 0
    %1744 = vmatpush1.bf16.msra.mxu0 0
    %1745 = vmatprep.subr.bf16.mxu0 0
    %1746 = vmatpush1.bf16.msra.mxu0 0
    %1747 = vmatprep.subr.bf16.mxu0 0
    %1748 = vmatpush1.bf16.msra.mxu0 0
    %1749 = vmatprep.mubr.bf16.mxu0 0
    %1750 = vmatmul.mubr.bf16.gmra.mrb[0].mxu0 %v1712
    %v1751 = vpop.f32.mrb[0].mxu0
    %v1752 = vadd.f32 0.0, %v1751
    %v1753 = vpop.f32.mrb[0].mxu0
    %v1754 = vpop.f32.mrb[0].mxu0
    %v1755 = vpop.f32.mrb[0].mxu0
    %1756 = vdwg.mxu0
    %1757 = vrot.lane.b32.xlu0 %v1535, 112
    %v1758 = vpop.permute.xlu0 %1757
    %1759 = vrot.lane.b32.xlu0 %v1536, 80
    %v1760 = vpop.permute.xlu0 %1759
    %v1762 = vsel %vm199, %v1758, 0
    %v1765 = vsel %vm199, %v1760, 0
    %1767 = vmatprep.subr.bf16.mxu0 0
    %1768 = vmatpush1.bf16.xpose.msra.mxu0 %v1765
    %1769 = vmatprep.subr.bf16.mxu0 0
    %1770 = vmatpush1.bf16.xpose.msra.mxu0 0
    %1771 = vmatprep.subr.bf16.mxu0 0
    %1772 = vmatpush1.bf16.xpose.msra.mxu0 0
    %1773 = vmatprep.subr.bf16.mxu0 0
    %1774 = vmatpush1.bf16.xpose.msra.mxu0 0
    %1775 = vmatprep.subr.bf16.mxu0 0
    %1776 = vmatpush1.bf16.xpose.msra.mxu0 0
    %1777 = vmatprep.subr.bf16.mxu0 0
    %1778 = vmatpush1.bf16.xpose.msra.mxu0 0
    %1779 = vmatprep.subr.bf16.mxu0 0
    %1780 = vmatpush1.bf16.xpose.msra.mxu0 0
    %1781 = vmatprep.subr.bf16.mxu0 0
    %1782 = vmatpush1.bf16.xpose.msra.mxu0 0
    %1783 = vmatprep.subr.bf16.mxu0 0
    %1784 = vmatpush1.bf16.xpose.msra.mxu0 0
    %1785 = vmatprep.subr.bf16.mxu0 0
    %1786 = vmatpush1.bf16.xpose.msra.mxu0 0
    %1787 = vmatprep.subr.bf16.mxu0 0
    %1788 = vmatpush1.bf16.xpose.msra.mxu0 0
    %1789 = vmatprep.subr.bf16.mxu0 0
    %1790 = vmatpush1.bf16.xpose.msra.mxu0 0
    %1791 = vmatprep.subr.bf16.mxu0 0
    %1792 = vmatpush1.bf16.xpose.msra.mxu0 0
    %1793 = vmatprep.subr.bf16.mxu0 0
    %1794 = vmatpush1.bf16.xpose.msra.mxu0 0
    %1795 = vmatprep.subr.bf16.mxu0 0
    %1796 = vmatpush1.bf16.xpose.msra.mxu0 0
    %1797 = vmatprep.subr.bf16.mxu0 0
    %1798 = vmatpush1.bf16.xpose.msra.mxu0 0
    %1799 = vmatprep.mubr.bf16.mxu0 0
    %1800 = vmatmul.mubr.bf16.gmra.mrb[0].mxu0 %v1762
    %v1801 = vpop.f32.mrb[0].mxu0
    %v1802 = vadd.f32 %v119, %v1801
    %v1803 = vpop.f32.mrb[0].mxu0
    %v1804 = vpop.f32.mrb[0].mxu0
    %v1805 = vpop.f32.mrb[0].mxu0
    %1806 = vdwg.mxu0
    %v1807 = vsel %vm199, %v1802, -inf
    %1808 = vmax.xlane.f32.xlu0 %v1807
    %v1809 = vpop.xlane.xlu0 %1808
    %v1810 = vsub.f32 %v1802, %v1809
    %v1811 = vmul.f32 %v1810, 1.442695
    %v1812 = vpow.pop %v1811
    %v1813 = vsel %vm199, %v1812, 0.0
    %1814 = vadd.xlane.f32.xlu0 %v1813
    %v1815 = vpop.xlane.xlu0 %1814
    %v1816 = vrcp.pop %v1815
    %v1817 = vmul.f32 %v1812, %v1816
    %v1818 = vpack.c.bf16 %v1817, %v1817
    %1819 = vrot.lane.b32.xlu0 %v1536, 48
    %v1820 = vpop.permute.xlu0 %1819
    %v1822 = vsel %vm199, %v1818, 0
    %v1825 = vsel %vm263, %v1820, 0
    %1827 = vmatprep.subr.bf16.mxu0 0
    %1828 = vmatpush1.bf16.msra.mxu0 %v1825
    %1829 = vmatprep.subr.bf16.mxu0 0
    %1830 = vmatpush1.bf16.msra.mxu0 0
    %1831 = vmatprep.subr.bf16.mxu0 0
    %1832 = vmatpush1.bf16.msra.mxu0 0
    %1833 = vmatprep.subr.bf16.mxu0 0
    %1834 = vmatpush1.bf16.msra.mxu0 0
    %1835 = vmatprep.subr.bf16.mxu0 0
    %1836 = vmatpush1.bf16.msra.mxu0 0
    %1837 = vmatprep.subr.bf16.mxu0 0
    %1838 = vmatpush1.bf16.msra.mxu0 0
    %1839 = vmatprep.subr.bf16.mxu0 0
    %1840 = vmatpush1.bf16.msra.mxu0 0
    %1841 = vmatprep.subr.bf16.mxu0 0
    %1842 = vmatpush1.bf16.msra.mxu0 0
    %1843 = vmatprep.subr.bf16.mxu0 0
    %1844 = vmatpush1.bf16.msra.mxu0 0
    %1845 = vmatprep.subr.bf16.mxu0 0
    %1846 = vmatpush1.bf16.msra.mxu0 0
    %1847 = vmatprep.subr.bf16.mxu0 0
    %1848 = vmatpush1.bf16.msra.mxu0 0
    %1849 = vmatprep.subr.bf16.mxu0 0
    %1850 = vmatpush1.bf16.msra.mxu0 0
    %1851 = vmatprep.subr.bf16.mxu0 0
    %1852 = vmatpush1.bf16.msra.mxu0 0
    %1853 = vmatprep.subr.bf16.mxu0 0
    %1854 = vmatpush1.bf16.msra.mxu0 0
    %1855 = vmatprep.subr.bf16.mxu0 0
    %1856 = vmatpush1.bf16.msra.mxu0 0
    %1857 = vmatprep.subr.bf16.mxu0 0
    %1858 = vmatpush1.bf16.msra.mxu0 0
    %1859 = vmatprep.mubr.bf16.mxu0 0
    %1860 = vmatmul.mubr.bf16.gmra.mrb[0].mxu0 %v1822
    %v1861 = vpop.f32.mrb[0].mxu0
    %v1862 = vadd.f32 0.0, %v1861
    %v1863 = vpop.f32.mrb[0].mxu0
    %v1864 = vpop.f32.mrb[0].mxu0
    %v1865 = vpop.f32.mrb[0].mxu0
    %1866 = vdwg.mxu0
    %1867 = vrot.lane.b32.xlu0 %v1535, 104
    %v1868 = vpop.permute.xlu0 %1867
    %1869 = vrot.lane.b32.xlu0 %v1536, 72
    %v1870 = vpop.permute.xlu0 %1869
    %v1872 = vsel %vm199, %v1868, 0
    %v1875 = vsel %vm199, %v1870, 0
    %1877 = vmatprep.subr.bf16.mxu0 0
    %1878 = vmatpush1.bf16.xpose.msra.mxu0 %v1875
    %1879 = vmatprep.subr.bf16.mxu0 0
    %1880 = vmatpush1.bf16.xpose.msra.mxu0 0
    %1881 = vmatprep.subr.bf16.mxu0 0
    %1882 = vmatpush1.bf16.xpose.msra.mxu0 0
    %1883 = vmatprep.subr.bf16.mxu0 0
    %1884 = vmatpush1.bf16.xpose.msra.mxu0 0
    %1885 = vmatprep.subr.bf16.mxu0 0
    %1886 = vmatpush1.bf16.xpose.msra.mxu0 0
    %1887 = vmatprep.subr.bf16.mxu0 0
    %1888 = vmatpush1.bf16.xpose.msra.mxu0 0
    %1889 = vmatprep.subr.bf16.mxu0 0
    %1890 = vmatpush1.bf16.xpose.msra.mxu0 0
    %1891 = vmatprep.subr.bf16.mxu0 0
    %1892 = vmatpush1.bf16.xpose.msra.mxu0 0
    %1893 = vmatprep.subr.bf16.mxu0 0
    %1894 = vmatpush1.bf16.xpose.msra.mxu0 0
    %1895 = vmatprep.subr.bf16.mxu0 0
    %1896 = vmatpush1.bf16.xpose.msra.mxu0 0
    %1897 = vmatprep.subr.bf16.mxu0 0
    %1898 = vmatpush1.bf16.xpose.msra.mxu0 0
    %1899 = vmatprep.subr.bf16.mxu0 0
    %1900 = vmatpush1.bf16.xpose.msra.mxu0 0
    %1901 = vmatprep.subr.bf16.mxu0 0
    %1902 = vmatpush1.bf16.xpose.msra.mxu0 0
    %1903 = vmatprep.subr.bf16.mxu0 0
    %1904 = vmatpush1.bf16.xpose.msra.mxu0 0
    %1905 = vmatprep.subr.bf16.mxu0 0
    %1906 = vmatpush1.bf16.xpose.msra.mxu0 0
    %1907 = vmatprep.subr.bf16.mxu0 0
    %1908 = vmatpush1.bf16.xpose.msra.mxu0 0
    %1909 = vmatprep.mubr.bf16.mxu0 0
    %1910 = vmatmul.mubr.bf16.gmra.mrb[0].mxu0 %v1872
    %v1911 = vpop.f32.mrb[0].mxu0
    %v1912 = vadd.f32 %v119, %v1911
    %v1913 = vpop.f32.mrb[0].mxu0
    %v1914 = vpop.f32.mrb[0].mxu0
    %v1915 = vpop.f32.mrb[0].mxu0
    %1916 = vdwg.mxu0
    %v1917 = vsel %vm199, %v1912, -inf
    %1918 = vmax.xlane.f32.xlu0 %v1917
    %v1919 = vpop.xlane.xlu0 %1918
    %v1920 = vsub.f32 %v1912, %v1919
    %v1921 = vmul.f32 %v1920, 1.442695
    %v1922 = vpow.pop %v1921
    %v1923 = vsel %vm199, %v1922, 0.0
    %1924 = vadd.xlane.f32.xlu0 %v1923
    %v1925 = vpop.xlane.xlu0 %1924
    %v1926 = vrcp.pop %v1925
    %v1927 = vmul.f32 %v1922, %v1926
    %v1928 = vpack.c.bf16 %v1927, %v1927
    %1929 = vrot.lane.b32.xlu0 %v1536, 40
    %v1930 = vpop.permute.xlu0 %1929
    %v1932 = vsel %vm199, %v1928, 0
    %v1935 = vsel %vm263, %v1930, 0
    %1937 = vmatprep.subr.bf16.mxu0 0
    %1938 = vmatpush1.bf16.msra.mxu0 %v1935
    %1939 = vmatprep.subr.bf16.mxu0 0
    %1940 = vmatpush1.bf16.msra.mxu0 0
    %1941 = vmatprep.subr.bf16.mxu0 0
    %1942 = vmatpush1.bf16.msra.mxu0 0
    %1943 = vmatprep.subr.bf16.mxu0 0
    %1944 = vmatpush1.bf16.msra.mxu0 0
    %1945 = vmatprep.subr.bf16.mxu0 0
    %1946 = vmatpush1.bf16.msra.mxu0 0
    %1947 = vmatprep.subr.bf16.mxu0 0
    %1948 = vmatpush1.bf16.msra.mxu0 0
    %1949 = vmatprep.subr.bf16.mxu0 0
    %1950 = vmatpush1.bf16.msra.mxu0 0
    %1951 = vmatprep.subr.bf16.mxu0 0
    %1952 = vmatpush1.bf16.msra.mxu0 0
    %1953 = vmatprep.subr.bf16.mxu0 0
    %1954 = vmatpush1.bf16.msra.mxu0 0
    %1955 = vmatprep.subr.bf16.mxu0 0
    %1956 = vmatpush1.bf16.msra.mxu0 0
    %1957 = vmatprep.subr.bf16.mxu0 0
    %1958 = vmatpush1.bf16.msra.mxu0 0
    %1959 = vmatprep.subr.bf16.mxu0 0
    %1960 = vmatpush1.bf16.msra.mxu0 0
    %1961 = vmatprep.subr.bf16.mxu0 0
    %1962 = vmatpush1.bf16.msra.mxu0 0
    %1963 = vmatprep.subr.bf16.mxu0 0
    %1964 = vmatpush1.bf16.msra.mxu0 0
    %1965 = vmatprep.subr.bf16.mxu0 0
    %1966 = vmatpush1.bf16.msra.mxu0 0
    %1967 = vmatprep.subr.bf16.mxu0 0
    %1968 = vmatpush1.bf16.msra.mxu0 0
    %1969 = vmatprep.mubr.bf16.mxu0 0
    %1970 = vmatmul.mubr.bf16.gmra.mrb[0].mxu0 %v1932
    %v1971 = vpop.f32.mrb[0].mxu0
    %v1972 = vadd.f32 0.0, %v1971
    %v1973 = vpop.f32.mrb[0].mxu0
    %v1974 = vpop.f32.mrb[0].mxu0
    %v1975 = vpop.f32.mrb[0].mxu0
    %1976 = vdwg.mxu0
    %1978 = vrot.lane.b32.xlu0 %v1752, 8
    %v1979 = vpop.permute.xlu0 %1978
    %1982 = vrot.lane.b32.xlu0 %v1862, 16
    %v1983 = vpop.permute.xlu0 %1982
    %1986 = vrot.lane.b32.xlu0 %v1972, 24
    %v1987 = vpop.permute.xlu0 %1986
    %v1989 = vsel %vm199, %v1641, %v1979
    %v1990 = vsel %vm651, %v1989, %v1983
    %v1991 = vsel %vm653, %v1990, %v1987
    %v1992 = vmul.f32 %v1531, 0.35355338
    %v1993 = vpack.c.bf16 %v1992, %v1992
    %v1994 = vpack.c.bf16 %v1531, %v1531
    %1996 = vrot.lane.b32.xlu0 %v1994, 96
    %v1997 = vpop.permute.xlu0 %1996
    %v1999 = vsel %vm199, %v1993, 0
    %v2002 = vsel %vm199, %v1997, 0
    %2004 = vmatprep.subr.bf16.mxu0 0
    %2005 = vmatpush1.bf16.xpose.msra.mxu0 %v2002
    %2006 = vmatprep.subr.bf16.mxu0 0
    %2007 = vmatpush1.bf16.xpose.msra.mxu0 0
    %2008 = vmatprep.subr.bf16.mxu0 0
    %2009 = vmatpush1.bf16.xpose.msra.mxu0 0
    %2010 = vmatprep.subr.bf16.mxu0 0
    %2011 = vmatpush1.bf16.xpose.msra.mxu0 0
    %2012 = vmatprep.subr.bf16.mxu0 0
    %2013 = vmatpush1.bf16.xpose.msra.mxu0 0
    %2014 = vmatprep.subr.bf16.mxu0 0
    %2015 = vmatpush1.bf16.xpose.msra.mxu0 0
    %2016 = vmatprep.subr.bf16.mxu0 0
    %2017 = vmatpush1.bf16.xpose.msra.mxu0 0
    %2018 = vmatprep.subr.bf16.mxu0 0
    %2019 = vmatpush1.bf16.xpose.msra.mxu0 0
    %2020 = vmatprep.subr.bf16.mxu0 0
    %2021 = vmatpush1.bf16.xpose.msra.mxu0 0
    %2022 = vmatprep.subr.bf16.mxu0 0
    %2023 = vmatpush1.bf16.xpose.msra.mxu0 0
    %2024 = vmatprep.subr.bf16.mxu0 0
    %2025 = vmatpush1.bf16.xpose.msra.mxu0 0
    %2026 = vmatprep.subr.bf16.mxu0 0
    %2027 = vmatpush1.bf16.xpose.msra.mxu0 0
    %2028 = vmatprep.subr.bf16.mxu0 0
    %2029 = vmatpush1.bf16.xpose.msra.mxu0 0
    %2030 = vmatprep.subr.bf16.mxu0 0
    %2031 = vmatpush1.bf16.xpose.msra.mxu0 0
    %2032 = vmatprep.subr.bf16.mxu0 0
    %2033 = vmatpush1.bf16.xpose.msra.mxu0 0
    %2034 = vmatprep.subr.bf16.mxu0 0
    %2035 = vmatpush1.bf16.xpose.msra.mxu0 0
    %2036 = vmatprep.mubr.bf16.mxu0 0
    %2037 = vmatmul.mubr.bf16.gmra.mrb[0].mxu0 %v1999
    %v2038 = vpop.f32.mrb[0].mxu0
    %v2039 = vadd.f32 %v124, %v2038
    %v2040 = vpop.f32.mrb[0].mxu0
    %v2041 = vpop.f32.mrb[0].mxu0
    %v2042 = vpop.f32.mrb[0].mxu0
    %2043 = vdwg.mxu0
    %v2044 = vsel %vm199, %v2039, -inf
    %2045 = vmax.xlane.f32.xlu0 %v2044
    %v2046 = vpop.xlane.xlu0 %2045
    %v2047 = vsub.f32 %v2039, %v2046
    %v2048 = vmul.f32 %v2047, 1.442695
    %v2049 = vpow.pop %v2048
    %v2050 = vsel %vm199, %v2049, 0.0
    %2051 = vadd.xlane.f32.xlu0 %v2050
    %v2052 = vpop.xlane.xlu0 %2051
    %v2053 = vrcp.pop %v2052
    %v2054 = vmul.f32 %v2049, %v2053
    %v2055 = vpack.c.bf16 %v2054, %v2054
    %2056 = vrot.lane.b32.xlu0 %v1994, 64
    %v2057 = vpop.permute.xlu0 %2056
    %v2059 = vsel %vm199, %v2055, 0
    %v2062 = vsel %vm263, %v2057, 0
    %2064 = vmatprep.subr.bf16.mxu0 0
    %2065 = vmatpush1.bf16.msra.mxu0 %v2062
    %2066 = vmatprep.subr.bf16.mxu0 0
    %2067 = vmatpush1.bf16.msra.mxu0 0
    %2068 = vmatprep.subr.bf16.mxu0 0
    %2069 = vmatpush1.bf16.msra.mxu0 0
    %2070 = vmatprep.subr.bf16.mxu0 0
    %2071 = vmatpush1.bf16.msra.mxu0 0
    %2072 = vmatprep.subr.bf16.mxu0 0
    %2073 = vmatpush1.bf16.msra.mxu0 0
    %2074 = vmatprep.subr.bf16.mxu0 0
    %2075 = vmatpush1.bf16.msra.mxu0 0
    %2076 = vmatprep.subr.bf16.mxu0 0
    %2077 = vmatpush1.bf16.msra.mxu0 0
    %2078 = vmatprep.subr.bf16.mxu0 0
    %2079 = vmatpush1.bf16.msra.mxu0 0
    %2080 = vmatprep.subr.bf16.mxu0 0
    %2081 = vmatpush1.bf16.msra.mxu0 0
    %2082 = vmatprep.subr.bf16.mxu0 0
    %2083 = vmatpush1.bf16.msra.mxu0 0
    %2084 = vmatprep.subr.bf16.mxu0 0
    %2085 = vmatpush1.bf16.msra.mxu0 0
    %2086 = vmatprep.subr.bf16.mxu0 0
    %2087 = vmatpush1.bf16.msra.mxu0 0
    %2088 = vmatprep.subr.bf16.mxu0 0
    %2089 = vmatpush1.bf16.msra.mxu0 0
    %2090 = vmatprep.subr.bf16.mxu0 0
    %2091 = vmatpush1.bf16.msra.mxu0 0
    %2092 = vmatprep.subr.bf16.mxu0 0
    %2093 = vmatpush1.bf16.msra.mxu0 0
    %2094 = vmatprep.subr.bf16.mxu0 0
    %2095 = vmatpush1.bf16.msra.mxu0 0
    %2096 = vmatprep.mubr.bf16.mxu0 0
    %2097 = vmatmul.mubr.bf16.gmra.mrb[0].mxu0 %v2059
    %v2098 = vpop.f32.mrb[0].mxu0
    %v2099 = vadd.f32 0.0, %v2098
    %v2100 = vpop.f32.mrb[0].mxu0
    %v2101 = vpop.f32.mrb[0].mxu0
    %v2102 = vpop.f32.mrb[0].mxu0
    %2103 = vdwg.mxu0
    %2105 = vrot.lane.b32.xlu0 %v1993, 120
    %v2106 = vpop.permute.xlu0 %2105
    %2107 = vrot.lane.b32.xlu0 %v1994, 88
    %v2108 = vpop.permute.xlu0 %2107
    %v2110 = vsel %vm199, %v2106, 0
    %v2113 = vsel %vm199, %v2108, 0
    %2115 = vmatprep.subr.bf16.mxu0 0
    %2116 = vmatpush1.bf16.xpose.msra.mxu0 %v2113
    %2117 = vmatprep.subr.bf16.mxu0 0
    %2118 = vmatpush1.bf16.xpose.msra.mxu0 0
    %2119 = vmatprep.subr.bf16.mxu0 0
    %2120 = vmatpush1.bf16.xpose.msra.mxu0 0
    %2121 = vmatprep.subr.bf16.mxu0 0
    %2122 = vmatpush1.bf16.xpose.msra.mxu0 0
    %2123 = vmatprep.subr.bf16.mxu0 0
    %2124 = vmatpush1.bf16.xpose.msra.mxu0 0
    %2125 = vmatprep.subr.bf16.mxu0 0
    %2126 = vmatpush1.bf16.xpose.msra.mxu0 0
    %2127 = vmatprep.subr.bf16.mxu0 0
    %2128 = vmatpush1.bf16.xpose.msra.mxu0 0
    %2129 = vmatprep.subr.bf16.mxu0 0
    %2130 = vmatpush1.bf16.xpose.msra.mxu0 0
    %2131 = vmatprep.subr.bf16.mxu0 0
    %2132 = vmatpush1.bf16.xpose.msra.mxu0 0
    %2133 = vmatprep.subr.bf16.mxu0 0
    %2134 = vmatpush1.bf16.xpose.msra.mxu0 0
    %2135 = vmatprep.subr.bf16.mxu0 0
    %2136 = vmatpush1.bf16.xpose.msra.mxu0 0
    %2137 = vmatprep.subr.bf16.mxu0 0
    %2138 = vmatpush1.bf16.xpose.msra.mxu0 0
    %2139 = vmatprep.subr.bf16.mxu0 0
    %2140 = vmatpush1.bf16.xpose.msra.mxu0 0
    %2141 = vmatprep.subr.bf16.mxu0 0
    %2142 = vmatpush1.bf16.xpose.msra.mxu0 0
    %2143 = vmatprep.subr.bf16.mxu0 0
    %2144 = vmatpush1.bf16.xpose.msra.mxu0 0
    %2145 = vmatprep.subr.bf16.mxu0 0
    %2146 = vmatpush1.bf16.xpose.msra.mxu0 0
    %2147 = vmatprep.mubr.bf16.mxu0 0
    %2148 = vmatmul.mubr.bf16.gmra.mrb[0].mxu0 %v2110
    %v2149 = vpop.f32.mrb[0].mxu0
    %v2150 = vadd.f32 %v124, %v2149
    %v2151 = vpop.f32.mrb[0].mxu0
    %v2152 = vpop.f32.mrb[0].mxu0
    %v2153 = vpop.f32.mrb[0].mxu0
    %2154 = vdwg.mxu0
    %v2155 = vsel %vm199, %v2150, -inf
    %2156 = vmax.xlane.f32.xlu0 %v2155
    %v2157 = vpop.xlane.xlu0 %2156
    %v2158 = vsub.f32 %v2150, %v2157
    %v2159 = vmul.f32 %v2158, 1.442695
    %v2160 = vpow.pop %v2159
    %v2161 = vsel %vm199, %v2160, 0.0
    %2162 = vadd.xlane.f32.xlu0 %v2161
    %v2163 = vpop.xlane.xlu0 %2162
    %v2164 = vrcp.pop %v2163
    %v2165 = vmul.f32 %v2160, %v2164
    %v2166 = vpack.c.bf16 %v2165, %v2165
    %2167 = vrot.lane.b32.xlu0 %v1994, 56
    %v2168 = vpop.permute.xlu0 %2167
    %v2170 = vsel %vm199, %v2166, 0
    %v2173 = vsel %vm263, %v2168, 0
    %2175 = vmatprep.subr.bf16.mxu0 0
    %2176 = vmatpush1.bf16.msra.mxu0 %v2173
    %2177 = vmatprep.subr.bf16.mxu0 0
    %2178 = vmatpush1.bf16.msra.mxu0 0
    %2179 = vmatprep.subr.bf16.mxu0 0
    %2180 = vmatpush1.bf16.msra.mxu0 0
    %2181 = vmatprep.subr.bf16.mxu0 0
    %2182 = vmatpush1.bf16.msra.mxu0 0
    %2183 = vmatprep.subr.bf16.mxu0 0
    %2184 = vmatpush1.bf16.msra.mxu0 0
    %2185 = vmatprep.subr.bf16.mxu0 0
    %2186 = vmatpush1.bf16.msra.mxu0 0
    %2187 = vmatprep.subr.bf16.mxu0 0
    %2188 = vmatpush1.bf16.msra.mxu0 0
    %2189 = vmatprep.subr.bf16.mxu0 0
    %2190 = vmatpush1.bf16.msra.mxu0 0
    %2191 = vmatprep.subr.bf16.mxu0 0
    %2192 = vmatpush1.bf16.msra.mxu0 0
    %2193 = vmatprep.subr.bf16.mxu0 0
    %2194 = vmatpush1.bf16.msra.mxu0 0
    %2195 = vmatprep.subr.bf16.mxu0 0
    %2196 = vmatpush1.bf16.msra.mxu0 0
    %2197 = vmatprep.subr.bf16.mxu0 0
    %2198 = vmatpush1.bf16.msra.mxu0 0
    %2199 = vmatprep.subr.bf16.mxu0 0
    %2200 = vmatpush1.bf16.msra.mxu0 0
    %2201 = vmatprep.subr.bf16.mxu0 0
    %2202 = vmatpush1.bf16.msra.mxu0 0
    %2203 = vmatprep.subr.bf16.mxu0 0
    %2204 = vmatpush1.bf16.msra.mxu0 0
    %2205 = vmatprep.subr.bf16.mxu0 0
    %2206 = vmatpush1.bf16.msra.mxu0 0
    %2207 = vmatprep.mubr.bf16.mxu0 0
    %2208 = vmatmul.mubr.bf16.gmra.mrb[0].mxu0 %v2170
    %v2209 = vpop.f32.mrb[0].mxu0
    %v2210 = vadd.f32 0.0, %v2209
    %v2211 = vpop.f32.mrb[0].mxu0
    %v2212 = vpop.f32.mrb[0].mxu0
    %v2213 = vpop.f32.mrb[0].mxu0
    %2214 = vdwg.mxu0
    %2215 = vrot.lane.b32.xlu0 %v1993, 112
    %v2216 = vpop.permute.xlu0 %2215
    %2217 = vrot.lane.b32.xlu0 %v1994, 80
    %v2218 = vpop.permute.xlu0 %2217
    %v2220 = vsel %vm199, %v2216, 0
    %v2223 = vsel %vm199, %v2218, 0
    %2225 = vmatprep.subr.bf16.mxu0 0
    %2226 = vmatpush1.bf16.xpose.msra.mxu0 %v2223
    %2227 = vmatprep.subr.bf16.mxu0 0
    %2228 = vmatpush1.bf16.xpose.msra.mxu0 0
    %2229 = vmatprep.subr.bf16.mxu0 0
    %2230 = vmatpush1.bf16.xpose.msra.mxu0 0
    %2231 = vmatprep.subr.bf16.mxu0 0
    %2232 = vmatpush1.bf16.xpose.msra.mxu0 0
    %2233 = vmatprep.subr.bf16.mxu0 0
    %2234 = vmatpush1.bf16.xpose.msra.mxu0 0
    %2235 = vmatprep.subr.bf16.mxu0 0
    %2236 = vmatpush1.bf16.xpose.msra.mxu0 0
    %2237 = vmatprep.subr.bf16.mxu0 0
    %2238 = vmatpush1.bf16.xpose.msra.mxu0 0
    %2239 = vmatprep.subr.bf16.mxu0 0
    %2240 = vmatpush1.bf16.xpose.msra.mxu0 0
    %2241 = vmatprep.subr.bf16.mxu0 0
    %2242 = vmatpush1.bf16.xpose.msra.mxu0 0
    %2243 = vmatprep.subr.bf16.mxu0 0
    %2244 = vmatpush1.bf16.xpose.msra.mxu0 0
    %2245 = vmatprep.subr.bf16.mxu0 0
    %2246 = vmatpush1.bf16.xpose.msra.mxu0 0
    %2247 = vmatprep.subr.bf16.mxu0 0
    %2248 = vmatpush1.bf16.xpose.msra.mxu0 0
    %2249 = vmatprep.subr.bf16.mxu0 0
    %2250 = vmatpush1.bf16.xpose.msra.mxu0 0
    %2251 = vmatprep.subr.bf16.mxu0 0
    %2252 = vmatpush1.bf16.xpose.msra.mxu0 0
    %2253 = vmatprep.subr.bf16.mxu0 0
    %2254 = vmatpush1.bf16.xpose.msra.mxu0 0
    %2255 = vmatprep.subr.bf16.mxu0 0
    %2256 = vmatpush1.bf16.xpose.msra.mxu0 0
    %2257 = vmatprep.mubr.bf16.mxu0 0
    %2258 = vmatmul.mubr.bf16.gmra.mrb[0].mxu0 %v2220
    %v2259 = vpop.f32.mrb[0].mxu0
    %v2260 = vadd.f32 %v124, %v2259
    %v2261 = vpop.f32.mrb[0].mxu0
    %v2262 = vpop.f32.mrb[0].mxu0
    %v2263 = vpop.f32.mrb[0].mxu0
    %2264 = vdwg.mxu0
    %v2265 = vsel %vm199, %v2260, -inf
    %2266 = vmax.xlane.f32.xlu0 %v2265
    %v2267 = vpop.xlane.xlu0 %2266
    %v2268 = vsub.f32 %v2260, %v2267
    %v2269 = vmul.f32 %v2268, 1.442695
    %v2270 = vpow.pop %v2269
    %v2271 = vsel %vm199, %v2270, 0.0
    %2272 = vadd.xlane.f32.xlu0 %v2271
    %v2273 = vpop.xlane.xlu0 %2272
    %v2274 = vrcp.pop %v2273
    %v2275 = vmul.f32 %v2270, %v2274
    %v2276 = vpack.c.bf16 %v2275, %v2275
    %2277 = vrot.lane.b32.xlu0 %v1994, 48
    %v2278 = vpop.permute.xlu0 %2277
    %v2280 = vsel %vm199, %v2276, 0
    %v2283 = vsel %vm263, %v2278, 0
    %2285 = vmatprep.subr.bf16.mxu0 0
    %2286 = vmatpush1.bf16.msra.mxu0 %v2283
    %2287 = vmatprep.subr.bf16.mxu0 0
    %2288 = vmatpush1.bf16.msra.mxu0 0
    %2289 = vmatprep.subr.bf16.mxu0 0
    %2290 = vmatpush1.bf16.msra.mxu0 0
    %2291 = vmatprep.subr.bf16.mxu0 0
    %2292 = vmatpush1.bf16.msra.mxu0 0
    %2293 = vmatprep.subr.bf16.mxu0 0
    %2294 = vmatpush1.bf16.msra.mxu0 0
    %2295 = vmatprep.subr.bf16.mxu0 0
    %2296 = vmatpush1.bf16.msra.mxu0 0
    %2297 = vmatprep.subr.bf16.mxu0 0
    %2298 = vmatpush1.bf16.msra.mxu0 0
    %2299 = vmatprep.subr.bf16.mxu0 0
    %2300 = vmatpush1.bf16.msra.mxu0 0
    %2301 = vmatprep.subr.bf16.mxu0 0
    %2302 = vmatpush1.bf16.msra.mxu0 0
    %2303 = vmatprep.subr.bf16.mxu0 0
    %2304 = vmatpush1.bf16.msra.mxu0 0
    %2305 = vmatprep.subr.bf16.mxu0 0
    %2306 = vmatpush1.bf16.msra.mxu0 0
    %2307 = vmatprep.subr.bf16.mxu0 0
    %2308 = vmatpush1.bf16.msra.mxu0 0
    %2309 = vmatprep.subr.bf16.mxu0 0
    %2310 = vmatpush1.bf16.msra.mxu0 0
    %2311 = vmatprep.subr.bf16.mxu0 0
    %2312 = vmatpush1.bf16.msra.mxu0 0
    %2313 = vmatprep.subr.bf16.mxu0 0
    %2314 = vmatpush1.bf16.msra.mxu0 0
    %2315 = vmatprep.subr.bf16.mxu0 0
    %2316 = vmatpush1.bf16.msra.mxu0 0
    %2317 = vmatprep.mubr.bf16.mxu0 0
    %2318 = vmatmul.mubr.bf16.gmra.mrb[0].mxu0 %v2280
    %v2319 = vpop.f32.mrb[0].mxu0
    %v2320 = vadd.f32 0.0, %v2319
    %v2321 = vpop.f32.mrb[0].mxu0
    %v2322 = vpop.f32.mrb[0].mxu0
    %v2323 = vpop.f32.mrb[0].mxu0
    %2324 = vdwg.mxu0
    %2325 = vrot.lane.b32.xlu0 %v1993, 104
    %v2326 = vpop.permute.xlu0 %2325
    %2327 = vrot.lane.b32.xlu0 %v1994, 72
    %v2328 = vpop.permute.xlu0 %2327
    %v2330 = vsel %vm199, %v2326, 0
    %v2333 = vsel %vm199, %v2328, 0
    %2335 = vmatprep.subr.bf16.mxu0 0
    %2336 = vmatpush1.bf16.xpose.msra.mxu0 %v2333
    %2337 = vmatprep.subr.bf16.mxu0 0
    %2338 = vmatpush1.bf16.xpose.msra.mxu0 0
    %2339 = vmatprep.subr.bf16.mxu0 0
    %2340 = vmatpush1.bf16.xpose.msra.mxu0 0
    %2341 = vmatprep.subr.bf16.mxu0 0
    %2342 = vmatpush1.bf16.xpose.msra.mxu0 0
    %2343 = vmatprep.subr.bf16.mxu0 0
    %2344 = vmatpush1.bf16.xpose.msra.mxu0 0
    %2345 = vmatprep.subr.bf16.mxu0 0
    %2346 = vmatpush1.bf16.xpose.msra.mxu0 0
    %2347 = vmatprep.subr.bf16.mxu0 0
    %2348 = vmatpush1.bf16.xpose.msra.mxu0 0
    %2349 = vmatprep.subr.bf16.mxu0 0
    %2350 = vmatpush1.bf16.xpose.msra.mxu0 0
    %2351 = vmatprep.subr.bf16.mxu0 0
    %2352 = vmatpush1.bf16.xpose.msra.mxu0 0
    %2353 = vmatprep.subr.bf16.mxu0 0
    %2354 = vmatpush1.bf16.xpose.msra.mxu0 0
    %2355 = vmatprep.subr.bf16.mxu0 0
    %2356 = vmatpush1.bf16.xpose.msra.mxu0 0
    %2357 = vmatprep.subr.bf16.mxu0 0
    %2358 = vmatpush1.bf16.xpose.msra.mxu0 0
    %2359 = vmatprep.subr.bf16.mxu0 0
    %2360 = vmatpush1.bf16.xpose.msra.mxu0 0
    %2361 = vmatprep.subr.bf16.mxu0 0
    %2362 = vmatpush1.bf16.xpose.msra.mxu0 0
    %2363 = vmatprep.subr.bf16.mxu0 0
    %2364 = vmatpush1.bf16.xpose.msra.mxu0 0
    %2365 = vmatprep.subr.bf16.mxu0 0
    %2366 = vmatpush1.bf16.xpose.msra.mxu0 0
    %2367 = vmatprep.mubr.bf16.mxu0 0
    %2368 = vmatmul.mubr.bf16.gmra.mrb[0].mxu0 %v2330
    %v2369 = vpop.f32.mrb[0].mxu0
    %v2370 = vadd.f32 %v124, %v2369
    %v2371 = vpop.f32.mrb[0].mxu0
    %v2372 = vpop.f32.mrb[0].mxu0
    %v2373 = vpop.f32.mrb[0].mxu0
    %2374 = vdwg.mxu0
    %v2375 = vsel %vm199, %v2370, -inf
    %2376 = vmax.xlane.f32.xlu0 %v2375
    %v2377 = vpop.xlane.xlu0 %2376
    %v2378 = vsub.f32 %v2370, %v2377
    %v2379 = vmul.f32 %v2378, 1.442695
    %v2380 = vpow.pop %v2379
    %v2381 = vsel %vm199, %v2380, 0.0
    %2382 = vadd.xlane.f32.xlu0 %v2381
    %v2383 = vpop.xlane.xlu0 %2382
    %v2384 = vrcp.pop %v2383
    %v2385 = vmul.f32 %v2380, %v2384
    %v2386 = vpack.c.bf16 %v2385, %v2385
    %2387 = vrot.lane.b32.xlu0 %v1994, 40
    %v2388 = vpop.permute.xlu0 %2387
    %v2390 = vsel %vm199, %v2386, 0
    %v2393 = vsel %vm263, %v2388, 0
    %2395 = vmatprep.subr.bf16.mxu0 0
    %2396 = vmatpush1.bf16.msra.mxu0 %v2393
    %2397 = vmatprep.subr.bf16.mxu0 0
    %2398 = vmatpush1.bf16.msra.mxu0 0
    %2399 = vmatprep.subr.bf16.mxu0 0
    %2400 = vmatpush1.bf16.msra.mxu0 0
    %2401 = vmatprep.subr.bf16.mxu0 0
    %2402 = vmatpush1.bf16.msra.mxu0 0
    %2403 = vmatprep.subr.bf16.mxu0 0
    %2404 = vmatpush1.bf16.msra.mxu0 0
    %2405 = vmatprep.subr.bf16.mxu0 0
    %2406 = vmatpush1.bf16.msra.mxu0 0
    %2407 = vmatprep.subr.bf16.mxu0 0
    %2408 = vmatpush1.bf16.msra.mxu0 0
    %2409 = vmatprep.subr.bf16.mxu0 0
    %2410 = vmatpush1.bf16.msra.mxu0 0
    %2411 = vmatprep.subr.bf16.mxu0 0
    %2412 = vmatpush1.bf16.msra.mxu0 0
    %2413 = vmatprep.subr.bf16.mxu0 0
    %2414 = vmatpush1.bf16.msra.mxu0 0
    %2415 = vmatprep.subr.bf16.mxu0 0
    %2416 = vmatpush1.bf16.msra.mxu0 0
    %2417 = vmatprep.subr.bf16.mxu0 0
    %2418 = vmatpush1.bf16.msra.mxu0 0
    %2419 = vmatprep.subr.bf16.mxu0 0
    %2420 = vmatpush1.bf16.msra.mxu0 0
    %2421 = vmatprep.subr.bf16.mxu0 0
    %2422 = vmatpush1.bf16.msra.mxu0 0
    %2423 = vmatprep.subr.bf16.mxu0 0
    %2424 = vmatpush1.bf16.msra.mxu0 0
    %2425 = vmatprep.subr.bf16.mxu0 0
    %2426 = vmatpush1.bf16.msra.mxu0 0
    %2427 = vmatprep.mubr.bf16.mxu0 0
    %2428 = vmatmul.mubr.bf16.gmra.mrb[0].mxu0 %v2390
    %v2429 = vpop.f32.mrb[0].mxu0
    %v2430 = vadd.f32 0.0, %v2429
    %v2431 = vpop.f32.mrb[0].mxu0
    %v2432 = vpop.f32.mrb[0].mxu0
    %v2433 = vpop.f32.mrb[0].mxu0
    %2434 = vdwg.mxu0
    %2436 = vrot.lane.b32.xlu0 %v2210, 8
    %v2437 = vpop.permute.xlu0 %2436
    %2440 = vrot.lane.b32.xlu0 %v2320, 16
    %v2441 = vpop.permute.xlu0 %2440
    %2444 = vrot.lane.b32.xlu0 %v2430, 24
    %v2445 = vpop.permute.xlu0 %2444
    %v2447 = vsel %vm199, %v2099, %v2437
    %v2448 = vsel %vm651, %v2447, %v2441
    %v2449 = vsel %vm653, %v2448, %v2445
    %v2450 = vpack.c.bf16 %v2449, %v1991
    %s2451 = scalar_lea.vmem %s6, 16
    %v2452 = vld [vmem:[%s2451] sm:$0xf]
    %v2453 = vld [vmem:[%s2451 + $0x4] sm:$0xf]
    %v2454 = vld [vmem:[%s2451 + $0x8] sm:$0xf]
    %v2455 = vld [vmem:[%s2451 + $0xc] sm:$0xf]
    %s2456 = scalar_lea.vmem %s7, 1
    %v2457 = vld [vmem:[%s2456] sm:$0x1]
    %v2459 = vlaneseq
    %v2460 = vshrl.u32 %v2459, 7
    %v2461 = vsub.s32 0, %v2460
    %v2462 = vrot.slane %v2457, %v2461
    %v2468 = vunpack.c.l.b16 %v2452
    %v2469 = vunpack.c.l.b16 %v2453
    %v2470 = vunpack.c.l.b16 %v2454
    %v2471 = vunpack.c.l.b16 %v2455
    %v2472 = vpack.c.b16 %v2469, %v2468
    %v2473 = vpack.c.b16 %v2471, %v2470
    %v2477 = vsel %vm71, %v2450, 0
    %2479 = vmatprep.subr.bf16.mxu0 0
    %2480 = vmatpush1.bf16.msra.mxu0 %v2472
    %2481 = vmatprep.subr.bf16.mxu0 0
    %2482 = vmatpush1.bf16.msra.mxu0 %v2473
    %2483 = vmatprep.subr.bf16.mxu0 0
    %2484 = vmatpush1.bf16.msra.mxu0 0
    %2485 = vmatprep.subr.bf16.mxu0 0
    %2486 = vmatpush1.bf16.msra.mxu0 0
    %2487 = vmatprep.subr.bf16.mxu0 0
    %2488 = vmatpush1.bf16.msra.mxu0 0
    %2489 = vmatprep.subr.bf16.mxu0 0
    %2490 = vmatpush1.bf16.msra.mxu0 0
    %2491 = vmatprep.subr.bf16.mxu0 0
    %2492 = vmatpush1.bf16.msra.mxu0 0
    %2493 = vmatprep.subr.bf16.mxu0 0
    %2494 = vmatpush1.bf16.msra.mxu0 0
    %2495 = vmatprep.subr.bf16.mxu0 0
    %2496 = vmatpush1.bf16.msra.mxu0 0
    %2497 = vmatprep.subr.bf16.mxu0 0
    %2498 = vmatpush1.bf16.msra.mxu0 0
    %2499 = vmatprep.subr.bf16.mxu0 0
    %2500 = vmatpush1.bf16.msra.mxu0 0
    %2501 = vmatprep.subr.bf16.mxu0 0
    %2502 = vmatpush1.bf16.msra.mxu0 0
    %2503 = vmatprep.subr.bf16.mxu0 0
    %2504 = vmatpush1.bf16.msra.mxu0 0
    %2505 = vmatprep.subr.bf16.mxu0 0
    %2506 = vmatpush1.bf16.msra.mxu0 0
    %2507 = vmatprep.subr.bf16.mxu0 0
    %2508 = vmatpush1.bf16.msra.mxu0 0
    %2509 = vmatprep.subr.bf16.mxu0 0
    %2510 = vmatpush1.bf16.msra.mxu0 0
    %2511 = vmatprep.mubr.bf16.mxu0 0
    %2512 = vmatmul.mubr.bf16.gmra.mrb[0].mxu0 %v2477
    %v2513 = vpop.f32.mrb[0].mxu0
    %v2514 = vadd.f32 %v2462, %v2513
    %v2515 = vpop.f32.mrb[0].mxu0
    %v2516 = vpop.f32.mrb[0].mxu0
    %v2517 = vadd.f32 %v2462, %v2516
    %v2518 = vpop.f32.mrb[0].mxu0
    %2519 = vdwg.mxu0
    %v2520 = vadd.f32 %v1462, %v2514
    %v2521 = vadd.f32 %v1463, %v2517
    %s2522 = scalar_lea.vmem %s8, 1
    %v2523 = vld [vmem:[%s2522] sm:$0x1]
    %s2524 = scalar_lea.vmem %s9, 1
    %v2525 = vld [vmem:[%s2524] sm:$0x1]
    %v2526 = vsel %vm71, %v2520, 0.0
    %2527 = vadd.xlane.f32.xlu0 %v2526
    %v2528 = vpop.xlane.xlu0 %2527
    %v2529 = vsel %vm71, %v2521, 0.0
    %2530 = vadd.xlane.f32.xlu0 %v2529
    %v2531 = vpop.xlane.xlu0 %2530
    %v2532 = vmul.f32 %v2528, %v78
    %v2533 = vmul.f32 %v2531, %v78
    %v2534 = vsub.f32 %v2520, %v2532
    %v2535 = vsub.f32 %v2521, %v2533
    %v2536 = vmul.f32 %v2534, %v2534
    %v2537 = vmul.f32 %v2535, %v2535
    %v2538 = vsel %vm71, %v2536, 0.0
    %2539 = vadd.xlane.f32.xlu0 %v2538
    %v2540 = vpop.xlane.xlu0 %2539
    %v2541 = vsel %vm71, %v2537, 0.0
    %2542 = vadd.xlane.f32.xlu0 %v2541
    %v2543 = vpop.xlane.xlu0 %2542
    %v2544 = vmul.f32 %v2540, %v78
    %v2545 = vmul.f32 %v2543, %v78
    %v2546 = vadd.f32 %v2544, 1e-12
    %v2547 = vadd.f32 %v2545, 1e-12
    %v2548 = vrsqrt.pop %v2546
    %v2549 = vrsqrt.pop %v2547
    %v2550 = vmul.f32 %v2534, %v2548
    %v2551 = vmul.f32 %v2535, %v2549
    %v2553 = vlaneseq
    %v2554 = vshrl.u32 %v2553, 7
    %v2555 = vsub.s32 0, %v2554
    %v2556 = vrot.slane %v2523, %v2555
    %v2558 = vmul.f32 %v2550, %v2556
    %v2559 = vmul.f32 %v2551, %v2556
    %v2561 = vlaneseq
    %v2562 = vshrl.u32 %v2561, 7
    %v2563 = vsub.s32 0, %v2562
    %v2564 = vrot.slane %v2525, %v2563
    %v2566 = vadd.f32 %v2558, %v2564
    %v2567 = vadd.f32 %v2559, %v2564
    %v2568 = vpack.c.bf16 %v2567, %v2566
    %s2569 = scalar_lea.vmem %s10, 16
    %v2570 = vld [vmem:[%s2569] sm:$0xf]
    %v2571 = vld [vmem:[%s2569 + $0x4] sm:$0xf]
    %v2572 = vld [vmem:[%s2569 + $0x8] sm:$0xf]
    %v2573 = vld [vmem:[%s2569 + $0xc] sm:$0xf]
    %s2574 = scalar_lea.vmem %s11, 1
    %v2575 = vld [vmem:[%s2574] sm:$0x1]
    %v2577 = vlaneseq
    %v2578 = vshrl.u32 %v2577, 7
    %v2579 = vsub.s32 0, %v2578
    %v2580 = vrot.slane %v2575, %v2579
    %v2586 = vunpack.c.l.b16 %v2570
    %v2587 = vunpack.c.l.b16 %v2571
    %v2588 = vunpack.c.l.b16 %v2572
    %v2589 = vunpack.c.l.b16 %v2573
    %v2590 = vpack.c.b16 %v2587, %v2586
    %v2591 = vpack.c.b16 %v2589, %v2588
    %v2595 = vsel %vm71, %v2568, 0
    %2597 = vmatprep.subr.bf16.mxu0 0
    %2598 = vmatpush1.bf16.msra.mxu0 %v2590
    %2599 = vmatprep.subr.bf16.mxu0 0
    %2600 = vmatpush1.bf16.msra.mxu0 %v2591
    %2601 = vmatprep.subr.bf16.mxu0 0
    %2602 = vmatpush1.bf16.msra.mxu0 0
    %2603 = vmatprep.subr.bf16.mxu0 0
    %2604 = vmatpush1.bf16.msra.mxu0 0
    %2605 = vmatprep.subr.bf16.mxu0 0
    %2606 = vmatpush1.bf16.msra.mxu0 0
    %2607 = vmatprep.subr.bf16.mxu0 0
    %2608 = vmatpush1.bf16.msra.mxu0 0
    %2609 = vmatprep.subr.bf16.mxu0 0
    %2610 = vmatpush1.bf16.msra.mxu0 0
    %2611 = vmatprep.subr.bf16.mxu0 0
    %2612 = vmatpush1.bf16.msra.mxu0 0
    %2613 = vmatprep.subr.bf16.mxu0 0
    %2614 = vmatpush1.bf16.msra.mxu0 0
    %2615 = vmatprep.subr.bf16.mxu0 0
    %2616 = vmatpush1.bf16.msra.mxu0 0
    %2617 = vmatprep.subr.bf16.mxu0 0
    %2618 = vmatpush1.bf16.msra.mxu0 0
    %2619 = vmatprep.subr.bf16.mxu0 0
    %2620 = vmatpush1.bf16.msra.mxu0 0
    %2621 = vmatprep.subr.bf16.mxu0 0
    %2622 = vmatpush1.bf16.msra.mxu0 0
    %2623 = vmatprep.subr.bf16.mxu0 0
    %2624 = vmatpush1.bf16.msra.mxu0 0
    %2625 = vmatprep.subr.bf16.mxu0 0
    %2626 = vmatpush1.bf16.msra.mxu0 0
    %2627 = vmatprep.subr.bf16.mxu0 0
    %2628 = vmatpush1.bf16.msra.mxu0 0
    %2629 = vmatprep.mubr.bf16.mxu0 0
    %2630 = vmatmul.mubr.bf16.gmra.mrb[0].mxu0 %v2595
    %v2631 = vpop.f32.mrb[0].mxu0
    %v2632 = vadd.f32 %v2580, %v2631
    %v2633 = vpop.f32.mrb[0].mxu0
    %v2634 = vpop.f32.mrb[0].mxu0
    %v2635 = vadd.f32 %v2580, %v2634
    %v2636 = vpop.f32.mrb[0].mxu0
    %2637 = vdwg.mxu0
    %v2638 = vmul.f32 %v2632, 0.5
    %v2639 = vmul.f32 %v2635, 0.5
    %v2640 = vmul.f32 %v2632, 0.70710677
    %v2641 = vmul.f32 %v2635, 0.70710677
    %v2642 = verf.f32.pop %v2640
    %v2643 = verf.f32.pop %v2641
    %v2644 = vadd.f32 %v2642, 1.0
    %v2645 = vadd.f32 %v2643, 1.0
    %v2646 = vmul.f32 %v2638, %v2644
    %v2647 = vmul.f32 %v2639, %v2645
    %v2648 = vpack.c.bf16 %v2647, %v2646
    %s2649 = scalar_lea.vmem %s12, 64
    %v2650 = vld [vmem:[%s2649] sm:$0xf]
    %v2651 = vld [vmem:[%s2649 + $0x4] sm:$0xf]
    %v2652 = vld [vmem:[%s2649 + $0x8] sm:$0xf]
    %v2653 = vld [vmem:[%s2649 + $0xc] sm:$0xf]
    %v2654 = vld [vmem:[%s2649 + $0x10] sm:$0xf]
    %v2655 = vld [vmem:[%s2649 + $0x14] sm:$0xf]
    %v2656 = vld [vmem:[%s2649 + $0x18] sm:$0xf]
    %v2657 = vld [vmem:[%s2649 + $0x1c] sm:$0xf]
    %v2658 = vld [vmem:[%s2649 + $0x20] sm:$0xf]
    %v2659 = vld [vmem:[%s2649 + $0x24] sm:$0xf]
    %v2660 = vld [vmem:[%s2649 + $0x28] sm:$0xf]
    %v2661 = vld [vmem:[%s2649 + $0x2c] sm:$0xf]
    %v2662 = vld [vmem:[%s2649 + $0x30] sm:$0xf]
    %v2663 = vld [vmem:[%s2649 + $0x34] sm:$0xf]
    %v2664 = vld [vmem:[%s2649 + $0x38] sm:$0xf]
    %v2665 = vld [vmem:[%s2649 + $0x3c] sm:$0xf]
    %s2666 = scalar_lea.vmem %s13, 1
    %v2667 = vld [vmem:[%s2666] sm:$0x1]
    %v2669 = vlaneseq
    %v2670 = vshrl.u32 %v2669, 7
    %v2671 = vsub.s32 0, %v2670
    %v2672 = vrot.slane %v2667, %v2671
    %v2690 = vunpack.c.l.b16 %v2650
    %v2691 = vunpack.c.l.b16 %v2651
    %v2692 = vunpack.c.l.b16 %v2652
    %v2693 = vunpack.c.l.b16 %v2653
    %v2694 = vunpack.c.l.b16 %v2654
    %v2695 = vunpack.c.l.b16 %v2655
    %v2696 = vunpack.c.l.b16 %v2656
    %v2697 = vunpack.c.l.b16 %v2657
    %v2698 = vunpack.c.l.b16 %v2658
    %v2699 = vunpack.c.l.b16 %v2659
    %v2700 = vunpack.c.l.b16 %v2660
    %v2701 = vunpack.c.l.b16 %v2661
    %v2702 = vunpack.c.l.b16 %v2662
    %v2703 = vunpack.c.l.b16 %v2663
    %v2704 = vunpack.c.l.b16 %v2664
    %v2705 = vunpack.c.l.b16 %v2665
    %v2706 = vpack.c.b16 %v2691, %v2690
    %v2707 = vpack.c.b16 %v2693, %v2692
    %v2708 = vpack.c.b16 %v2695, %v2694
    %v2709 = vpack.c.b16 %v2697, %v2696
    %v2710 = vpack.c.b16 %v2699, %v2698
    %v2711 = vpack.c.b16 %v2701, %v2700
    %v2712 = vpack.c.b16 %v2703, %v2702
    %v2713 = vpack.c.b16 %v2705, %v2704
    %2722 = vmatprep.subr.bf16.mxu0 0
    %2723 = vmatpush1.bf16.msra.mxu0 %v2706
    %2724 = vmatprep.subr.bf16.mxu0 0
    %2725 = vmatpush1.bf16.msra.mxu0 %v2707
    %2726 = vmatprep.subr.bf16.mxu0 0
    %2727 = vmatpush1.bf16.msra.mxu0 %v2708
    %2728 = vmatprep.subr.bf16.mxu0 0
    %2729 = vmatpush1.bf16.msra.mxu0 %v2709
    %2730 = vmatprep.subr.bf16.mxu0 0
    %2731 = vmatpush1.bf16.msra.mxu0 %v2710
    %2732 = vmatprep.subr.bf16.mxu0 0
    %2733 = vmatpush1.bf16.msra.mxu0 %v2711
    %2734 = vmatprep.subr.bf16.mxu0 0
    %2735 = vmatpush1.bf16.msra.mxu0 %v2712
    %2736 = vmatprep.subr.bf16.mxu0 0
    %2737 = vmatpush1.bf16.msra.mxu0 %v2713
    %2738 = vmatprep.subr.bf16.mxu0 0
    %2739 = vmatpush1.bf16.msra.mxu0 0
    %2740 = vmatprep.subr.bf16.mxu0 0
    %2741 = vmatpush1.bf16.msra.mxu0 0
    %2742 = vmatprep.subr.bf16.mxu0 0
    %2743 = vmatpush1.bf16.msra.mxu0 0
    %2744 = vmatprep.subr.bf16.mxu0 0
    %2745 = vmatpush1.bf16.msra.mxu0 0
    %2746 = vmatprep.subr.bf16.mxu0 0
    %2747 = vmatpush1.bf16.msra.mxu0 0
    %2748 = vmatprep.subr.bf16.mxu0 0
    %2749 = vmatpush1.bf16.msra.mxu0 0
    %2750 = vmatprep.subr.bf16.mxu0 0
    %2751 = vmatpush1.bf16.msra.mxu0 0
    %2752 = vmatprep.subr.bf16.mxu0 0
    %2753 = vmatpush1.bf16.msra.mxu0 0
    %2754 = vmatprep.mubr.bf16.mxu0 0
    %2755 = vmatmul.mubr.bf16.gmra.mrb[0].mxu0 %v2648
    %v2756 = vpop.f32.mrb[0].mxu0
    %v2757 = vadd.f32 %v2672, %v2756
    %v2758 = vpop.f32.mrb[0].mxu0
    %v2759 = vpop.f32.mrb[0].mxu0
    %v2760 = vadd.f32 %v2672, %v2759
    %v2761 = vpop.f32.mrb[0].mxu0
    %2762 = vdwg.mxu0
    %v2763 = vadd.f32 %v2566, %v2757
    %v2764 = vadd.f32 %v2567, %v2760
    %s2765 = scalar_lea.vmem %s14, 1
    %v2766 = vld [vmem:[%s2765] sm:$0x1]
    %s2767 = scalar_lea.vmem %s15, 1
    %v2768 = vld [vmem:[%s2767] sm:$0x1]
    %v2769 = vsel %vm71, %v2763, 0.0
    %2770 = vadd.xlane.f32.xlu0 %v2769
    %v2771 = vpop.xlane.xlu0 %2770
    %v2772 = vsel %vm71, %v2764, 0.0
    %2773 = vadd.xlane.f32.xlu0 %v2772
    %v2774 = vpop.xlane.xlu0 %2773
    %v2775 = vmul.f32 %v2771, %v78
    %v2776 = vmul.f32 %v2774, %v78
    %v2777 = vsub.f32 %v2763, %v2775
    %v2778 = vsub.f32 %v2764, %v2776
    %v2779 = vmul.f32 %v2777, %v2777
    %v2780 = vmul.f32 %v2778, %v2778
    %v2781 = vsel %vm71, %v2779, 0.0
    %2782 = vadd.xlane.f32.xlu0 %v2781
    %v2783 = vpop.xlane.xlu0 %2782
    %v2784 = vsel %vm71, %v2780, 0.0
    %2785 = vadd.xlane.f32.xlu0 %v2784
    %v2786 = vpop.xlane.xlu0 %2785
    %v2787 = vmul.f32 %v2783, %v78
    %v2788 = vmul.f32 %v2786, %v78
    %v2789 = vadd.f32 %v2787, 1e-12
    %v2790 = vadd.f32 %v2788, 1e-12
    %v2791 = vrsqrt.pop %v2789
    %v2792 = vrsqrt.pop %v2790
    %v2793 = vmul.f32 %v2777, %v2791
    %v2794 = vmul.f32 %v2778, %v2792
    %v2796 = vlaneseq
    %v2797 = vshrl.u32 %v2796, 7
    %v2798 = vsub.s32 0, %v2797
    %v2799 = vrot.slane %v2766, %v2798
    %v2801 = vmul.f32 %v2793, %v2799
    %v2802 = vmul.f32 %v2794, %v2799
    %v2804 = vlaneseq
    %v2805 = vshrl.u32 %v2804, 7
    %v2806 = vsub.s32 0, %v2805
    %v2807 = vrot.slane %v2768, %v2806
    %v2809 = vadd.f32 %v2801, %v2807
    %v2810 = vadd.f32 %v2802, %v2807
    %v2812 = vrot.slane %v2810, 7
    %vm2814 = vcmask 1040384
    %v2815 = vsel %vm2814, %v2809, %v2812
    %v2816 = vpack.c.bf16 %v2815, %v2815
    %v2817 = vld [vmem:[%s16] sm:$0xf]
    %v2818 = vld [vmem:[%s16 + $0x4] sm:$0xf]
    %v2819 = vld [vmem:[%s16 + $0x8] sm:$0xf]
    %v2820 = vld [vmem:[%s16 + $0xc] sm:$0xf]
    %v2821 = vld [vmem:[%s17] sm:$0x1]
    %v2823 = vlaneseq
    %v2824 = vshrl.u32 %v2823, 7
    %v2825 = vsub.s32 0, %v2824
    %v2826 = vrot.slane %v2821, %v2825
    %v2832 = vunpack.c.l.b16 %v2817
    %v2833 = vunpack.c.l.b16 %v2818
    %v2834 = vunpack.c.l.b16 %v2819
    %v2835 = vunpack.c.l.b16 %v2820
    %v2836 = vpack.c.b16 %v2833, %v2832
    %v2837 = vpack.c.b16 %v2835, %v2834
    %v2841 = vsel %vm71, %v2816, 0
    %2843 = vmatprep.subr.bf16.mxu0 0
    %2844 = vmatpush1.bf16.msra.mxu0 %v2836
    %2845 = vmatprep.subr.bf16.mxu0 0
    %2846 = vmatpush1.bf16.msra.mxu0 %v2837
    %2847 = vmatprep.subr.bf16.mxu0 0
    %2848 = vmatpush1.bf16.msra.mxu0 0
    %2849 = vmatprep.subr.bf16.mxu0 0
    %2850 = vmatpush1.bf16.msra.mxu0 0
    %2851 = vmatprep.subr.bf16.mxu0 0
    %2852 = vmatpush1.bf16.msra.mxu0 0
    %2853 = vmatprep.subr.bf16.mxu0 0
    %2854 = vmatpush1.bf16.msra.mxu0 0
    %2855 = vmatprep.subr.bf16.mxu0 0
    %2856 = vmatpush1.bf16.msra.mxu0 0
    %2857 = vmatprep.subr.bf16.mxu0 0
    %2858 = vmatpush1.bf16.msra.mxu0 0
    %2859 = vmatprep.subr.bf16.mxu0 0
    %2860 = vmatpush1.bf16.msra.mxu0 0
    %2861 = vmatprep.subr.bf16.mxu0 0
    %2862 = vmatpush1.bf16.msra.mxu0 0
    %2863 = vmatprep.subr.bf16.mxu0 0
    %2864 = vmatpush1.bf16.msra.mxu0 0
    %2865 = vmatprep.subr.bf16.mxu0 0
    %2866 = vmatpush1.bf16.msra.mxu0 0
    %2867 = vmatprep.subr.bf16.mxu0 0
    %2868 = vmatpush1.bf16.msra.mxu0 0
    %2869 = vmatprep.subr.bf16.mxu0 0
    %2870 = vmatpush1.bf16.msra.mxu0 0
    %2871 = vmatprep.subr.bf16.mxu0 0
    %2872 = vmatpush1.bf16.msra.mxu0 0
    %2873 = vmatprep.subr.bf16.mxu0 0
    %2874 = vmatpush1.bf16.msra.mxu0 0
    %2875 = vmatprep.mubr.bf16.mxu0 0
    %2876 = vmatmul.mubr.bf16.gmra.mrb[0].mxu0 %v2841
    %v2877 = vpop.f32.mrb[0].mxu0
    %v2878 = vadd.f32 %v2826, %v2877
    %v2879 = vpop.f32.mrb[0].mxu0
    %v2880 = vpop.f32.mrb[0].mxu0
    %v2881 = vpop.f32.mrb[0].mxu0
    %2882 = vdwg.mxu0
    %v2883 = vmax.f32 %v2878, 0.0
    %v2884 = vpack.c.bf16 %v2883, %v2883
    %v2885 = vld [vmem:[%s18] sm:$0xf]
    %v2886 = vld [vmem:[%s18 + $0x4] sm:$0xf]
    %v2887 = vld [vmem:[%s18 + $0x8] sm:$0xf]
    %v2888 = vld [vmem:[%s18 + $0xc] sm:$0xf]
    %v2889 = vld [vmem:[%s19] sm:$0x1]
    %v2891 = vlaneseq
    %v2892 = vshrl.u32 %v2891, 7
    %v2893 = vsub.s32 0, %v2892
    %v2894 = vrot.slane %v2889, %v2893
    %v2900 = vunpack.c.l.b16 %v2885
    %v2901 = vunpack.c.l.b16 %v2886
    %v2902 = vunpack.c.l.b16 %v2887
    %v2903 = vunpack.c.l.b16 %v2888
    %v2904 = vpack.c.b16 %v2901, %v2900
    %v2905 = vpack.c.b16 %v2903, %v2902
    %v2909 = vsel %vm71, %v2884, 0
    %2911 = vmatprep.subr.bf16.mxu0 0
    %2912 = vmatpush1.bf16.msra.mxu0 %v2904
    %2913 = vmatprep.subr.bf16.mxu0 0
    %2914 = vmatpush1.bf16.msra.mxu0 %v2905
    %2915 = vmatprep.subr.bf16.mxu0 0
    %2916 = vmatpush1.bf16.msra.mxu0 0
    %2917 = vmatprep.subr.bf16.mxu0 0
    %2918 = vmatpush1.bf16.msra.mxu0 0
    %2919 = vmatprep.subr.bf16.mxu0 0
    %2920 = vmatpush1.bf16.msra.mxu0 0
    %2921 = vmatprep.subr.bf16.mxu0 0
    %2922 = vmatpush1.bf16.msra.mxu0 0
    %2923 = vmatprep.subr.bf16.mxu0 0
    %2924 = vmatpush1.bf16.msra.mxu0 0
    %2925 = vmatprep.subr.bf16.mxu0 0
    %2926 = vmatpush1.bf16.msra.mxu0 0
    %2927 = vmatprep.subr.bf16.mxu0 0
    %2928 = vmatpush1.bf16.msra.mxu0 0
    %2929 = vmatprep.subr.bf16.mxu0 0
    %2930 = vmatpush1.bf16.msra.mxu0 0
    %2931 = vmatprep.subr.bf16.mxu0 0
    %2932 = vmatpush1.bf16.msra.mxu0 0
    %2933 = vmatprep.subr.bf16.mxu0 0
    %2934 = vmatpush1.bf16.msra.mxu0 0
    %2935 = vmatprep.subr.bf16.mxu0 0
    %2936 = vmatpush1.bf16.msra.mxu0 0
    %2937 = vmatprep.subr.bf16.mxu0 0
    %2938 = vmatpush1.bf16.msra.mxu0 0
    %2939 = vmatprep.subr.bf16.mxu0 0
    %2940 = vmatpush1.bf16.msra.mxu0 0
    %2941 = vmatprep.subr.bf16.mxu0 0
    %2942 = vmatpush1.bf16.msra.mxu0 0
    %2943 = vmatprep.mubr.bf16.mxu0 0
    %2944 = vmatmul.mubr.bf16.gmra.mrb[0].mxu0 %v2909
    %v2945 = vpop.f32.mrb[0].mxu0
    %v2946 = vadd.f32 %v2894, %v2945
    %v2947 = vpop.f32.mrb[0].mxu0
    %v2948 = vpop.f32.mrb[0].mxu0
    %v2949 = vpop.f32.mrb[0].mxu0
    %2950 = vdwg.mxu0
    %vm2951 = vcmask 9216
    %2952 = vst.msk [vmem:[#allocation2] sm:$0x3] %vm2951, %v2946
    // Predicated region
    $region82: #{tpu_custom_call.1} parent=1 // pred_check
      _
    $region83: #{tpu_custom_call.1} parent=1 // pred_check_branch
      %2954 = sbr.rel (0) target = $region85
    $region84: #{tpu_custom_call.1} parent=1 // pred_region
      %s2956 = ssub.s32 32, 32
      %2957 = vsyncadd [#allocation3], %s2956
      %s2959 = sshll.u32 [#allocation2], 4
      %s2960 = int_to_ptr.vmem [resolvable:$true] %s2959
      %2962 = dma.vmem_to_hbm [thread:$0]  %s2960, 32, %s20, [#allocation3]
    $region85: #{tpu_custom_call.1} parent=1 // pred_fallthru
      _
    // Predicated region
    $region86: #{tpu_custom_call.1} parent=1 // pred_check
      _
    $region87: #{tpu_custom_call.1} parent=1 // pred_check_branch
      %2964 = sbr.rel (0) target = $region89
    $region88: #{tpu_custom_call.1} parent=1 // pred_region
      %2965 = dma.done [#allocation3], 32
    $region89: #{tpu_custom_call.1} parent=1 // pred_fallthru
      _
    %2966 = vsyncpa [#allocation3], 1

</llo_original>
